<compile_context>
chip_gen: v7x
topology: tpu7x:2x2x1
jax: 0.10.0
libtpu: 0.0.40
codegen_flags: <defaults>
</compile_context>

<pallas_src>
import functools

import jax
import jax.numpy as jnp
from jax import lax
from jax.experimental import pallas as pl
from jax.experimental.pallas import tpu as pltpu


def _round_up(x, m):
    return (x + m - 1) // m * m


def _cdiv(a, b):
    return -(-a // b)


def _tpu_kind():
    try:
        return (jax.devices()[0].device_kind or "").lower()
    except Exception:
        return ""


def _lstm_kernel(gx_ref, whh_ref, h_out_ref, c_out_ref, h_sc, c_sc,
                 *, t_chunk, seq_len, hp, need_mask, unroll):
    """Recurrent half of the LSTM over one (batch_chunk, time_chunk) tile.

    gx_ref  : (Tc, Bc, 4*Hp)  precomputed x@W_ih^T + bias (gate-major layout)
    whh_ref : (Hp, 4*Hp)      recurrent weights (gate-major, resident)
    h_out/c_out : (Bc, Hp)    final states, written on the last time chunk
    h_sc/c_sc   : (Bc, Hp)    state carried across time chunks
    """
    tc = pl.program_id(1)
    last = pl.num_programs(1) - 1

    @pl.when(tc == 0)
    def _():
        h_sc[...] = jnp.zeros_like(h_sc)
        c_sc[...] = jnp.zeros_like(c_sc)

    def sigmoid(x):
        # tanh-based sigmoid: exact identity, 1 EUP op instead of exp+recip.
        return 0.5 * jnp.tanh(0.5 * x) + 0.5

    def make_step(masked):
        def step(s, carry):
            h_prev, c_prev = carry
            # Index whh_ref per step (don't hoist a (Hp,4Hp) value across the
            # unrolled body -> avoids vreg spill); loads hide under the matmul.
            gates = gx_ref[s] + jnp.dot(h_prev, whh_ref[...],
                                        preferred_element_type=jnp.float32)
            # Gate-major, 128-aligned slices -> whole-vreg views.
            i_g = sigmoid(gates[:, 0 * hp:1 * hp])
            f_g = sigmoid(gates[:, 1 * hp:2 * hp])
            g_g = jnp.tanh(gates[:, 2 * hp:3 * hp])
            o_g = sigmoid(gates[:, 3 * hp:4 * hp])

            c_new = f_g * c_prev + i_g * g_g
            h_new = o_g * jnp.tanh(c_new)

            if masked:  # only traced for the final (padded) time chunk
                valid = (tc * t_chunk + s) < seq_len
                h_new = jnp.where(valid, h_new, h_prev)
                c_new = jnp.where(valid, c_new, c_prev)
            return h_new, c_new
        return step

    def run(masked):
        h, c = lax.fori_loop(0, t_chunk, make_step(masked),
                             (h_sc[...], c_sc[...]), unroll=unroll)
        h_sc[...] = h
        c_sc[...] = c
        return h, c

    def finalize(h, c):
        h_out_ref[...] = h.astype(h_out_ref.dtype)
        c_out_ref[...] = c.astype(c_out_ref.dtype)

    if need_mask:
        # Mask only in the last chunk (all padded steps live there by
        # construction); every other chunk runs the unmasked loop.
        @pl.when(tc != last)
        def _():
            run(False)

        @pl.when(tc == last)
        def _():
            h, c = run(True)
            finalize(h, c)
    else:
        h, c = run(False)

        @pl.when(tc == last)
        def _():
            finalize(h, c)


def _gate_major_cols(w, H, Hp):
    """w: (4H, X) PyTorch gate-stacked rows -> (X, 4*Hp) gate-major columns.

    Gate g's H columns land at the 128-aligned offset g*Hp; the rest is zero.
    """
    X = w.shape[1]
    out = jnp.zeros((X, 4 * Hp), jnp.float32)
    for g in range(4):
        out = out.at[:, g * Hp:g * Hp + H].set(w[g * H:(g + 1) * H, :].T)
    return out


def encoder_forward(src_index, emb_table, w_ih, w_hh, b_ih, b_hh, *,
                    t_chunk=16):
    """src_index: (B, T) int32.  Returns (h_n, c_n), each (1, B, H)."""
    B, T = src_index.shape
    E = emb_table.shape[1]
    H = w_hh.shape[1]

    if T == 0:  # grid would never run -> outputs undefined; guard here.
        z = jnp.zeros((1, B, H), jnp.float32)
        return z, z

    # ---- padded / aligned sizes --------------------------------------------
    Hp = _round_up(H, 128)                       # lane-aligned hidden

    kind = _tpu_kind()
    two_tc = any(t in kind for t in ("v4", "v5p", "v7", "7x"))   # 2 TCs/chip
    is_v5e = ("v5e" in kind) or ("v5 lite" in kind) or ("v5lite" in kind)
    bc_cap = 128 if is_v5e else 256              # MXU-geometry friendly caps

    Bp = _round_up(B, 8)                         # sublane-aligned batch
    if two_tc and Bp >= 16:
        # Two batch chunks so the "parallel" axis shards across both cores.
        Bc = min(_round_up(_cdiv(Bp, 2), 8), bc_cap)
    else:
        Bc = min(Bp, bc_cap)
    Bp = _round_up(Bp, Bc)

    # ---- VMEM-budget-aware time chunking -----------------------------------
    f32b = 4
    whh_bytes = Hp * 4 * Hp * f32b
    state_bytes = Bc * Hp * f32b
    step_bytes = Bc * 4 * Hp * f32b              # one time step of gx
    budget = 36 << 20                            # pipeline working-set target
    gx_budget = max(budget - 2 * whh_bytes - 6 * state_bytes, 2 * step_bytes)
    Tc = max(1, min(t_chunk, T))
    while Tc > 1 and 2 * Tc * step_bytes > gx_budget:   # gx is double-buffered
        Tc //= 2
    n_chunks = _cdiv(T, Tc)
    Tc = _cdiv(T, n_chunks)                      # minimize tail padding
    Tp = n_chunks * Tc
    need_mask = (Tp != T)

    vmem_need = 2 * Tc * step_bytes + 2 * whh_bytes + 6 * state_bytes
    vmem_limit = int(min(max(vmem_need + (8 << 20), 32 << 20), 64 << 20))

    # ---- gate-major, zero-padded weights -----------------------------------
    wih_packed = _gate_major_cols(w_ih, H, Hp)                       # (E, 4*Hp)
    whh_packed = jnp.zeros((Hp, 4 * Hp), jnp.float32).at[:H].set(
        _gate_major_cols(w_hh, H, Hp))                               # (Hp, 4*Hp)

    b = (b_ih + b_hh).astype(jnp.float32)
    bias_packed = jnp.zeros((4 * Hp,), jnp.float32)
    for g in range(4):
        bias_packed = bias_packed.at[g * Hp:g * Hp + H].set(
            b[g * H:(g + 1) * H])

    # ---- embedding lookup + hoisted input projection (plain JAX glue) -------
    # Gather directly in time-major order from a padded index matrix: the
    # transpose/pad passes touch only the int indices / E-wide embedding, never
    # the (T, B, 4*Hp) gx slab.
    src_p = jnp.zeros((Tp, Bp), src_index.dtype).at[:T, :B].set(src_index.T)
    emb_t = emb_table[src_p].astype(jnp.float32)                     # (Tp,Bp,E)
    gx = (jnp.dot(emb_t.reshape(Tp * Bp, E), wih_packed,
                  precision=lax.Precision.HIGH)                      # 3-pass f32-ish
          + bias_packed[None, :]).reshape(Tp, Bp, 4 * Hp)

    # ---- recurrent kernel ----------------------------------------------------
    kernel = functools.partial(_lstm_kernel, t_chunk=Tc, seq_len=T, hp=Hp,
                               need_mask=need_mask, unroll=min(Tc, 8))
    out_shape = (jax.ShapeDtypeStruct((Bp, Hp), jnp.float32),
                 jax.ShapeDtypeStruct((Bp, Hp), jnp.float32))

    def call(whh_pipeline_mode):
        whh_kwargs = {}
        if whh_pipeline_mode is not None:
            whh_kwargs["pipeline_mode"] = whh_pipeline_mode
        return pl.pallas_call(
            kernel,
            out_shape=out_shape,
            grid=(Bp // Bc, Tp // Tc),
            in_specs=[
                pl.BlockSpec((Tc, Bc, 4 * Hp), lambda bi, ti: (ti, bi, 0)),
                # resident weight: constant index_map
                pl.BlockSpec((Hp, 4 * Hp), lambda bi, ti: (0, 0), **whh_kwargs),
            ],
            out_specs=(
                pl.BlockSpec((Bc, Hp), lambda bi, ti: (bi, 0)),
                pl.BlockSpec((Bc, Hp), lambda bi, ti: (bi, 0)),
            ),
            scratch_shapes=[
                pltpu.VMEM((Bc, Hp), jnp.float32),   # h carried across time
                pltpu.VMEM((Bc, Hp), jnp.float32),   # c carried across time
            ],
            compiler_params=pltpu.CompilerParams(
                dimension_semantics=("parallel", "arbitrary"),
                vmem_limit_bytes=vmem_limit),
        )(gx, whh_packed)

    try:
        # Single-buffer the resident W_hh (its block never changes).
        h_pad, c_pad = call(pl.Buffered(1))
    except Exception:
        # Fallback if this JAX version rejects buffer_count=1.
        h_pad, c_pad = call(None)

    # Unpad and match nn.LSTM hidden shape (num_layers*num_directions=1, B, H)
    h_n = h_pad[:B, :H][None, ...]
    c_n = c_pad[:B, :H][None, ...]
    return h_n, c_n


def _ref_encoder(src_index, emb_table, w_ih, w_hh, b_ih, b_hh):
    """Pure-JAX reference (PyTorch LSTM semantics, full f32)."""
    B, T = src_index.shape
    H = w_hh.shape[1]
    x_seq = jnp.transpose(emb_table[src_index], (1, 0, 2))   # (T, B, E)
    h = jnp.zeros((B, H), jnp.float32)
    c = jnp.zeros((B, H), jnp.float32)
    hi = lax.Precision.HIGHEST
    for t in range(T):
        gates = (jnp.dot(x_seq[t], w_ih.T, precision=hi)
                 + jnp.dot(h, w_hh.T, precision=hi) + b_ih + b_hh)
        i = jax.nn.sigmoid(gates[:, 0 * H:1 * H])
        f = jax.nn.sigmoid(gates[:, 1 * H:2 * H])
        g = jnp.tanh(gates[:, 2 * H:3 * H])
        o = jax.nn.sigmoid(gates[:, 3 * H:4 * H])
        c = f * c + i * g
        h = o * jnp.tanh(c)
    return h[None, ...], c[None, ...]


if __name__ == "__main__":
    # Small, forward-consistent shapes.
    B, T = 4, 8                 # batch, sequence length
    VOCAB = 50                  # source_corpus_len
    E = 16                      # dim_encoder_embbeding
    H = 32                      # dim_encoder_hidden

    key = jax.random.PRNGKey(0)
    k_emb, k_wih, k_whh, k_bih, k_bhh, k_idx = jax.random.split(key, 6)

    # Deterministic parameter init (PyTorch-like scales).
    emb_table = jax.random.normal(k_emb, (VOCAB, E), jnp.float32)
    s = 1.0 / jnp.sqrt(H)
    w_ih = jax.random.uniform(k_wih, (4 * H, E), jnp.float32, -s, s)
    w_hh = jax.random.uniform(k_whh, (4 * H, H), jnp.float32, -s, s)
    b_ih = jax.random.uniform(k_bih, (4 * H,), jnp.float32, -s, s)
    b_hh = jax.random.uniform(k_bhh, (4 * H,), jnp.float32, -s, s)

    src_index = jax.random.randint(k_idx, (B, T), 0, VOCAB, jnp.int32)

    h_n, c_n = encoder_forward(src_index, emb_table, w_ih, w_hh, b_ih, b_hh)
    jax.block_until_ready((h_n, c_n))

    h_ref, c_ref = _ref_encoder(src_index, emb_table, w_ih, w_hh, b_ih, b_hh)
    assert h_n.shape == (1, B, H) and c_n.shape == (1, B, H)
    assert jnp.allclose(h_n, h_ref, atol=1e-4, rtol=1e-4)
    assert jnp.allclose(c_n, c_ref, atol=1e-4, rtol=1e-4)

    print("KERNEL_OK")
</pallas_src>

<mosaic_0001>
module attributes {stable_mosaic.version = 11 : i64} {
  func.func @_lstm_kernel(%arg0: i32, %arg1: i32, %arg2: memref<8x8x512xf32, #tpu.memory_space<vmem>>, %arg3: memref<128x512xf32, #tpu.memory_space<vmem>>, %arg4: memref<8x128xf32, #tpu.memory_space<vmem>>, %arg5: memref<8x128xf32, #tpu.memory_space<vmem>>, %arg6: memref<8x128xf32, #tpu.memory_space<vmem>>, %arg7: memref<8x128xf32, #tpu.memory_space<vmem>>) attributes {dimension_semantics = [#tpu.dimension_semantics<parallel>, #tpu.dimension_semantics<arbitrary>], iteration_bounds = array<i64: 1, 1>, scalar_prefetch = 0 : i64, scratch_operands = 2 : i64, tpu.core_type = #tpu.core_type<tc>, window_params = [{transform_indices = @transform_0, window_bounds = array<i64: 8, 8, 512>}, {pipeline_mode = #tpu.pipeline_mode<synchronous>, transform_indices = @transform_1, window_bounds = array<i64: 128, 512>}, {transform_indices = @transform_2, window_bounds = array<i64: 8, 128>}, {transform_indices = @transform_3, window_bounds = array<i64: 8, 128>}]} {
    %c0_i32 = arith.constant 0 : i32
    %0 = arith.cmpi eq, %arg1, %c0_i32 : i32
    %1 = arith.extui %0 : i1 to i32
    %c0_i32_0 = arith.constant 0 : i32
    %2 = arith.cmpi ne, %1, %c0_i32_0 : i32
    scf.if %2 {
      %cst_122 = arith.constant 0.000000e+00 : f32
      %306 = vector.broadcast %cst_122 : f32 to vector<8x128xf32>
      %c0_123 = arith.constant 0 : index
      %c0_124 = arith.constant 0 : index
      %307 = vector.load %arg6[%c0_123, %c0_124] : memref<8x128xf32, #tpu.memory_space<vmem>>, vector<8x128xf32>
      tpu.vector_store %arg6[%c0_123, %c0_124], %306 {strides = array<i32>} : memref<8x128xf32, #tpu.memory_space<vmem>>, vector<8x128xf32>,
      %cst_125 = arith.constant 0.000000e+00 : f32
      %308 = vector.broadcast %cst_125 : f32 to vector<8x128xf32>
      %c0_126 = arith.constant 0 : index
      %c0_127 = arith.constant 0 : index
      %309 = vector.load %arg7[%c0_126, %c0_127] : memref<8x128xf32, #tpu.memory_space<vmem>>, vector<8x128xf32>
      tpu.vector_store %arg7[%c0_126, %c0_127], %308 {strides = array<i32>} : memref<8x128xf32, #tpu.memory_space<vmem>>, vector<8x128xf32>,
    } else {
    }
    %c0 = arith.constant 0 : index
    %c0_1 = arith.constant 0 : index
    %3 = vector.load %arg6[%c0, %c0_1] : memref<8x128xf32, #tpu.memory_space<vmem>>, vector<8x128xf32>
    %c0_2 = arith.constant 0 : index
    %c0_3 = arith.constant 0 : index
    %4 = vector.load %arg7[%c0_2, %c0_3] : memref<8x128xf32, #tpu.memory_space<vmem>>, vector<8x128xf32>
    %c0_i32_4 = arith.constant 0 : i32
    %5 = arith.index_cast %c0_i32_4 : i32 to index
    %c0_5 = arith.constant 0 : index
    %c0_6 = arith.constant 0 : index
    %6 = vector.load %arg2[%5, %c0_5, %c0_6] : memref<8x8x512xf32, #tpu.memory_space<vmem>>, vector<1x8x512xf32>
    %7 = vector.shape_cast %6 : vector<1x8x512xf32> to vector<8x512xf32>
    %c0_7 = arith.constant 0 : index
    %c0_8 = arith.constant 0 : index
    %8 = vector.load %arg3[%c0_7, %c0_8] : memref<128x512xf32, #tpu.memory_space<vmem>>, vector<128x512xf32>
    %cst = arith.constant dense<0.000000e+00> : vector<8x512xf32>
    %9 = tpu.matmul %3, %8, %cst {dimension_numbers = #tpu.dot_dimension_numbers<[1], [0], [0], [1], [0, 0, 1, 1], [], []>} : vector<8x128xf32>, vector<128x512xf32>, vector<8x512xf32> -> vector<8x512xf32>
    %10 = arith.addf %7, %9 : vector<8x512xf32>
    %11 = vector.extract_strided_slice %10 {offsets = [0, 0], sizes = [8, 128], strides = [1, 1]} : vector<8x512xf32> to vector<8x128xf32>
    %cst_9 = arith.constant 5.000000e-01 : f32
    %12 = vector.broadcast %cst_9 : f32 to vector<8x128xf32>
    %13 = arith.mulf %12, %11 : vector<8x128xf32>
    %14 = math.tanh %13 : vector<8x128xf32>
    %cst_10 = arith.constant 5.000000e-01 : f32
    %15 = vector.broadcast %cst_10 : f32 to vector<8x128xf32>
    %16 = arith.mulf %15, %14 : vector<8x128xf32>
    %cst_11 = arith.constant 5.000000e-01 : f32
    %17 = vector.broadcast %cst_11 : f32 to vector<8x128xf32>
    %18 = arith.addf %16, %17 : vector<8x128xf32>
    %19 = vector.extract_strided_slice %10 {offsets = [0, 128], sizes = [8, 128], strides = [1, 1]} : vector<8x512xf32> to vector<8x128xf32>
    %cst_12 = arith.constant 5.000000e-01 : f32
    %20 = vector.broadcast %cst_12 : f32 to vector<8x128xf32>
    %21 = arith.mulf %20, %19 : vector<8x128xf32>
    %22 = math.tanh %21 : vector<8x128xf32>
    %cst_13 = arith.constant 5.000000e-01 : f32
    %23 = vector.broadcast %cst_13 : f32 to vector<8x128xf32>
    %24 = arith.mulf %23, %22 : vector<8x128xf32>
    %cst_14 = arith.constant 5.000000e-01 : f32
    %25 = vector.broadcast %cst_14 : f32 to vector<8x128xf32>
    %26 = arith.addf %24, %25 : vector<8x128xf32>
    %27 = vector.extract_strided_slice %10 {offsets = [0, 256], sizes = [8, 128], strides = [1, 1]} : vector<8x512xf32> to vector<8x128xf32>
    %28 = math.tanh %27 : vector<8x128xf32>
    %29 = vector.extract_strided_slice %10 {offsets = [0, 384], sizes = [8, 128], strides = [1, 1]} : vector<8x512xf32> to vector<8x128xf32>
    %cst_15 = arith.constant 5.000000e-01 : f32
    %30 = vector.broadcast %cst_15 : f32 to vector<8x128xf32>
    %31 = arith.mulf %30, %29 : vector<8x128xf32>
    %32 = math.tanh %31 : vector<8x128xf32>
    %cst_16 = arith.constant 5.000000e-01 : f32
    %33 = vector.broadcast %cst_16 : f32 to vector<8x128xf32>
    %34 = arith.mulf %33, %32 : vector<8x128xf32>
    %cst_17 = arith.constant 5.000000e-01 : f32
    %35 = vector.broadcast %cst_17 : f32 to vector<8x128xf32>
    %36 = arith.addf %34, %35 : vector<8x128xf32>
    %37 = arith.mulf %26, %4 : vector<8x128xf32>
    %38 = arith.mulf %18, %28 : vector<8x128xf32>
    %39 = arith.addf %37, %38 : vector<8x128xf32>
    %40 = math.tanh %39 : vector<8x128xf32>
    %41 = arith.mulf %36, %40 : vector<8x128xf32>
    %c1_i32 = arith.constant 1 : i32
    %42 = arith.index_cast %c1_i32 : i32 to index
    %c0_18 = arith.constant 0 : index
    %c0_19 = arith.constant 0 : index
    %43 = vector.load %arg2[%42, %c0_18, %c0_19] : memref<8x8x512xf32, #tpu.memory_space<vmem>>, vector<1x8x512xf32>
    %44 = vector.shape_cast %43 : vector<1x8x512xf32> to vector<8x512xf32>
    %c0_20 = arith.constant 0 : index
    %c0_21 = arith.constant 0 : index
    %45 = vector.load %arg3[%c0_20, %c0_21] : memref<128x512xf32, #tpu.memory_space<vmem>>, vector<128x512xf32>
    %cst_22 = arith.constant dense<0.000000e+00> : vector<8x512xf32>
    %46 = tpu.matmul %41, %45, %cst_22 {dimension_numbers = #tpu.dot_dimension_numbers<[1], [0], [0], [1], [0, 0, 1, 1], [], []>} : vector<8x128xf32>, vector<128x512xf32>, vector<8x512xf32> -> vector<8x512xf32>
    %47 = arith.addf %44, %46 : vector<8x512xf32>
    %48 = vector.extract_strided_slice %47 {offsets = [0, 0], sizes = [8, 128], strides = [1, 1]} : vector<8x512xf32> to vector<8x128xf32>
    %cst_23 = arith.constant 5.000000e-01 : f32
    %49 = vector.broadcast %cst_23 : f32 to vector<8x128xf32>
    %50 = arith.mulf %49, %48 : vector<8x128xf32>
    %51 = math.tanh %50 : vector<8x128xf32>
    %cst_24 = arith.constant 5.000000e-01 : f32
    %52 = vector.broadcast %cst_24 : f32 to vector<8x128xf32>
    %53 = arith.mulf %52, %51 : vector<8x128xf32>
    %cst_25 = arith.constant 5.000000e-01 : f32
    %54 = vector.broadcast %cst_25 : f32 to vector<8x128xf32>
    %55 = arith.addf %53, %54 : vector<8x128xf32>
    %56 = vector.extract_strided_slice %47 {offsets = [0, 128], sizes = [8, 128], strides = [1, 1]} : vector<8x512xf32> to vector<8x128xf32>
    %cst_26 = arith.constant 5.000000e-01 : f32
    %57 = vector.broadcast %cst_26 : f32 to vector<8x128xf32>
    %58 = arith.mulf %57, %56 : vector<8x128xf32>
    %59 = math.tanh %58 : vector<8x128xf32>
    %cst_27 = arith.constant 5.000000e-01 : f32
    %60 = vector.broadcast %cst_27 : f32 to vector<8x128xf32>
    %61 = arith.mulf %60, %59 : vector<8x128xf32>
    %cst_28 = arith.constant 5.000000e-01 : f32
    %62 = vector.broadcast %cst_28 : f32 to vector<8x128xf32>
    %63 = arith.addf %61, %62 : vector<8x128xf32>
    %64 = vector.extract_strided_slice %47 {offsets = [0, 256], sizes = [8, 128], strides = [1, 1]} : vector<8x512xf32> to vector<8x128xf32>
    %65 = math.tanh %64 : vector<8x128xf32>
    %66 = vector.extract_strided_slice %47 {offsets = [0, 384], sizes = [8, 128], strides = [1, 1]} : vector<8x512xf32> to vector<8x128xf32>
    %cst_29 = arith.constant 5.000000e-01 : f32
    %67 = vector.broadcast %cst_29 : f32 to vector<8x128xf32>
    %68 = arith.mulf %67, %66 : vector<8x128xf32>
    %69 = math.tanh %68 : vector<8x128xf32>
    %cst_30 = arith.constant 5.000000e-01 : f32
    %70 = vector.broadcast %cst_30 : f32 to vector<8x128xf32>
    %71 = arith.mulf %70, %69 : vector<8x128xf32>
    %cst_31 = arith.constant 5.000000e-01 : f32
    %72 = vector.broadcast %cst_31 : f32 to vector<8x128xf32>
    %73 = arith.addf %71, %72 : vector<8x128xf32>
    %74 = arith.mulf %63, %39 : vector<8x128xf32>
    %75 = arith.mulf %55, %65 : vector<8x128xf32>
    %76 = arith.addf %74, %75 : vector<8x128xf32>
    %77 = math.tanh %76 : vector<8x128xf32>
    %78 = arith.mulf %73, %77 : vector<8x128xf32>
    %c2_i32 = arith.constant 2 : i32
    %79 = arith.index_cast %c2_i32 : i32 to index
    %c0_32 = arith.constant 0 : index
    %c0_33 = arith.constant 0 : index
    %80 = vector.load %arg2[%79, %c0_32, %c0_33] : memref<8x8x512xf32, #tpu.memory_space<vmem>>, vector<1x8x512xf32>
    %81 = vector.shape_cast %80 : vector<1x8x512xf32> to vector<8x512xf32>
    %c0_34 = arith.constant 0 : index
    %c0_35 = arith.constant 0 : index
    %82 = vector.load %arg3[%c0_34, %c0_35] : memref<128x512xf32, #tpu.memory_space<vmem>>, vector<128x512xf32>
    %cst_36 = arith.constant dense<0.000000e+00> : vector<8x512xf32>
    %83 = tpu.matmul %78, %82, %cst_36 {dimension_numbers = #tpu.dot_dimension_numbers<[1], [0], [0], [1], [0, 0, 1, 1], [], []>} : vector<8x128xf32>, vector<128x512xf32>, vector<8x512xf32> -> vector<8x512xf32>
    %84 = arith.addf %81, %83 : vector<8x512xf32>
    %85 = vector.extract_strided_slice %84 {offsets = [0, 0], sizes = [8, 128], strides = [1, 1]} : vector<8x512xf32> to vector<8x128xf32>
    %cst_37 = arith.constant 5.000000e-01 : f32
    %86 = vector.broadcast %cst_37 : f32 to vector<8x128xf32>
    %87 = arith.mulf %86, %85 : vector<8x128xf32>
    %88 = math.tanh %87 : vector<8x128xf32>
    %cst_38 = arith.constant 5.000000e-01 : f32
    %89 = vector.broadcast %cst_38 : f32 to vector<8x128xf32>
    %90 = arith.mulf %89, %88 : vector<8x128xf32>
    %cst_39 = arith.constant 5.000000e-01 : f32
    %91 = vector.broadcast %cst_39 : f32 to vector<8x128xf32>
    %92 = arith.addf %90, %91 : vector<8x128xf32>
    %93 = vector.extract_strided_slice %84 {offsets = [0, 128], sizes = [8, 128], strides = [1, 1]} : vector<8x512xf32> to vector<8x128xf32>
    %cst_40 = arith.constant 5.000000e-01 : f32
    %94 = vector.broadcast %cst_40 : f32 to vector<8x128xf32>
    %95 = arith.mulf %94, %93 : vector<8x128xf32>
    %96 = math.tanh %95 : vector<8x128xf32>
    %cst_41 = arith.constant 5.000000e-01 : f32
    %97 = vector.broadcast %cst_41 : f32 to vector<8x128xf32>
    %98 = arith.mulf %97, %96 : vector<8x128xf32>
    %cst_42 = arith.constant 5.000000e-01 : f32
    %99 = vector.broadcast %cst_42 : f32 to vector<8x128xf32>
    %100 = arith.addf %98, %99 : vector<8x128xf32>
    %101 = vector.extract_strided_slice %84 {offsets = [0, 256], sizes = [8, 128], strides = [1, 1]} : vector<8x512xf32> to vector<8x128xf32>
    %102 = math.tanh %101 : vector<8x128xf32>
    %103 = vector.extract_strided_slice %84 {offsets = [0, 384], sizes = [8, 128], strides = [1, 1]} : vector<8x512xf32> to vector<8x128xf32>
    %cst_43 = arith.constant 5.000000e-01 : f32
    %104 = vector.broadcast %cst_43 : f32 to vector<8x128xf32>
    %105 = arith.mulf %104, %103 : vector<8x128xf32>
    %106 = math.tanh %105 : vector<8x128xf32>
    %cst_44 = arith.constant 5.000000e-01 : f32
    %107 = vector.broadcast %cst_44 : f32 to vector<8x128xf32>
    %108 = arith.mulf %107, %106 : vector<8x128xf32>
    %cst_45 = arith.constant 5.000000e-01 : f32
    %109 = vector.broadcast %cst_45 : f32 to vector<8x128xf32>
    %110 = arith.addf %108, %109 : vector<8x128xf32>
    %111 = arith.mulf %100, %76 : vector<8x128xf32>
    %112 = arith.mulf %92, %102 : vector<8x128xf32>
    %113 = arith.addf %111, %112 : vector<8x128xf32>
    %114 = math.tanh %113 : vector<8x128xf32>
    %115 = arith.mulf %110, %114 : vector<8x128xf32>
    %c3_i32 = arith.constant 3 : i32
    %116 = arith.index_cast %c3_i32 : i32 to index
    %c0_46 = arith.constant 0 : index
    %c0_47 = arith.constant 0 : index
    %117 = vector.load %arg2[%116, %c0_46, %c0_47] : memref<8x8x512xf32, #tpu.memory_space<vmem>>, vector<1x8x512xf32>
    %118 = vector.shape_cast %117 : vector<1x8x512xf32> to vector<8x512xf32>
    %c0_48 = arith.constant 0 : index
    %c0_49 = arith.constant 0 : index
    %119 = vector.load %arg3[%c0_48, %c0_49] : memref<128x512xf32, #tpu.memory_space<vmem>>, vector<128x512xf32>
    %cst_50 = arith.constant dense<0.000000e+00> : vector<8x512xf32>
    %120 = tpu.matmul %115, %119, %cst_50 {dimension_numbers = #tpu.dot_dimension_numbers<[1], [0], [0], [1], [0, 0, 1, 1], [], []>} : vector<8x128xf32>, vector<128x512xf32>, vector<8x512xf32> -> vector<8x512xf32>
    %121 = arith.addf %118, %120 : vector<8x512xf32>
    %122 = vector.extract_strided_slice %121 {offsets = [0, 0], sizes = [8, 128], strides = [1, 1]} : vector<8x512xf32> to vector<8x128xf32>
    %cst_51 = arith.constant 5.000000e-01 : f32
    %123 = vector.broadcast %cst_51 : f32 to vector<8x128xf32>
    %124 = arith.mulf %123, %122 : vector<8x128xf32>
    %125 = math.tanh %124 : vector<8x128xf32>
    %cst_52 = arith.constant 5.000000e-01 : f32
    %126 = vector.broadcast %cst_52 : f32 to vector<8x128xf32>
    %127 = arith.mulf %126, %125 : vector<8x128xf32>
    %cst_53 = arith.constant 5.000000e-01 : f32
    %128 = vector.broadcast %cst_53 : f32 to vector<8x128xf32>
    %129 = arith.addf %127, %128 : vector<8x128xf32>
    %130 = vector.extract_strided_slice %121 {offsets = [0, 128], sizes = [8, 128], strides = [1, 1]} : vector<8x512xf32> to vector<8x128xf32>
    %cst_54 = arith.constant 5.000000e-01 : f32
    %131 = vector.broadcast %cst_54 : f32 to vector<8x128xf32>
    %132 = arith.mulf %131, %130 : vector<8x128xf32>
    %133 = math.tanh %132 : vector<8x128xf32>
    %cst_55 = arith.constant 5.000000e-01 : f32
    %134 = vector.broadcast %cst_55 : f32 to vector<8x128xf32>
    %135 = arith.mulf %134, %133 : vector<8x128xf32>
    %cst_56 = arith.constant 5.000000e-01 : f32
    %136 = vector.broadcast %cst_56 : f32 to vector<8x128xf32>
    %137 = arith.addf %135, %136 : vector<8x128xf32>
    %138 = vector.extract_strided_slice %121 {offsets = [0, 256], sizes = [8, 128], strides = [1, 1]} : vector<8x512xf32> to vector<8x128xf32>
    %139 = math.tanh %138 : vector<8x128xf32>
    %140 = vector.extract_strided_slice %121 {offsets = [0, 384], sizes = [8, 128], strides = [1, 1]} : vector<8x512xf32> to vector<8x128xf32>
    %cst_57 = arith.constant 5.000000e-01 : f32
    %141 = vector.broadcast %cst_57 : f32 to vector<8x128xf32>
    %142 = arith.mulf %141, %140 : vector<8x128xf32>
    %143 = math.tanh %142 : vector<8x128xf32>
    %cst_58 = arith.constant 5.000000e-01 : f32
    %144 = vector.broadcast %cst_58 : f32 to vector<8x128xf32>
    %145 = arith.mulf %144, %143 : vector<8x128xf32>
    %cst_59 = arith.constant 5.000000e-01 : f32
    %146 = vector.broadcast %cst_59 : f32 to vector<8x128xf32>
    %147 = arith.addf %145, %146 : vector<8x128xf32>
    %148 = arith.mulf %137, %113 : vector<8x128xf32>
    %149 = arith.mulf %129, %139 : vector<8x128xf32>
    %150 = arith.addf %148, %149 : vector<8x128xf32>
    %151 = math.tanh %150 : vector<8x128xf32>
    %152 = arith.mulf %147, %151 : vector<8x128xf32>
    %c4_i32 = arith.constant 4 : i32
    %153 = arith.index_cast %c4_i32 : i32 to index
    %c0_60 = arith.constant 0 : index
    %c0_61 = arith.constant 0 : index
    %154 = vector.load %arg2[%153, %c0_60, %c0_61] : memref<8x8x512xf32, #tpu.memory_space<vmem>>, vector<1x8x512xf32>
    %155 = vector.shape_cast %154 : vector<1x8x512xf32> to vector<8x512xf32>
    %c0_62 = arith.constant 0 : index
    %c0_63 = arith.constant 0 : index
    %156 = vector.load %arg3[%c0_62, %c0_63] : memref<128x512xf32, #tpu.memory_space<vmem>>, vector<128x512xf32>
    %cst_64 = arith.constant dense<0.000000e+00> : vector<8x512xf32>
    %157 = tpu.matmul %152, %156, %cst_64 {dimension_numbers = #tpu.dot_dimension_numbers<[1], [0], [0], [1], [0, 0, 1, 1], [], []>} : vector<8x128xf32>, vector<128x512xf32>, vector<8x512xf32> -> vector<8x512xf32>
    %158 = arith.addf %155, %157 : vector<8x512xf32>
    %159 = vector.extract_strided_slice %158 {offsets = [0, 0], sizes = [8, 128], strides = [1, 1]} : vector<8x512xf32> to vector<8x128xf32>
    %cst_65 = arith.constant 5.000000e-01 : f32
    %160 = vector.broadcast %cst_65 : f32 to vector<8x128xf32>
    %161 = arith.mulf %160, %159 : vector<8x128xf32>
    %162 = math.tanh %161 : vector<8x128xf32>
    %cst_66 = arith.constant 5.000000e-01 : f32
    %163 = vector.broadcast %cst_66 : f32 to vector<8x128xf32>
    %164 = arith.mulf %163, %162 : vector<8x128xf32>
    %cst_67 = arith.constant 5.000000e-01 : f32
    %165 = vector.broadcast %cst_67 : f32 to vector<8x128xf32>
    %166 = arith.addf %164, %165 : vector<8x128xf32>
    %167 = vector.extract_strided_slice %158 {offsets = [0, 128], sizes = [8, 128], strides = [1, 1]} : vector<8x512xf32> to vector<8x128xf32>
    %cst_68 = arith.constant 5.000000e-01 : f32
    %168 = vector.broadcast %cst_68 : f32 to vector<8x128xf32>
    %169 = arith.mulf %168, %167 : vector<8x128xf32>
    %170 = math.tanh %169 : vector<8x128xf32>
    %cst_69 = arith.constant 5.000000e-01 : f32
    %171 = vector.broadcast %cst_69 : f32 to vector<8x128xf32>
    %172 = arith.mulf %171, %170 : vector<8x128xf32>
    %cst_70 = arith.constant 5.000000e-01 : f32
    %173 = vector.broadcast %cst_70 : f32 to vector<8x128xf32>
    %174 = arith.addf %172, %173 : vector<8x128xf32>
    %175 = vector.extract_strided_slice %158 {offsets = [0, 256], sizes = [8, 128], strides = [1, 1]} : vector<8x512xf32> to vector<8x128xf32>
    %176 = math.tanh %175 : vector<8x128xf32>
    %177 = vector.extract_strided_slice %158 {offsets = [0, 384], sizes = [8, 128], strides = [1, 1]} : vector<8x512xf32> to vector<8x128xf32>
    %cst_71 = arith.constant 5.000000e-01 : f32
    %178 = vector.broadcast %cst_71 : f32 to vector<8x128xf32>
    %179 = arith.mulf %178, %177 : vector<8x128xf32>
    %180 = math.tanh %179 : vector<8x128xf32>
    %cst_72 = arith.constant 5.000000e-01 : f32
    %181 = vector.broadcast %cst_72 : f32 to vector<8x128xf32>
    %182 = arith.mulf %181, %180 : vector<8x128xf32>
    %cst_73 = arith.constant 5.000000e-01 : f32
    %183 = vector.broadcast %cst_73 : f32 to vector<8x128xf32>
    %184 = arith.addf %182, %183 : vector<8x128xf32>
    %185 = arith.mulf %174, %150 : vector<8x128xf32>
    %186 = arith.mulf %166, %176 : vector<8x128xf32>
    %187 = arith.addf %185, %186 : vector<8x128xf32>
    %188 = math.tanh %187 : vector<8x128xf32>
    %189 = arith.mulf %184, %188 : vector<8x128xf32>
    %c5_i32 = arith.constant 5 : i32
    %190 = arith.index_cast %c5_i32 : i32 to index
    %c0_74 = arith.constant 0 : index
    %c0_75 = arith.constant 0 : index
    %191 = vector.load %arg2[%190, %c0_74, %c0_75] : memref<8x8x512xf32, #tpu.memory_space<vmem>>, vector<1x8x512xf32>
    %192 = vector.shape_cast %191 : vector<1x8x512xf32> to vector<8x512xf32>
    %c0_76 = arith.constant 0 : index
    %c0_77 = arith.constant 0 : index
    %193 = vector.load %arg3[%c0_76, %c0_77] : memref<128x512xf32, #tpu.memory_space<vmem>>, vector<128x512xf32>
    %cst_78 = arith.constant dense<0.000000e+00> : vector<8x512xf32>
    %194 = tpu.matmul %189, %193, %cst_78 {dimension_numbers = #tpu.dot_dimension_numbers<[1], [0], [0], [1], [0, 0, 1, 1], [], []>} : vector<8x128xf32>, vector<128x512xf32>, vector<8x512xf32> -> vector<8x512xf32>
    %195 = arith.addf %192, %194 : vector<8x512xf32>
    %196 = vector.extract_strided_slice %195 {offsets = [0, 0], sizes = [8, 128], strides = [1, 1]} : vector<8x512xf32> to vector<8x128xf32>
    %cst_79 = arith.constant 5.000000e-01 : f32
    %197 = vector.broadcast %cst_79 : f32 to vector<8x128xf32>
    %198 = arith.mulf %197, %196 : vector<8x128xf32>
    %199 = math.tanh %198 : vector<8x128xf32>
    %cst_80 = arith.constant 5.000000e-01 : f32
    %200 = vector.broadcast %cst_80 : f32 to vector<8x128xf32>
    %201 = arith.mulf %200, %199 : vector<8x128xf32>
    %cst_81 = arith.constant 5.000000e-01 : f32
    %202 = vector.broadcast %cst_81 : f32 to vector<8x128xf32>
    %203 = arith.addf %201, %202 : vector<8x128xf32>
    %204 = vector.extract_strided_slice %195 {offsets = [0, 128], sizes = [8, 128], strides = [1, 1]} : vector<8x512xf32> to vector<8x128xf32>
    %cst_82 = arith.constant 5.000000e-01 : f32
    %205 = vector.broadcast %cst_82 : f32 to vector<8x128xf32>
    %206 = arith.mulf %205, %204 : vector<8x128xf32>
    %207 = math.tanh %206 : vector<8x128xf32>
    %cst_83 = arith.constant 5.000000e-01 : f32
    %208 = vector.broadcast %cst_83 : f32 to vector<8x128xf32>
    %209 = arith.mulf %208, %207 : vector<8x128xf32>
    %cst_84 = arith.constant 5.000000e-01 : f32
    %210 = vector.broadcast %cst_84 : f32 to vector<8x128xf32>
    %211 = arith.addf %209, %210 : vector<8x128xf32>
    %212 = vector.extract_strided_slice %195 {offsets = [0, 256], sizes = [8, 128], strides = [1, 1]} : vector<8x512xf32> to vector<8x128xf32>
    %213 = math.tanh %212 : vector<8x128xf32>
    %214 = vector.extract_strided_slice %195 {offsets = [0, 384], sizes = [8, 128], strides = [1, 1]} : vector<8x512xf32> to vector<8x128xf32>
    %cst_85 = arith.constant 5.000000e-01 : f32
    %215 = vector.broadcast %cst_85 : f32 to vector<8x128xf32>
    %216 = arith.mulf %215, %214 : vector<8x128xf32>
    %217 = math.tanh %216 : vector<8x128xf32>
    %cst_86 = arith.constant 5.000000e-01 : f32
    %218 = vector.broadcast %cst_86 : f32 to vector<8x128xf32>
    %219 = arith.mulf %218, %217 : vector<8x128xf32>
    %cst_87 = arith.constant 5.000000e-01 : f32
    %220 = vector.broadcast %cst_87 : f32 to vector<8x128xf32>
    %221 = arith.addf %219, %220 : vector<8x128xf32>
    %222 = arith.mulf %211, %187 : vector<8x128xf32>
    %223 = arith.mulf %203, %213 : vector<8x128xf32>
    %224 = arith.addf %222, %223 : vector<8x128xf32>
    %225 = math.tanh %224 : vector<8x128xf32>
    %226 = arith.mulf %221, %225 : vector<8x128xf32>
    %c6_i32 = arith.constant 6 : i32
    %227 = arith.index_cast %c6_i32 : i32 to index
    %c0_88 = arith.constant 0 : index
    %c0_89 = arith.constant 0 : index
    %228 = vector.load %arg2[%227, %c0_88, %c0_89] : memref<8x8x512xf32, #tpu.memory_space<vmem>>, vector<1x8x512xf32>
    %229 = vector.shape_cast %228 : vector<1x8x512xf32> to vector<8x512xf32>
    %c0_90 = arith.constant 0 : index
    %c0_91 = arith.constant 0 : index
    %230 = vector.load %arg3[%c0_90, %c0_91] : memref<128x512xf32, #tpu.memory_space<vmem>>, vector<128x512xf32>
    %cst_92 = arith.constant dense<0.000000e+00> : vector<8x512xf32>
    %231 = tpu.matmul %226, %230, %cst_92 {dimension_numbers = #tpu.dot_dimension_numbers<[1], [0], [0], [1], [0, 0, 1, 1], [], []>} : vector<8x128xf32>, vector<128x512xf32>, vector<8x512xf32> -> vector<8x512xf32>
    %232 = arith.addf %229, %231 : vector<8x512xf32>
    %233 = vector.extract_strided_slice %232 {offsets = [0, 0], sizes = [8, 128], strides = [1, 1]} : vector<8x512xf32> to vector<8x128xf32>
    %cst_93 = arith.constant 5.000000e-01 : f32
    %234 = vector.broadcast %cst_93 : f32 to vector<8x128xf32>
    %235 = arith.mulf %234, %233 : vector<8x128xf32>
    %236 = math.tanh %235 : vector<8x128xf32>
    %cst_94 = arith.constant 5.000000e-01 : f32
    %237 = vector.broadcast %cst_94 : f32 to vector<8x128xf32>
    %238 = arith.mulf %237, %236 : vector<8x128xf32>
    %cst_95 = arith.constant 5.000000e-01 : f32
    %239 = vector.broadcast %cst_95 : f32 to vector<8x128xf32>
    %240 = arith.addf %238, %239 : vector<8x128xf32>
    %241 = vector.extract_strided_slice %232 {offsets = [0, 128], sizes = [8, 128], strides = [1, 1]} : vector<8x512xf32> to vector<8x128xf32>
    %cst_96 = arith.constant 5.000000e-01 : f32
    %242 = vector.broadcast %cst_96 : f32 to vector<8x128xf32>
    %243 = arith.mulf %242, %241 : vector<8x128xf32>
    %244 = math.tanh %243 : vector<8x128xf32>
    %cst_97 = arith.constant 5.000000e-01 : f32
    %245 = vector.broadcast %cst_97 : f32 to vector<8x128xf32>
    %246 = arith.mulf %245, %244 : vector<8x128xf32>
    %cst_98 = arith.constant 5.000000e-01 : f32
    %247 = vector.broadcast %cst_98 : f32 to vector<8x128xf32>
    %248 = arith.addf %246, %247 : vector<8x128xf32>
    %249 = vector.extract_strided_slice %232 {offsets = [0, 256], sizes = [8, 128], strides = [1, 1]} : vector<8x512xf32> to vector<8x128xf32>
    %250 = math.tanh %249 : vector<8x128xf32>
    %251 = vector.extract_strided_slice %232 {offsets = [0, 384], sizes = [8, 128], strides = [1, 1]} : vector<8x512xf32> to vector<8x128xf32>
    %cst_99 = arith.constant 5.000000e-01 : f32
    %252 = vector.broadcast %cst_99 : f32 to vector<8x128xf32>
    %253 = arith.mulf %252, %251 : vector<8x128xf32>
    %254 = math.tanh %253 : vector<8x128xf32>
    %cst_100 = arith.constant 5.000000e-01 : f32
    %255 = vector.broadcast %cst_100 : f32 to vector<8x128xf32>
    %256 = arith.mulf %255, %254 : vector<8x128xf32>
    %cst_101 = arith.constant 5.000000e-01 : f32
    %257 = vector.broadcast %cst_101 : f32 to vector<8x128xf32>
    %258 = arith.addf %256, %257 : vector<8x128xf32>
    %259 = arith.mulf %248, %224 : vector<8x128xf32>
    %260 = arith.mulf %240, %250 : vector<8x128xf32>
    %261 = arith.addf %259, %260 : vector<8x128xf32>
    %262 = math.tanh %261 : vector<8x128xf32>
    %263 = arith.mulf %258, %262 : vector<8x128xf32>
    %c7_i32 = arith.constant 7 : i32
    %264 = arith.index_cast %c7_i32 : i32 to index
    %c0_102 = arith.constant 0 : index
    %c0_103 = arith.constant 0 : index
    %265 = vector.load %arg2[%264, %c0_102, %c0_103] : memref<8x8x512xf32, #tpu.memory_space<vmem>>, vector<1x8x512xf32>
    %266 = vector.shape_cast %265 : vector<1x8x512xf32> to vector<8x512xf32>
    %c0_104 = arith.constant 0 : index
    %c0_105 = arith.constant 0 : index
    %267 = vector.load %arg3[%c0_104, %c0_105] : memref<128x512xf32, #tpu.memory_space<vmem>>, vector<128x512xf32>
    %cst_106 = arith.constant dense<0.000000e+00> : vector<8x512xf32>
    %268 = tpu.matmul %263, %267, %cst_106 {dimension_numbers = #tpu.dot_dimension_numbers<[1], [0], [0], [1], [0, 0, 1, 1], [], []>} : vector<8x128xf32>, vector<128x512xf32>, vector<8x512xf32> -> vector<8x512xf32>
    %269 = arith.addf %266, %268 : vector<8x512xf32>
    %270 = vector.extract_strided_slice %269 {offsets = [0, 0], sizes = [8, 128], strides = [1, 1]} : vector<8x512xf32> to vector<8x128xf32>
    %cst_107 = arith.constant 5.000000e-01 : f32
    %271 = vector.broadcast %cst_107 : f32 to vector<8x128xf32>
    %272 = arith.mulf %271, %270 : vector<8x128xf32>
    %273 = math.tanh %272 : vector<8x128xf32>
    %cst_108 = arith.constant 5.000000e-01 : f32
    %274 = vector.broadcast %cst_108 : f32 to vector<8x128xf32>
    %275 = arith.mulf %274, %273 : vector<8x128xf32>
    %cst_109 = arith.constant 5.000000e-01 : f32
    %276 = vector.broadcast %cst_109 : f32 to vector<8x128xf32>
    %277 = arith.addf %275, %276 : vector<8x128xf32>
    %278 = vector.extract_strided_slice %269 {offsets = [0, 128], sizes = [8, 128], strides = [1, 1]} : vector<8x512xf32> to vector<8x128xf32>
    %cst_110 = arith.constant 5.000000e-01 : f32
    %279 = vector.broadcast %cst_110 : f32 to vector<8x128xf32>
    %280 = arith.mulf %279, %278 : vector<8x128xf32>
    %281 = math.tanh %280 : vector<8x128xf32>
    %cst_111 = arith.constant 5.000000e-01 : f32
    %282 = vector.broadcast %cst_111 : f32 to vector<8x128xf32>
    %283 = arith.mulf %282, %281 : vector<8x128xf32>
    %cst_112 = arith.constant 5.000000e-01 : f32
    %284 = vector.broadcast %cst_112 : f32 to vector<8x128xf32>
    %285 = arith.addf %283, %284 : vector<8x128xf32>
    %286 = vector.extract_strided_slice %269 {offsets = [0, 256], sizes = [8, 128], strides = [1, 1]} : vector<8x512xf32> to vector<8x128xf32>
    %287 = math.tanh %286 : vector<8x128xf32>
    %288 = vector.extract_strided_slice %269 {offsets = [0, 384], sizes = [8, 128], strides = [1, 1]} : vector<8x512xf32> to vector<8x128xf32>
    %cst_113 = arith.constant 5.000000e-01 : f32
    %289 = vector.broadcast %cst_113 : f32 to vector<8x128xf32>
    %290 = arith.mulf %289, %288 : vector<8x128xf32>
    %291 = math.tanh %290 : vector<8x128xf32>
    %cst_114 = arith.constant 5.000000e-01 : f32
    %292 = vector.broadcast %cst_114 : f32 to vector<8x128xf32>
    %293 = arith.mulf %292, %291 : vector<8x128xf32>
    %cst_115 = arith.constant 5.000000e-01 : f32
    %294 = vector.broadcast %cst_115 : f32 to vector<8x128xf32>
    %295 = arith.addf %293, %294 : vector<8x128xf32>
    %296 = arith.mulf %285, %261 : vector<8x128xf32>
    %297 = arith.mulf %277, %287 : vector<8x128xf32>
    %298 = arith.addf %296, %297 : vector<8x128xf32>
    %299 = math.tanh %298 : vector<8x128xf32>
    %300 = arith.mulf %295, %299 : vector<8x128xf32>
    %c8_i32 = arith.constant 8 : i32
    %c0_116 = arith.constant 0 : index
    %c0_117 = arith.constant 0 : index
    %301 = vector.load %arg6[%c0_116, %c0_117] : memref<8x128xf32, #tpu.memory_space<vmem>>, vector<8x128xf32>
    tpu.vector_store %arg6[%c0_116, %c0_117], %300 {strides = array<i32>} : memref<8x128xf32, #tpu.memory_space<vmem>>, vector<8x128xf32>,
    %c0_118 = arith.constant 0 : index
    %c0_119 = arith.constant 0 : index
    %302 = vector.load %arg7[%c0_118, %c0_119] : memref<8x128xf32, #tpu.memory_space<vmem>>, vector<8x128xf32>
    tpu.vector_store %arg7[%c0_118, %c0_119], %298 {strides = array<i32>} : memref<8x128xf32, #tpu.memory_space<vmem>>, vector<8x128xf32>,
    %c0_i32_120 = arith.constant 0 : i32
    %303 = arith.cmpi eq, %arg1, %c0_i32_120 : i32
    %304 = arith.extui %303 : i1 to i32
    %c0_i32_121 = arith.constant 0 : i32
    %305 = arith.cmpi ne, %304, %c0_i32_121 : i32
    scf.if %305 {
      %c0_122 = arith.constant 0 : index
      %c0_123 = arith.constant 0 : index
      %306 = vector.load %arg4[%c0_122, %c0_123] : memref<8x128xf32, #tpu.memory_space<vmem>>, vector<8x128xf32>
      tpu.vector_store %arg4[%c0_122, %c0_123], %300 {strides = array<i32>} : memref<8x128xf32, #tpu.memory_space<vmem>>, vector<8x128xf32>,
      %c0_124 = arith.constant 0 : index
      %c0_125 = arith.constant 0 : index
      %307 = vector.load %arg5[%c0_124, %c0_125] : memref<8x128xf32, #tpu.memory_space<vmem>>, vector<8x128xf32>
      tpu.vector_store %arg5[%c0_124, %c0_125], %298 {strides = array<i32>} : memref<8x128xf32, #tpu.memory_space<vmem>>, vector<8x128xf32>,
    } else {
    }
    return
  }
  func.func @transform_0(%arg0: i32, %arg1: i32) -> (i32, i32, i32) {
    %c0_i32 = arith.constant 0 : i32
    %c0_i32_0 = arith.constant 0 : i32
    return %arg1, %arg0, %c0_i32 : i32, i32, i32
  }
  func.func @transform_1(%arg0: i32, %arg1: i32) -> (i32, i32) {
    %c0_i32 = arith.constant 0 : i32
    %c0_i32_0 = arith.constant 0 : i32
    %c0_i32_1 = arith.constant 0 : i32
    return %c0_i32, %c0_i32_0 : i32, i32
  }
  func.func @transform_2(%arg0: i32, %arg1: i32) -> (i32, i32) {
    %c0_i32 = arith.constant 0 : i32
    %c0_i32_0 = arith.constant 0 : i32
    return %arg0, %c0_i32 : i32, i32
  }
  func.func @transform_3(%arg0: i32, %arg1: i32) -> (i32, i32) {
    %c0_i32 = arith.constant 0 : i32
    %c0_i32_0 = arith.constant 0 : i32
    return %arg0, %c0_i32 : i32, i32
  }
}

module attributes {stable_mosaic.version = 11 : i64} {
  func.func @_lstm_kernel(%arg0: i32, %arg1: i32, %arg2: memref<8x8x512xf32, #tpu.memory_space<vmem>>, %arg3: memref<128x512xf32, #tpu.memory_space<vmem>>, %arg4: memref<8x128xf32, #tpu.memory_space<vmem>>, %arg5: memref<8x128xf32, #tpu.memory_space<vmem>>, %arg6: memref<8x128xf32, #tpu.memory_space<vmem>>, %arg7: memref<8x128xf32, #tpu.memory_space<vmem>>) attributes {dimension_semantics = [#tpu.dimension_semantics<parallel>, #tpu.dimension_semantics<arbitrary>], iteration_bounds = array<i64: 1, 1>, scalar_prefetch = 0 : i64, scratch_operands = 2 : i64, tpu.core_type = #tpu.core_type<tc>, window_params = [{transform_indices = @transform_0, window_bounds = array<i64: 8, 8, 512>}, {pipeline_mode = #tpu.pipeline_mode<synchronous>, transform_indices = @transform_1, window_bounds = array<i64: 128, 512>}, {transform_indices = @transform_2, window_bounds = array<i64: 8, 128>}, {transform_indices = @transform_3, window_bounds = array<i64: 8, 128>}]} {
    %c0_i32 = arith.constant 0 : i32
    %0 = arith.cmpi eq, %arg1, %c0_i32 : i32
    %1 = arith.extui %0 : i1 to i32
    %c0_i32_0 = arith.constant 0 : i32
    %2 = arith.cmpi ne, %1, %c0_i32_0 : i32
    scf.if %2 {
      %cst_122 = arith.constant 0.000000e+00 : f32
      %306 = vector.broadcast %cst_122 : f32 to vector<8x128xf32>
      %c0_123 = arith.constant 0 : index
      %c0_124 = arith.constant 0 : index
      %307 = vector.load %arg6[%c0_123, %c0_124] : memref<8x128xf32, #tpu.memory_space<vmem>>, vector<8x128xf32>
      tpu.vector_store %arg6[%c0_123, %c0_124], %306 {strides = array<i32>} : memref<8x128xf32, #tpu.memory_space<vmem>>, vector<8x128xf32>,
      %cst_125 = arith.constant 0.000000e+00 : f32
      %308 = vector.broadcast %cst_125 : f32 to vector<8x128xf32>
      %c0_126 = arith.constant 0 : index
      %c0_127 = arith.constant 0 : index
      %309 = vector.load %arg7[%c0_126, %c0_127] : memref<8x128xf32, #tpu.memory_space<vmem>>, vector<8x128xf32>
      tpu.vector_store %arg7[%c0_126, %c0_127], %308 {strides = array<i32>} : memref<8x128xf32, #tpu.memory_space<vmem>>, vector<8x128xf32>,
    } else {
    }
    %c0 = arith.constant 0 : index
    %c0_1 = arith.constant 0 : index
    %3 = vector.load %arg6[%c0, %c0_1] : memref<8x128xf32, #tpu.memory_space<vmem>>, vector<8x128xf32>
    %c0_2 = arith.constant 0 : index
    %c0_3 = arith.constant 0 : index
    %4 = vector.load %arg7[%c0_2, %c0_3] : memref<8x128xf32, #tpu.memory_space<vmem>>, vector<8x128xf32>
    %c0_i32_4 = arith.constant 0 : i32
    %5 = arith.index_cast %c0_i32_4 : i32 to index
    %c0_5 = arith.constant 0 : index
    %c0_6 = arith.constant 0 : index
    %6 = vector.load %arg2[%5, %c0_5, %c0_6] : memref<8x8x512xf32, #tpu.memory_space<vmem>>, vector<1x8x512xf32>
    %7 = vector.shape_cast %6 : vector<1x8x512xf32> to vector<8x512xf32>
    %c0_7 = arith.constant 0 : index
    %c0_8 = arith.constant 0 : index
    %8 = vector.load %arg3[%c0_7, %c0_8] : memref<128x512xf32, #tpu.memory_space<vmem>>, vector<128x512xf32>
    %cst = arith.constant dense<0.000000e+00> : vector<8x512xf32>
    %9 = tpu.matmul %3, %8, %cst {dimension_numbers = #tpu.dot_dimension_numbers<[1], [0], [0], [1], [0, 0, 1, 1], [], []>} : vector<8x128xf32>, vector<128x512xf32>, vector<8x512xf32> -> vector<8x512xf32>
    %10 = arith.addf %7, %9 : vector<8x512xf32>
    %11 = vector.extract_strided_slice %10 {offsets = [0, 0], sizes = [8, 128], strides = [1, 1]} : vector<8x512xf32> to vector<8x128xf32>
    %cst_9 = arith.constant 5.000000e-01 : f32
    %12 = vector.broadcast %cst_9 : f32 to vector<8x128xf32>
    %13 = arith.mulf %12, %11 : vector<8x128xf32>
    %14 = math.tanh %13 : vector<8x128xf32>
    %cst_10 = arith.constant 5.000000e-01 : f32
    %15 = vector.broadcast %cst_10 : f32 to vector<8x128xf32>
    %16 = arith.mulf %15, %14 : vector<8x128xf32>
    %cst_11 = arith.constant 5.000000e-01 : f32
    %17 = vector.broadcast %cst_11 : f32 to vector<8x128xf32>
    %18 = arith.addf %16, %17 : vector<8x128xf32>
    %19 = vector.extract_strided_slice %10 {offsets = [0, 128], sizes = [8, 128], strides = [1, 1]} : vector<8x512xf32> to vector<8x128xf32>
    %cst_12 = arith.constant 5.000000e-01 : f32
    %20 = vector.broadcast %cst_12 : f32 to vector<8x128xf32>
    %21 = arith.mulf %20, %19 : vector<8x128xf32>
    %22 = math.tanh %21 : vector<8x128xf32>
    %cst_13 = arith.constant 5.000000e-01 : f32
    %23 = vector.broadcast %cst_13 : f32 to vector<8x128xf32>
    %24 = arith.mulf %23, %22 : vector<8x128xf32>
    %cst_14 = arith.constant 5.000000e-01 : f32
    %25 = vector.broadcast %cst_14 : f32 to vector<8x128xf32>
    %26 = arith.addf %24, %25 : vector<8x128xf32>
    %27 = vector.extract_strided_slice %10 {offsets = [0, 256], sizes = [8, 128], strides = [1, 1]} : vector<8x512xf32> to vector<8x128xf32>
    %28 = math.tanh %27 : vector<8x128xf32>
    %29 = vector.extract_strided_slice %10 {offsets = [0, 384], sizes = [8, 128], strides = [1, 1]} : vector<8x512xf32> to vector<8x128xf32>
    %cst_15 = arith.constant 5.000000e-01 : f32
    %30 = vector.broadcast %cst_15 : f32 to vector<8x128xf32>
    %31 = arith.mulf %30, %29 : vector<8x128xf32>
    %32 = math.tanh %31 : vector<8x128xf32>
    %cst_16 = arith.constant 5.000000e-01 : f32
    %33 = vector.broadcast %cst_16 : f32 to vector<8x128xf32>
    %34 = arith.mulf %33, %32 : vector<8x128xf32>
    %cst_17 = arith.constant 5.000000e-01 : f32
    %35 = vector.broadcast %cst_17 : f32 to vector<8x128xf32>
    %36 = arith.addf %34, %35 : vector<8x128xf32>
    %37 = arith.mulf %26, %4 : vector<8x128xf32>
    %38 = arith.mulf %18, %28 : vector<8x128xf32>
    %39 = arith.addf %37, %38 : vector<8x128xf32>
    %40 = math.tanh %39 : vector<8x128xf32>
    %41 = arith.mulf %36, %40 : vector<8x128xf32>
    %c1_i32 = arith.constant 1 : i32
    %42 = arith.index_cast %c1_i32 : i32 to index
    %c0_18 = arith.constant 0 : index
    %c0_19 = arith.constant 0 : index
    %43 = vector.load %arg2[%42, %c0_18, %c0_19] : memref<8x8x512xf32, #tpu.memory_space<vmem>>, vector<1x8x512xf32>
    %44 = vector.shape_cast %43 : vector<1x8x512xf32> to vector<8x512xf32>
    %c0_20 = arith.constant 0 : index
    %c0_21 = arith.constant 0 : index
    %45 = vector.load %arg3[%c0_20, %c0_21] : memref<128x512xf32, #tpu.memory_space<vmem>>, vector<128x512xf32>
    %cst_22 = arith.constant dense<0.000000e+00> : vector<8x512xf32>
    %46 = tpu.matmul %41, %45, %cst_22 {dimension_numbers = #tpu.dot_dimension_numbers<[1], [0], [0], [1], [0, 0, 1, 1], [], []>} : vector<8x128xf32>, vector<128x512xf32>, vector<8x512xf32> -> vector<8x512xf32>
    %47 = arith.addf %44, %46 : vector<8x512xf32>
    %48 = vector.extract_strided_slice %47 {offsets = [0, 0], sizes = [8, 128], strides = [1, 1]} : vector<8x512xf32> to vector<8x128xf32>
    %cst_23 = arith.constant 5.000000e-01 : f32
    %49 = vector.broadcast %cst_23 : f32 to vector<8x128xf32>
    %50 = arith.mulf %49, %48 : vector<8x128xf32>
    %51 = math.tanh %50 : vector<8x128xf32>
    %cst_24 = arith.constant 5.000000e-01 : f32
    %52 = vector.broadcast %cst_24 : f32 to vector<8x128xf32>
    %53 = arith.mulf %52, %51 : vector<8x128xf32>
    %cst_25 = arith.constant 5.000000e-01 : f32
    %54 = vector.broadcast %cst_25 : f32 to vector<8x128xf32>
    %55 = arith.addf %53, %54 : vector<8x128xf32>
    %56 = vector.extract_strided_slice %47 {offsets = [0, 128], sizes = [8, 128], strides = [1, 1]} : vector<8x512xf32> to vector<8x128xf32>
    %cst_26 = arith.constant 5.000000e-01 : f32
    %57 = vector.broadcast %cst_26 : f32 to vector<8x128xf32>
    %58 = arith.mulf %57, %56 : vector<8x128xf32>
    %59 = math.tanh %58 : vector<8x128xf32>
    %cst_27 = arith.constant 5.000000e-01 : f32
    %60 = vector.broadcast %cst_27 : f32 to vector<8x128xf32>
    %61 = arith.mulf %60, %59 : vector<8x128xf32>
    %cst_28 = arith.constant 5.000000e-01 : f32
    %62 = vector.broadcast %cst_28 : f32 to vector<8x128xf32>
    %63 = arith.addf %61, %62 : vector<8x128xf32>
    %64 = vector.extract_strided_slice %47 {offsets = [0, 256], sizes = [8, 128], strides = [1, 1]} : vector<8x512xf32> to vector<8x128xf32>
    %65 = math.tanh %64 : vector<8x128xf32>
    %66 = vector.extract_strided_slice %47 {offsets = [0, 384], sizes = [8, 128], strides = [1, 1]} : vector<8x512xf32> to vector<8x128xf32>
    %cst_29 = arith.constant 5.000000e-01 : f32
    %67 = vector.broadcast %cst_29 : f32 to vector<8x128xf32>
    %68 = arith.mulf %67, %66 : vector<8x128xf32>
    %69 = math.tanh %68 : vector<8x128xf32>
    %cst_30 = arith.constant 5.000000e-01 : f32
    %70 = vector.broadcast %cst_30 : f32 to vector<8x128xf32>
    %71 = arith.mulf %70, %69 : vector<8x128xf32>
    %cst_31 = arith.constant 5.000000e-01 : f32
    %72 = vector.broadcast %cst_31 : f32 to vector<8x128xf32>
    %73 = arith.addf %71, %72 : vector<8x128xf32>
    %74 = arith.mulf %63, %39 : vector<8x128xf32>
    %75 = arith.mulf %55, %65 : vector<8x128xf32>
    %76 = arith.addf %74, %75 : vector<8x128xf32>
    %77 = math.tanh %76 : vector<8x128xf32>
    %78 = arith.mulf %73, %77 : vector<8x128xf32>
    %c2_i32 = arith.constant 2 : i32
    %79 = arith.index_cast %c2_i32 : i32 to index
    %c0_32 = arith.constant 0 : index
    %c0_33 = arith.constant 0 : index
    %80 = vector.load %arg2[%79, %c0_32, %c0_33] : memref<8x8x512xf32, #tpu.memory_space<vmem>>, vector<1x8x512xf32>
    %81 = vector.shape_cast %80 : vector<1x8x512xf32> to vector<8x512xf32>
    %c0_34 = arith.constant 0 : index
    %c0_35 = arith.constant 0 : index
    %82 = vector.load %arg3[%c0_34, %c0_35] : memref<128x512xf32, #tpu.memory_space<vmem>>, vector<128x512xf32>
    %cst_36 = arith.constant dense<0.000000e+00> : vector<8x512xf32>
    %83 = tpu.matmul %78, %82, %cst_36 {dimension_numbers = #tpu.dot_dimension_numbers<[1], [0], [0], [1], [0, 0, 1, 1], [], []>} : vector<8x128xf32>, vector<128x512xf32>, vector<8x512xf32> -> vector<8x512xf32>
    %84 = arith.addf %81, %83 : vector<8x512xf32>
    %85 = vector.extract_strided_slice %84 {offsets = [0, 0], sizes = [8, 128], strides = [1, 1]} : vector<8x512xf32> to vector<8x128xf32>
    %cst_37 = arith.constant 5.000000e-01 : f32
    %86 = vector.broadcast %cst_37 : f32 to vector<8x128xf32>
    %87 = arith.mulf %86, %85 : vector<8x128xf32>
    %88 = math.tanh %87 : vector<8x128xf32>
    %cst_38 = arith.constant 5.000000e-01 : f32
    %89 = vector.broadcast %cst_38 : f32 to vector<8x128xf32>
    %90 = arith.mulf %89, %88 : vector<8x128xf32>
    %cst_39 = arith.constant 5.000000e-01 : f32
    %91 = vector.broadcast %cst_39 : f32 to vector<8x128xf32>
    %92 = arith.addf %90, %91 : vector<8x128xf32>
    %93 = vector.extract_strided_slice %84 {offsets = [0, 128], sizes = [8, 128], strides = [1, 1]} : vector<8x512xf32> to vector<8x128xf32>
    %cst_40 = arith.constant 5.000000e-01 : f32
    %94 = vector.broadcast %cst_40 : f32 to vector<8x128xf32>
    %95 = arith.mulf %94, %93 : vector<8x128xf32>
    %96 = math.tanh %95 : vector<8x128xf32>
    %cst_41 = arith.constant 5.000000e-01 : f32
    %97 = vector.broadcast %cst_41 : f32 to vector<8x128xf32>
    %98 = arith.mulf %97, %96 : vector<8x128xf32>
    %cst_42 = arith.constant 5.000000e-01 : f32
    %99 = vector.broadcast %cst_42 : f32 to vector<8x128xf32>
    %100 = arith.addf %98, %99 : vector<8x128xf32>
    %101 = vector.extract_strided_slice %84 {offsets = [0, 256], sizes = [8, 128], strides = [1, 1]} : vector<8x512xf32> to vector<8x128xf32>
    %102 = math.tanh %101 : vector<8x128xf32>
    %103 = vector.extract_strided_slice %84 {offsets = [0, 384], sizes = [8, 128], strides = [1, 1]} : vector<8x512xf32> to vector<8x128xf32>
    %cst_43 = arith.constant 5.000000e-01 : f32
    %104 = vector.broadcast %cst_43 : f32 to vector<8x128xf32>
    %105 = arith.mulf %104, %103 : vector<8x128xf32>
    %106 = math.tanh %105 : vector<8x128xf32>
    %cst_44 = arith.constant 5.000000e-01 : f32
    %107 = vector.broadcast %cst_44 : f32 to vector<8x128xf32>
    %108 = arith.mulf %107, %106 : vector<8x128xf32>
    %cst_45 = arith.constant 5.000000e-01 : f32
    %109 = vector.broadcast %cst_45 : f32 to vector<8x128xf32>
    %110 = arith.addf %108, %109 : vector<8x128xf32>
    %111 = arith.mulf %100, %76 : vector<8x128xf32>
    %112 = arith.mulf %92, %102 : vector<8x128xf32>
    %113 = arith.addf %111, %112 : vector<8x128xf32>
    %114 = math.tanh %113 : vector<8x128xf32>
    %115 = arith.mulf %110, %114 : vector<8x128xf32>
    %c3_i32 = arith.constant 3 : i32
    %116 = arith.index_cast %c3_i32 : i32 to index
    %c0_46 = arith.constant 0 : index
    %c0_47 = arith.constant 0 : index
    %117 = vector.load %arg2[%116, %c0_46, %c0_47] : memref<8x8x512xf32, #tpu.memory_space<vmem>>, vector<1x8x512xf32>
    %118 = vector.shape_cast %117 : vector<1x8x512xf32> to vector<8x512xf32>
    %c0_48 = arith.constant 0 : index
    %c0_49 = arith.constant 0 : index
    %119 = vector.load %arg3[%c0_48, %c0_49] : memref<128x512xf32, #tpu.memory_space<vmem>>, vector<128x512xf32>
    %cst_50 = arith.constant dense<0.000000e+00> : vector<8x512xf32>
    %120 = tpu.matmul %115, %119, %cst_50 {dimension_numbers = #tpu.dot_dimension_numbers<[1], [0], [0], [1], [0, 0, 1, 1], [], []>} : vector<8x128xf32>, vector<128x512xf32>, vector<8x512xf32> -> vector<8x512xf32>
    %121 = arith.addf %118, %120 : vector<8x512xf32>
    %122 = vector.extract_strided_slice %121 {offsets = [0, 0], sizes = [8, 128], strides = [1, 1]} : vector<8x512xf32> to vector<8x128xf32>
    %cst_51 = arith.constant 5.000000e-01 : f32
    %123 = vector.broadcast %cst_51 : f32 to vector<8x128xf32>
    %124 = arith.mulf %123, %122 : vector<8x128xf32>
    %125 = math.tanh %124 : vector<8x128xf32>
    %cst_52 = arith.constant 5.000000e-01 : f32
    %126 = vector.broadcast %cst_52 : f32 to vector<8x128xf32>
    %127 = arith.mulf %126, %125 : vector<8x128xf32>
    %cst_53 = arith.constant 5.000000e-01 : f32
    %128 = vector.broadcast %cst_53 : f32 to vector<8x128xf32>
    %129 = arith.addf %127, %128 : vector<8x128xf32>
    %130 = vector.extract_strided_slice %121 {offsets = [0, 128], sizes = [8, 128], strides = [1, 1]} : vector<8x512xf32> to vector<8x128xf32>
    %cst_54 = arith.constant 5.000000e-01 : f32
    %131 = vector.broadcast %cst_54 : f32 to vector<8x128xf32>
    %132 = arith.mulf %131, %130 : vector<8x128xf32>
    %133 = math.tanh %132 : vector<8x128xf32>
    %cst_55 = arith.constant 5.000000e-01 : f32
    %134 = vector.broadcast %cst_55 : f32 to vector<8x128xf32>
    %135 = arith.mulf %134, %133 : vector<8x128xf32>
    %cst_56 = arith.constant 5.000000e-01 : f32
    %136 = vector.broadcast %cst_56 : f32 to vector<8x128xf32>
    %137 = arith.addf %135, %136 : vector<8x128xf32>
    %138 = vector.extract_strided_slice %121 {offsets = [0, 256], sizes = [8, 128], strides = [1, 1]} : vector<8x512xf32> to vector<8x128xf32>
    %139 = math.tanh %138 : vector<8x128xf32>
    %140 = vector.extract_strided_slice %121 {offsets = [0, 384], sizes = [8, 128], strides = [1, 1]} : vector<8x512xf32> to vector<8x128xf32>
    %cst_57 = arith.constant 5.000000e-01 : f32
    %141 = vector.broadcast %cst_57 : f32 to vector<8x128xf32>
    %142 = arith.mulf %141, %140 : vector<8x128xf32>
    %143 = math.tanh %142 : vector<8x128xf32>
    %cst_58 = arith.constant 5.000000e-01 : f32
    %144 = vector.broadcast %cst_58 : f32 to vector<8x128xf32>
    %145 = arith.mulf %144, %143 : vector<8x128xf32>
    %cst_59 = arith.constant 5.000000e-01 : f32
    %146 = vector.broadcast %cst_59 : f32 to vector<8x128xf32>
    %147 = arith.addf %145, %146 : vector<8x128xf32>
    %148 = arith.mulf %137, %113 : vector<8x128xf32>
    %149 = arith.mulf %129, %139 : vector<8x128xf32>
    %150 = arith.addf %148, %149 : vector<8x128xf32>
    %151 = math.tanh %150 : vector<8x128xf32>
    %152 = arith.mulf %147, %151 : vector<8x128xf32>
    %c4_i32 = arith.constant 4 : i32
    %153 = arith.index_cast %c4_i32 : i32 to index
    %c0_60 = arith.constant 0 : index
    %c0_61 = arith.constant 0 : index
    %154 = vector.load %arg2[%153, %c0_60, %c0_61] : memref<8x8x512xf32, #tpu.memory_space<vmem>>, vector<1x8x512xf32>
    %155 = vector.shape_cast %154 : vector<1x8x512xf32> to vector<8x512xf32>
    %c0_62 = arith.constant 0 : index
    %c0_63 = arith.constant 0 : index
    %156 = vector.load %arg3[%c0_62, %c0_63] : memref<128x512xf32, #tpu.memory_space<vmem>>, vector<128x512xf32>
    %cst_64 = arith.constant dense<0.000000e+00> : vector<8x512xf32>
    %157 = tpu.matmul %152, %156, %cst_64 {dimension_numbers = #tpu.dot_dimension_numbers<[1], [0], [0], [1], [0, 0, 1, 1], [], []>} : vector<8x128xf32>, vector<128x512xf32>, vector<8x512xf32> -> vector<8x512xf32>
    %158 = arith.addf %155, %157 : vector<8x512xf32>
    %159 = vector.extract_strided_slice %158 {offsets = [0, 0], sizes = [8, 128], strides = [1, 1]} : vector<8x512xf32> to vector<8x128xf32>
    %cst_65 = arith.constant 5.000000e-01 : f32
    %160 = vector.broadcast %cst_65 : f32 to vector<8x128xf32>
    %161 = arith.mulf %160, %159 : vector<8x128xf32>
    %162 = math.tanh %161 : vector<8x128xf32>
    %cst_66 = arith.constant 5.000000e-01 : f32
    %163 = vector.broadcast %cst_66 : f32 to vector<8x128xf32>
    %164 = arith.mulf %163, %162 : vector<8x128xf32>
    %cst_67 = arith.constant 5.000000e-01 : f32
    %165 = vector.broadcast %cst_67 : f32 to vector<8x128xf32>
    %166 = arith.addf %164, %165 : vector<8x128xf32>
    %167 = vector.extract_strided_slice %158 {offsets = [0, 128], sizes = [8, 128], strides = [1, 1]} : vector<8x512xf32> to vector<8x128xf32>
    %cst_68 = arith.constant 5.000000e-01 : f32
    %168 = vector.broadcast %cst_68 : f32 to vector<8x128xf32>
    %169 = arith.mulf %168, %167 : vector<8x128xf32>
    %170 = math.tanh %169 : vector<8x128xf32>
    %cst_69 = arith.constant 5.000000e-01 : f32
    %171 = vector.broadcast %cst_69 : f32 to vector<8x128xf32>
    %172 = arith.mulf %171, %170 : vector<8x128xf32>
    %cst_70 = arith.constant 5.000000e-01 : f32
    %173 = vector.broadcast %cst_70 : f32 to vector<8x128xf32>
    %174 = arith.addf %172, %173 : vector<8x128xf32>
    %175 = vector.extract_strided_slice %158 {offsets = [0, 256], sizes = [8, 128], strides = [1, 1]} : vector<8x512xf32> to vector<8x128xf32>
    %176 = math.tanh %175 : vector<8x128xf32>
    %177 = vector.extract_strided_slice %158 {offsets = [0, 384], sizes = [8, 128], strides = [1, 1]} : vector<8x512xf32> to vector<8x128xf32>
    %cst_71 = arith.constant 5.000000e-01 : f32
    %178 = vector.broadcast %cst_71 : f32 to vector<8x128xf32>
    %179 = arith.mulf %178, %177 : vector<8x128xf32>
    %180 = math.tanh %179 : vector<8x128xf32>
    %cst_72 = arith.constant 5.000000e-01 : f32
    %181 = vector.broadcast %cst_72 : f32 to vector<8x128xf32>
    %182 = arith.mulf %181, %180 : vector<8x128xf32>
    %cst_73 = arith.constant 5.000000e-01 : f32
    %183 = vector.broadcast %cst_73 : f32 to vector<8x128xf32>
    %184 = arith.addf %182, %183 : vector<8x128xf32>
    %185 = arith.mulf %174, %150 : vector<8x128xf32>
    %186 = arith.mulf %166, %176 : vector<8x128xf32>
    %187 = arith.addf %185, %186 : vector<8x128xf32>
    %188 = math.tanh %187 : vector<8x128xf32>
    %189 = arith.mulf %184, %188 : vector<8x128xf32>
    %c5_i32 = arith.constant 5 : i32
    %190 = arith.index_cast %c5_i32 : i32 to index
    %c0_74 = arith.constant 0 : index
    %c0_75 = arith.constant 0 : index
    %191 = vector.load %arg2[%190, %c0_74, %c0_75] : memref<8x8x512xf32, #tpu.memory_space<vmem>>, vector<1x8x512xf32>
    %192 = vector.shape_cast %191 : vector<1x8x512xf32> to vector<8x512xf32>
    %c0_76 = arith.constant 0 : index
    %c0_77 = arith.constant 0 : index
    %193 = vector.load %arg3[%c0_76, %c0_77] : memref<128x512xf32, #tpu.memory_space<vmem>>, vector<128x512xf32>
    %cst_78 = arith.constant dense<0.000000e+00> : vector<8x512xf32>
    %194 = tpu.matmul %189, %193, %cst_78 {dimension_numbers = #tpu.dot_dimension_numbers<[1], [0], [0], [1], [0, 0, 1, 1], [], []>} : vector<8x128xf32>, vector<128x512xf32>, vector<8x512xf32> -> vector<8x512xf32>
    %195 = arith.addf %192, %194 : vector<8x512xf32>
    %196 = vector.extract_strided_slice %195 {offsets = [0, 0], sizes = [8, 128], strides = [1, 1]} : vector<8x512xf32> to vector<8x128xf32>
    %cst_79 = arith.constant 5.000000e-01 : f32
    %197 = vector.broadcast %cst_79 : f32 to vector<8x128xf32>
    %198 = arith.mulf %197, %196 : vector<8x128xf32>
    %199 = math.tanh %198 : vector<8x128xf32>
    %cst_80 = arith.constant 5.000000e-01 : f32
    %200 = vector.broadcast %cst_80 : f32 to vector<8x128xf32>
    %201 = arith.mulf %200, %199 : vector<8x128xf32>
    %cst_81 = arith.constant 5.000000e-01 : f32
    %202 = vector.broadcast %cst_81 : f32 to vector<8x128xf32>
    %203 = arith.addf %201, %202 : vector<8x128xf32>
    %204 = vector.extract_strided_slice %195 {offsets = [0, 128], sizes = [8, 128], strides = [1, 1]} : vector<8x512xf32> to vector<8x128xf32>
    %cst_82 = arith.constant 5.000000e-01 : f32
    %205 = vector.broadcast %cst_82 : f32 to vector<8x128xf32>
    %206 = arith.mulf %205, %204 : vector<8x128xf32>
    %207 = math.tanh %206 : vector<8x128xf32>
    %cst_83 = arith.constant 5.000000e-01 : f32
    %208 = vector.broadcast %cst_83 : f32 to vector<8x128xf32>
    %209 = arith.mulf %208, %207 : vector<8x128xf32>
    %cst_84 = arith.constant 5.000000e-01 : f32
    %210 = vector.broadcast %cst_84 : f32 to vector<8x128xf32>
    %211 = arith.addf %209, %210 : vector<8x128xf32>
    %212 = vector.extract_strided_slice %195 {offsets = [0, 256], sizes = [8, 128], strides = [1, 1]} : vector<8x512xf32> to vector<8x128xf32>
    %213 = math.tanh %212 : vector<8x128xf32>
    %214 = vector.extract_strided_slice %195 {offsets = [0, 384], sizes = [8, 128], strides = [1, 1]} : vector<8x512xf32> to vector<8x128xf32>
    %cst_85 = arith.constant 5.000000e-01 : f32
    %215 = vector.broadcast %cst_85 : f32 to vector<8x128xf32>
    %216 = arith.mulf %215, %214 : vector<8x128xf32>
    %217 = math.tanh %216 : vector<8x128xf32>
    %cst_86 = arith.constant 5.000000e-01 : f32
    %218 = vector.broadcast %cst_86 : f32 to vector<8x128xf32>
    %219 = arith.mulf %218, %217 : vector<8x128xf32>
    %cst_87 = arith.constant 5.000000e-01 : f32
    %220 = vector.broadcast %cst_87 : f32 to vector<8x128xf32>
    %221 = arith.addf %219, %220 : vector<8x128xf32>
    %222 = arith.mulf %211, %187 : vector<8x128xf32>
    %223 = arith.mulf %203, %213 : vector<8x128xf32>
    %224 = arith.addf %222, %223 : vector<8x128xf32>
    %225 = math.tanh %224 : vector<8x128xf32>
    %226 = arith.mulf %221, %225 : vector<8x128xf32>
    %c6_i32 = arith.constant 6 : i32
    %227 = arith.index_cast %c6_i32 : i32 to index
    %c0_88 = arith.constant 0 : index
    %c0_89 = arith.constant 0 : index
    %228 = vector.load %arg2[%227, %c0_88, %c0_89] : memref<8x8x512xf32, #tpu.memory_space<vmem>>, vector<1x8x512xf32>
    %229 = vector.shape_cast %228 : vector<1x8x512xf32> to vector<8x512xf32>
    %c0_90 = arith.constant 0 : index
    %c0_91 = arith.constant 0 : index
    %230 = vector.load %arg3[%c0_90, %c0_91] : memref<128x512xf32, #tpu.memory_space<vmem>>, vector<128x512xf32>
    %cst_92 = arith.constant dense<0.000000e+00> : vector<8x512xf32>
    %231 = tpu.matmul %226, %230, %cst_92 {dimension_numbers = #tpu.dot_dimension_numbers<[1], [0], [0], [1], [0, 0, 1, 1], [], []>} : vector<8x128xf32>, vector<128x512xf32>, vector<8x512xf32> -> vector<8x512xf32>
    %232 = arith.addf %229, %231 : vector<8x512xf32>
    %233 = vector.extract_strided_slice %232 {offsets = [0, 0], sizes = [8, 128], strides = [1, 1]} : vector<8x512xf32> to vector<8x128xf32>
    %cst_93 = arith.constant 5.000000e-01 : f32
    %234 = vector.broadcast %cst_93 : f32 to vector<8x128xf32>
    %235 = arith.mulf %234, %233 : vector<8x128xf32>
    %236 = math.tanh %235 : vector<8x128xf32>
    %cst_94 = arith.constant 5.000000e-01 : f32
    %237 = vector.broadcast %cst_94 : f32 to vector<8x128xf32>
    %238 = arith.mulf %237, %236 : vector<8x128xf32>
    %cst_95 = arith.constant 5.000000e-01 : f32
    %239 = vector.broadcast %cst_95 : f32 to vector<8x128xf32>
    %240 = arith.addf %238, %239 : vector<8x128xf32>
    %241 = vector.extract_strided_slice %232 {offsets = [0, 128], sizes = [8, 128], strides = [1, 1]} : vector<8x512xf32> to vector<8x128xf32>
    %cst_96 = arith.constant 5.000000e-01 : f32
    %242 = vector.broadcast %cst_96 : f32 to vector<8x128xf32>
    %243 = arith.mulf %242, %241 : vector<8x128xf32>
    %244 = math.tanh %243 : vector<8x128xf32>
    %cst_97 = arith.constant 5.000000e-01 : f32
    %245 = vector.broadcast %cst_97 : f32 to vector<8x128xf32>
    %246 = arith.mulf %245, %244 : vector<8x128xf32>
    %cst_98 = arith.constant 5.000000e-01 : f32
    %247 = vector.broadcast %cst_98 : f32 to vector<8x128xf32>
    %248 = arith.addf %246, %247 : vector<8x128xf32>
    %249 = vector.extract_strided_slice %232 {offsets = [0, 256], sizes = [8, 128], strides = [1, 1]} : vector<8x512xf32> to vector<8x128xf32>
    %250 = math.tanh %249 : vector<8x128xf32>
    %251 = vector.extract_strided_slice %232 {offsets = [0, 384], sizes = [8, 128], strides = [1, 1]} : vector<8x512xf32> to vector<8x128xf32>
    %cst_99 = arith.constant 5.000000e-01 : f32
    %252 = vector.broadcast %cst_99 : f32 to vector<8x128xf32>
    %253 = arith.mulf %252, %251 : vector<8x128xf32>
    %254 = math.tanh %253 : vector<8x128xf32>
    %cst_100 = arith.constant 5.000000e-01 : f32
    %255 = vector.broadcast %cst_100 : f32 to vector<8x128xf32>
    %256 = arith.mulf %255, %254 : vector<8x128xf32>
    %cst_101 = arith.constant 5.000000e-01 : f32
    %257 = vector.broadcast %cst_101 : f32 to vector<8x128xf32>
    %258 = arith.addf %256, %257 : vector<8x128xf32>
    %259 = arith.mulf %248, %224 : vector<8x128xf32>
    %260 = arith.mulf %240, %250 : vector<8x128xf32>
    %261 = arith.addf %259, %260 : vector<8x128xf32>
    %262 = math.tanh %261 : vector<8x128xf32>
    %263 = arith.mulf %258, %262 : vector<8x128xf32>
    %c7_i32 = arith.constant 7 : i32
    %264 = arith.index_cast %c7_i32 : i32 to index
    %c0_102 = arith.constant 0 : index
    %c0_103 = arith.constant 0 : index
    %265 = vector.load %arg2[%264, %c0_102, %c0_103] : memref<8x8x512xf32, #tpu.memory_space<vmem>>, vector<1x8x512xf32>
    %266 = vector.shape_cast %265 : vector<1x8x512xf32> to vector<8x512xf32>
    %c0_104 = arith.constant 0 : index
    %c0_105 = arith.constant 0 : index
    %267 = vector.load %arg3[%c0_104, %c0_105] : memref<128x512xf32, #tpu.memory_space<vmem>>, vector<128x512xf32>
    %cst_106 = arith.constant dense<0.000000e+00> : vector<8x512xf32>
    %268 = tpu.matmul %263, %267, %cst_106 {dimension_numbers = #tpu.dot_dimension_numbers<[1], [0], [0], [1], [0, 0, 1, 1], [], []>} : vector<8x128xf32>, vector<128x512xf32>, vector<8x512xf32> -> vector<8x512xf32>
    %269 = arith.addf %266, %268 : vector<8x512xf32>
    %270 = vector.extract_strided_slice %269 {offsets = [0, 0], sizes = [8, 128], strides = [1, 1]} : vector<8x512xf32> to vector<8x128xf32>
    %cst_107 = arith.constant 5.000000e-01 : f32
    %271 = vector.broadcast %cst_107 : f32 to vector<8x128xf32>
    %272 = arith.mulf %271, %270 : vector<8x128xf32>
    %273 = math.tanh %272 : vector<8x128xf32>
    %cst_108 = arith.constant 5.000000e-01 : f32
    %274 = vector.broadcast %cst_108 : f32 to vector<8x128xf32>
    %275 = arith.mulf %274, %273 : vector<8x128xf32>
    %cst_109 = arith.constant 5.000000e-01 : f32
    %276 = vector.broadcast %cst_109 : f32 to vector<8x128xf32>
    %277 = arith.addf %275, %276 : vector<8x128xf32>
    %278 = vector.extract_strided_slice %269 {offsets = [0, 128], sizes = [8, 128], strides = [1, 1]} : vector<8x512xf32> to vector<8x128xf32>
    %cst_110 = arith.constant 5.000000e-01 : f32
    %279 = vector.broadcast %cst_110 : f32 to vector<8x128xf32>
    %280 = arith.mulf %279, %278 : vector<8x128xf32>
    %281 = math.tanh %280 : vector<8x128xf32>
    %cst_111 = arith.constant 5.000000e-01 : f32
    %282 = vector.broadcast %cst_111 : f32 to vector<8x128xf32>
    %283 = arith.mulf %282, %281 : vector<8x128xf32>
    %cst_112 = arith.constant 5.000000e-01 : f32
    %284 = vector.broadcast %cst_112 : f32 to vector<8x128xf32>
    %285 = arith.addf %283, %284 : vector<8x128xf32>
    %286 = vector.extract_strided_slice %269 {offsets = [0, 256], sizes = [8, 128], strides = [1, 1]} : vector<8x512xf32> to vector<8x128xf32>
    %287 = math.tanh %286 : vector<8x128xf32>
    %288 = vector.extract_strided_slice %269 {offsets = [0, 384], sizes = [8, 128], strides = [1, 1]} : vector<8x512xf32> to vector<8x128xf32>
    %cst_113 = arith.constant 5.000000e-01 : f32
    %289 = vector.broadcast %cst_113 : f32 to vector<8x128xf32>
    %290 = arith.mulf %289, %288 : vector<8x128xf32>
    %291 = math.tanh %290 : vector<8x128xf32>
    %cst_114 = arith.constant 5.000000e-01 : f32
    %292 = vector.broadcast %cst_114 : f32 to vector<8x128xf32>
    %293 = arith.mulf %292, %291 : vector<8x128xf32>
    %cst_115 = arith.constant 5.000000e-01 : f32
    %294 = vector.broadcast %cst_115 : f32 to vector<8x128xf32>
    %295 = arith.addf %293, %294 : vector<8x128xf32>
    %296 = arith.mulf %285, %261 : vector<8x128xf32>
    %297 = arith.mulf %277, %287 : vector<8x128xf32>
    %298 = arith.addf %296, %297 : vector<8x128xf32>
    %299 = math.tanh %298 : vector<8x128xf32>
    %300 = arith.mulf %295, %299 : vector<8x128xf32>
    %c8_i32 = arith.constant 8 : i32
    %c0_116 = arith.constant 0 : index
    %c0_117 = arith.constant 0 : index
    %301 = vector.load %arg6[%c0_116, %c0_117] : memref<8x128xf32, #tpu.memory_space<vmem>>, vector<8x128xf32>
    tpu.vector_store %arg6[%c0_116, %c0_117], %300 {strides = array<i32>} : memref<8x128xf32, #tpu.memory_space<vmem>>, vector<8x128xf32>,
    %c0_118 = arith.constant 0 : index
    %c0_119 = arith.constant 0 : index
    %302 = vector.load %arg7[%c0_118, %c0_119] : memref<8x128xf32, #tpu.memory_space<vmem>>, vector<8x128xf32>
    tpu.vector_store %arg7[%c0_118, %c0_119], %298 {strides = array<i32>} : memref<8x128xf32, #tpu.memory_space<vmem>>, vector<8x128xf32>,
    %c0_i32_120 = arith.constant 0 : i32
    %303 = arith.cmpi eq, %arg1, %c0_i32_120 : i32
    %304 = arith.extui %303 : i1 to i32
    %c0_i32_121 = arith.constant 0 : i32
    %305 = arith.cmpi ne, %304, %c0_i32_121 : i32
    scf.if %305 {
      %c0_122 = arith.constant 0 : index
      %c0_123 = arith.constant 0 : index
      %306 = vector.load %arg4[%c0_122, %c0_123] : memref<8x128xf32, #tpu.memory_space<vmem>>, vector<8x128xf32>
      tpu.vector_store %arg4[%c0_122, %c0_123], %300 {strides = array<i32>} : memref<8x128xf32, #tpu.memory_space<vmem>>, vector<8x128xf32>,
      %c0_124 = arith.constant 0 : index
      %c0_125 = arith.constant 0 : index
      %307 = vector.load %arg5[%c0_124, %c0_125] : memref<8x128xf32, #tpu.memory_space<vmem>>, vector<8x128xf32>
      tpu.vector_store %arg5[%c0_124, %c0_125], %298 {strides = array<i32>} : memref<8x128xf32, #tpu.memory_space<vmem>>, vector<8x128xf32>,
    } else {
    }
    return
  }
  func.func @transform_0(%arg0: i32, %arg1: i32) -> (i32, i32, i32) {
    %c0_i32 = arith.constant 0 : i32
    %c0_i32_0 = arith.constant 0 : i32
    return %arg1, %arg0, %c0_i32 : i32, i32, i32
  }
  func.func @transform_1(%arg0: i32, %arg1: i32) -> (i32, i32) {
    %c0_i32 = arith.constant 0 : i32
    %c0_i32_0 = arith.constant 0 : i32
    %c0_i32_1 = arith.constant 0 : i32
    return %c0_i32, %c0_i32_0 : i32, i32
  }
  func.func @transform_2(%arg0: i32, %arg1: i32) -> (i32, i32) {
    %c0_i32 = arith.constant 0 : i32
    %c0_i32_0 = arith.constant 0 : i32
    return %arg0, %c0_i32 : i32, i32
  }
  func.func @transform_3(%arg0: i32, %arg1: i32) -> (i32, i32) {
    %c0_i32 = arith.constant 0 : i32
    %c0_i32_0 = arith.constant 0 : i32
    return %arg0, %c0_i32 : i32, i32
  }
}

</mosaic_0001>

<llo_original>
// kernel: tpu_custom_call.1
$region0: #{tpu_custom_call.1}
  #allocation0 [shape = 'u32[]', space=smem, size = 0x4, offset = 0x4, fixed_abs, tag = 'smem constant byte address 0x4 - core index']
  #allocation1 [shape = 'u32[144,128]{1,0:T(1,128)}', space=vmem, size = 0x12000, scoped, tag = 'internal scratch']
  #allocation2 [shape = 'f32[8,128]{1,0:T(8,128)}', space=vmem, size = 0x1000, scoped, tag = 'scratch operand']
  #allocation3 [shape = 'f32[8,128]{1,0:T(8,128)}', space=vmem, size = 0x1000, scoped, tag = 'scratch operand']
  %s0 = inlined_call_operand.hbm [shape: f32[8,8,512], index: 0, kind: input, shape index: {}]
  %s1 = inlined_call_operand.hbm [shape: f32[128,512], index: 1, kind: input, shape index: {}]
  %s2 = inlined_call_operand.hbm [shape: f32[8,128], index: 2, kind: output, shape index: {0}]
  %s3 = inlined_call_operand.hbm [shape: f32[8,128], index: 3, kind: output, shape index: {1}]
  %4 = xla_tuple %s2, %s3
  %s5 = sld [smem:[#allocation0]]
  $region42: #{tpu_custom_call.1} parent=0
    _
  %s7 = ssub.s32 1, %s5
  %s8 = scalar_select 0, %s7, %s5
  $region1: #{tpu_custom_call.1} parent=0
    #allocation4 [shape = 'u8[131072]{0}', space=vmem, size = 0x20000, scoped, tag = 'input window, operand 0, single buffered']
    #allocation5 [shape = 's32[1]{0}', space=sflag, size = 0x4, scoped, tag = 'scoped memory for tpu_custom_call.1']
    #allocation6 [shape = 's32[1]{0}', space=sflag, size = 0x4, scoped, tag = 'scoped memory for tpu_custom_call.1']
    #allocation7 [shape = 'u8[262144]{0}', space=vmem, size = 0x40000, scoped, tag = 'input window, operand 1, single buffered']
    #allocation8 [shape = 's32[1]{0}', space=sflag, size = 0x4, scoped, tag = 'scoped memory for tpu_custom_call.1']
    #allocation9 [shape = 'u8[4096]{0}', space=vmem, size = 0x1000, scoped, tag = 'output window, operand 0, single buffered']
    #allocation10 [shape = 'u8[4096]{0}', space=vmem, size = 0x1000, scoped, tag = 'output window, operand 1, single buffered']
    #allocation11 [shape = 's32[1]{0}', space=sflag, size = 0x4, scoped, tag = 'scoped memory for tpu_custom_call.1']
    %9 = vsyncpa [#allocation5], 0
    %10 = vsyncpa [#allocation8], 0
    %11 = vsyncpa [#allocation6], 0
    %12 = vsyncpa [#allocation11], 0
    // Predicated region
    $region2: #{tpu_custom_call.1} parent=1 // pred_check
      _
    $region3: #{tpu_custom_call.1} parent=1 // pred_check_branch
      %14 = sbr.rel (0) target = $region5
    $region4: #{tpu_custom_call.1} parent=1 // pred_region
      %s16 = ssub.s32 4096, 4096
      %17 = vsyncadd [#allocation5], %s16
      %s18 = sshll.u32 [#allocation4], 4
      %s19 = int_to_ptr.vmem [resolvable:$true] %s18
      %24 = dma.hbm_to_vmem [thread:$0]  %s0, 4096, %s19, [#allocation5], 512, 512, 32
    $region5: #{tpu_custom_call.1} parent=1 // pred_fallthru
      _
    // Predicated region
    $region6: #{tpu_custom_call.1} parent=1 // pred_check
      _
    $region7: #{tpu_custom_call.1} parent=1 // pred_check_branch
      %26 = sbr.rel (0) target = $region9
    $region8: #{tpu_custom_call.1} parent=1 // pred_region
      %s28 = ssub.s32 8192, 8192
      %29 = vsyncadd [#allocation8], %s28
      %s30 = sshll.u32 [#allocation7], 4
      %s31 = int_to_ptr.vmem [resolvable:$true] %s30
      %36 = dma.hbm_to_vmem [thread:$0]  %s1, 8192, %s31, [#allocation8], 512, 512, 32
    $region9: #{tpu_custom_call.1} parent=1 // pred_fallthru
      _
    // Predicated region
    $region10: #{tpu_custom_call.1} parent=1 // pred_check
      _
    $region11: #{tpu_custom_call.1} parent=1 // pred_check_branch
      %38 = sbr.rel (0) target = $region13
    $region12: #{tpu_custom_call.1} parent=1 // pred_region
      %39 = dma.done [#allocation5], 4096
    $region13: #{tpu_custom_call.1} parent=1 // pred_fallthru
      _
    // Predicated region
    $region14: #{tpu_custom_call.1} parent=1 // pred_check
      _
    $region15: #{tpu_custom_call.1} parent=1 // pred_check_branch
      %41 = sbr.rel (0) target = $region17
    $region16: #{tpu_custom_call.1} parent=1 // pred_region
      %42 = dma.done [#allocation8], 8192
    $region17: #{tpu_custom_call.1} parent=1 // pred_fallthru
      _
    %p43 = scmp.eq.s32.totalorder 0, 0
    // Predicated region
    $region18: #{tpu_custom_call.1} parent=1 // pred_check
      %p44 = pneg %p43
    $region19: #{tpu_custom_call.1} parent=1 // pred_check_branch
      %46 = sbr.rel (%p44) target = $region21
    $region20: #{tpu_custom_call.1} parent=1 // pred_region
      %47 = vst [vmem:[#allocation2] sm:$0xff] 0.0
      %48 = vst [vmem:[#allocation3] sm:$0xff] 0.0
    $region21: #{tpu_custom_call.1} parent=1 // pred_fallthru
      _
    %v49 = vld [vmem:[#allocation2] sm:$0xff]
    %v50 = vld [vmem:[#allocation3] sm:$0xff]
    %v51 = vld [vmem:[#allocation4] sm:$0xff]
    %v52 = vld [vmem:[#allocation4 + $0x8] sm:$0xff]
    %v53 = vld [vmem:[#allocation4 + $0x10] sm:$0xff]
    %v54 = vld [vmem:[#allocation4 + $0x18] sm:$0xff]
    %v55 = vld [vmem:[#allocation7] sm:$0xff]
    %v56 = vld [vmem:[#allocation7 + $0x8] sm:$0xff]
    %v57 = vld [vmem:[#allocation7 + $0x10] sm:$0xff]
    %v58 = vld [vmem:[#allocation7 + $0x18] sm:$0xff]
    %v59 = vld [vmem:[#allocation7 + $0x20] sm:$0xff]
    %v60 = vld [vmem:[#allocation7 + $0x28] sm:$0xff]
    %v61 = vld [vmem:[#allocation7 + $0x30] sm:$0xff]
    %v62 = vld [vmem:[#allocation7 + $0x38] sm:$0xff]
    %v63 = vld [vmem:[#allocation7 + $0x40] sm:$0xff]
    %v64 = vld [vmem:[#allocation7 + $0x48] sm:$0xff]
    %v65 = vld [vmem:[#allocation7 + $0x50] sm:$0xff]
    %v66 = vld [vmem:[#allocation7 + $0x58] sm:$0xff]
    %v67 = vld [vmem:[#allocation7 + $0x60] sm:$0xff]
    %v68 = vld [vmem:[#allocation7 + $0x68] sm:$0xff]
    %v69 = vld [vmem:[#allocation7 + $0x70] sm:$0xff]
    %v70 = vld [vmem:[#allocation7 + $0x78] sm:$0xff]
    %v71 = vld [vmem:[#allocation7 + $0x80] sm:$0xff]
    %v72 = vld [vmem:[#allocation7 + $0x88] sm:$0xff]
    %v73 = vld [vmem:[#allocation7 + $0x90] sm:$0xff]
    %v74 = vld [vmem:[#allocation7 + $0x98] sm:$0xff]
    %v75 = vld [vmem:[#allocation7 + $0xa0] sm:$0xff]
    %v76 = vld [vmem:[#allocation7 + $0xa8] sm:$0xff]
    %v77 = vld [vmem:[#allocation7 + $0xb0] sm:$0xff]
    %v78 = vld [vmem:[#allocation7 + $0xb8] sm:$0xff]
    %v79 = vld [vmem:[#allocation7 + $0xc0] sm:$0xff]
    %v80 = vld [vmem:[#allocation7 + $0xc8] sm:$0xff]
    %v81 = vld [vmem:[#allocation7 + $0xd0] sm:$0xff]
    %v82 = vld [vmem:[#allocation7 + $0xd8] sm:$0xff]
    %v83 = vld [vmem:[#allocation7 + $0xe0] sm:$0xff]
    %v84 = vld [vmem:[#allocation7 + $0xe8] sm:$0xff]
    %v85 = vld [vmem:[#allocation7 + $0xf0] sm:$0xff]
    %v86 = vld [vmem:[#allocation7 + $0xf8] sm:$0xff]
    %v87 = vld [vmem:[#allocation7 + $0x100] sm:$0xff]
    %v88 = vld [vmem:[#allocation7 + $0x108] sm:$0xff]
    %v89 = vld [vmem:[#allocation7 + $0x110] sm:$0xff]
    %v90 = vld [vmem:[#allocation7 + $0x118] sm:$0xff]
    %v91 = vld [vmem:[#allocation7 + $0x120] sm:$0xff]
    %v92 = vld [vmem:[#allocation7 + $0x128] sm:$0xff]
    %v93 = vld [vmem:[#allocation7 + $0x130] sm:$0xff]
    %v94 = vld [vmem:[#allocation7 + $0x138] sm:$0xff]
    %v95 = vld [vmem:[#allocation7 + $0x140] sm:$0xff]
    %v96 = vld [vmem:[#allocation7 + $0x148] sm:$0xff]
    %v97 = vld [vmem:[#allocation7 + $0x150] sm:$0xff]
    %v98 = vld [vmem:[#allocation7 + $0x158] sm:$0xff]
    %v99 = vld [vmem:[#allocation7 + $0x160] sm:$0xff]
    %v100 = vld [vmem:[#allocation7 + $0x168] sm:$0xff]
    %v101 = vld [vmem:[#allocation7 + $0x170] sm:$0xff]
    %v102 = vld [vmem:[#allocation7 + $0x178] sm:$0xff]
    %v103 = vld [vmem:[#allocation7 + $0x180] sm:$0xff]
    %v104 = vld [vmem:[#allocation7 + $0x188] sm:$0xff]
    %v105 = vld [vmem:[#allocation7 + $0x190] sm:$0xff]
    %v106 = vld [vmem:[#allocation7 + $0x198] sm:$0xff]
    %v107 = vld [vmem:[#allocation7 + $0x1a0] sm:$0xff]
    %v108 = vld [vmem:[#allocation7 + $0x1a8] sm:$0xff]
    %v109 = vld [vmem:[#allocation7 + $0x1b0] sm:$0xff]
    %v110 = vld [vmem:[#allocation7 + $0x1b8] sm:$0xff]
    %v111 = vld [vmem:[#allocation7 + $0x1c0] sm:$0xff]
    %v112 = vld [vmem:[#allocation7 + $0x1c8] sm:$0xff]
    %v113 = vld [vmem:[#allocation7 + $0x1d0] sm:$0xff]
    %v114 = vld [vmem:[#allocation7 + $0x1d8] sm:$0xff]
    %v115 = vld [vmem:[#allocation7 + $0x1e0] sm:$0xff]
    %v116 = vld [vmem:[#allocation7 + $0x1e8] sm:$0xff]
    %v117 = vld [vmem:[#allocation7 + $0x1f0] sm:$0xff]
    %v118 = vld [vmem:[#allocation7 + $0x1f8] sm:$0xff]
    %119 = vmatprep.subr.mxu0 %v56
    %120 = vmatpush1.msra.mxu0 %v55
    %121 = vmatprep.subr.mxu0 %v60
    %122 = vmatpush1.msra.mxu0 %v59
    %123 = vmatprep.subr.mxu0 %v64
    %124 = vmatpush1.msra.mxu0 %v63
    %125 = vmatprep.subr.mxu0 %v68
    %126 = vmatpush1.msra.mxu0 %v67
    %127 = vmatprep.subr.mxu0 %v72
    %128 = vmatpush1.msra.mxu0 %v71
    %129 = vmatprep.subr.mxu0 %v76
    %130 = vmatpush1.msra.mxu0 %v75
    %131 = vmatprep.subr.mxu0 %v80
    %132 = vmatpush1.msra.mxu0 %v79
    %133 = vmatprep.subr.mxu0 %v84
    %134 = vmatpush1.msra.mxu0 %v83
    %135 = vmatprep.subr.mxu0 %v88
    %136 = vmatpush1.msra.mxu0 %v87
    %137 = vmatprep.subr.mxu0 %v92
    %138 = vmatpush1.msra.mxu0 %v91
    %139 = vmatprep.subr.mxu0 %v96
    %140 = vmatpush1.msra.mxu0 %v95
    %141 = vmatprep.subr.mxu0 %v100
    %142 = vmatpush1.msra.mxu0 %v99
    %143 = vmatprep.subr.mxu0 %v104
    %144 = vmatpush1.msra.mxu0 %v103
    %145 = vmatprep.subr.mxu0 %v108
    %146 = vmatpush1.msra.mxu0 %v107
    %147 = vmatprep.subr.mxu0 %v112
    %148 = vmatpush1.msra.mxu0 %v111
    %149 = vmatprep.subr.mxu0 %v116
    %150 = vmatpush1.msra.mxu0 %v115
    %151 = vmatprep.subr.mxu0 0.0
    %152 = vmatpush1.msra.mxu0 0.0
    %153 = vmatprep.subr.mxu0 0.0
    %154 = vmatpush1.msra.mxu0 0.0
    %155 = vmatprep.subr.mxu0 0.0
    %156 = vmatpush1.msra.mxu0 0.0
    %157 = vmatprep.subr.mxu0 0.0
    %158 = vmatpush1.msra.mxu0 0.0
    %159 = vmatprep.subr.mxu0 0.0
    %160 = vmatpush1.msra.mxu0 0.0
    %161 = vmatprep.subr.mxu0 0.0
    %162 = vmatpush1.msra.mxu0 0.0
    %163 = vmatprep.subr.mxu0 0.0
    %164 = vmatpush1.msra.mxu0 0.0
    %165 = vmatprep.subr.mxu0 0.0
    %166 = vmatpush1.msra.mxu0 0.0
    %167 = vmatprep.subr.mxu0 0.0
    %168 = vmatpush1.msra.mxu0 0.0
    %169 = vmatprep.subr.mxu0 0.0
    %170 = vmatpush1.msra.mxu0 0.0
    %171 = vmatprep.subr.mxu0 0.0
    %172 = vmatpush1.msra.mxu0 0.0
    %173 = vmatprep.subr.mxu0 0.0
    %174 = vmatpush1.msra.mxu0 0.0
    %175 = vmatprep.subr.mxu0 0.0
    %176 = vmatpush1.msra.mxu0 0.0
    %177 = vmatprep.subr.mxu0 0.0
    %178 = vmatpush1.msra.mxu0 0.0
    %179 = vmatprep.subr.mxu0 0.0
    %180 = vmatpush1.msra.mxu0 0.0
    %181 = vmatprep.subr.mxu0 0.0
    %182 = vmatpush1.msra.mxu0 0.0
    %183 = vmatprep.mubr.f32.mxu0 0.0
    %184 = vmatmul.mubr.f32.gmra.mrb[0].mxu0 %v49
    %v185 = vpop.f32.mrb[0].mxu0
    %v186 = vadd.f32 0.0, %v185
    %v187 = vpop.f32.mrb[0].mxu0
    %v188 = vadd.f32 0.0, %v187
    %189 = vdwg.mxu0
    %190 = vmatprep.subr.mxu0 %v58
    %191 = vmatpush1.msra.mxu0 %v57
    %192 = vmatprep.subr.mxu0 %v62
    %193 = vmatpush1.msra.mxu0 %v61
    %194 = vmatprep.subr.mxu0 %v66
    %195 = vmatpush1.msra.mxu0 %v65
    %196 = vmatprep.subr.mxu0 %v70
    %197 = vmatpush1.msra.mxu0 %v69
    %198 = vmatprep.subr.mxu0 %v74
    %199 = vmatpush1.msra.mxu0 %v73
    %200 = vmatprep.subr.mxu0 %v78
    %201 = vmatpush1.msra.mxu0 %v77
    %202 = vmatprep.subr.mxu0 %v82
    %203 = vmatpush1.msra.mxu0 %v81
    %204 = vmatprep.subr.mxu0 %v86
    %205 = vmatpush1.msra.mxu0 %v85
    %206 = vmatprep.subr.mxu0 %v90
    %207 = vmatpush1.msra.mxu0 %v89
    %208 = vmatprep.subr.mxu0 %v94
    %209 = vmatpush1.msra.mxu0 %v93
    %210 = vmatprep.subr.mxu0 %v98
    %211 = vmatpush1.msra.mxu0 %v97
    %212 = vmatprep.subr.mxu0 %v102
    %213 = vmatpush1.msra.mxu0 %v101
    %214 = vmatprep.subr.mxu0 %v106
    %215 = vmatpush1.msra.mxu0 %v105
    %216 = vmatprep.subr.mxu0 %v110
    %217 = vmatpush1.msra.mxu0 %v109
    %218 = vmatprep.subr.mxu0 %v114
    %219 = vmatpush1.msra.mxu0 %v113
    %220 = vmatprep.subr.mxu0 %v118
    %221 = vmatpush1.msra.mxu0 %v117
    %222 = vmatprep.subr.mxu0 0.0
    %223 = vmatpush1.msra.mxu0 0.0
    %224 = vmatprep.subr.mxu0 0.0
    %225 = vmatpush1.msra.mxu0 0.0
    %226 = vmatprep.subr.mxu0 0.0
    %227 = vmatpush1.msra.mxu0 0.0
    %228 = vmatprep.subr.mxu0 0.0
    %229 = vmatpush1.msra.mxu0 0.0
    %230 = vmatprep.subr.mxu0 0.0
    %231 = vmatpush1.msra.mxu0 0.0
    %232 = vmatprep.subr.mxu0 0.0
    %233 = vmatpush1.msra.mxu0 0.0
    %234 = vmatprep.subr.mxu0 0.0
    %235 = vmatpush1.msra.mxu0 0.0
    %236 = vmatprep.subr.mxu0 0.0
    %237 = vmatpush1.msra.mxu0 0.0
    %238 = vmatprep.subr.mxu0 0.0
    %239 = vmatpush1.msra.mxu0 0.0
    %240 = vmatprep.subr.mxu0 0.0
    %241 = vmatpush1.msra.mxu0 0.0
    %242 = vmatprep.subr.mxu0 0.0
    %243 = vmatpush1.msra.mxu0 0.0
    %244 = vmatprep.subr.mxu0 0.0
    %245 = vmatpush1.msra.mxu0 0.0
    %246 = vmatprep.subr.mxu0 0.0
    %247 = vmatpush1.msra.mxu0 0.0
    %248 = vmatprep.subr.mxu0 0.0
    %249 = vmatpush1.msra.mxu0 0.0
    %250 = vmatprep.subr.mxu0 0.0
    %251 = vmatpush1.msra.mxu0 0.0
    %252 = vmatprep.subr.mxu0 0.0
    %253 = vmatpush1.msra.mxu0 0.0
    %254 = vmatprep.mubr.f32.mxu0 0.0
    %255 = vmatmul.mubr.f32.gmra.mrb[0].mxu0 %v49
    %v256 = vpop.f32.mrb[0].mxu0
    %v257 = vadd.f32 0.0, %v256
    %v258 = vpop.f32.mrb[0].mxu0
    %v259 = vadd.f32 0.0, %v258
    %260 = vdwg.mxu0
    %v261 = vadd.f32 %v51, %v186
    %v262 = vadd.f32 %v52, %v188
    %v263 = vadd.f32 %v53, %v257
    %v264 = vadd.f32 %v54, %v259
    %v265 = vmul.f32 %v261, 0.5
    %v266 = vtanh.pop %v265
    %v267 = vmul.f32 %v266, 0.5
    %v268 = vadd.f32 %v267, 0.5
    %v269 = vmul.f32 %v262, 0.5
    %v270 = vtanh.pop %v269
    %v271 = vmul.f32 %v270, 0.5
    %v272 = vadd.f32 %v271, 0.5
    %v273 = vtanh.pop %v263
    %v274 = vmul.f32 %v264, 0.5
    %v275 = vtanh.pop %v274
    %v276 = vmul.f32 %v275, 0.5
    %v277 = vadd.f32 %v276, 0.5
    %v278 = vmul.f32 %v272, %v50
    %v279 = vmul.f32 %v268, %v273
    %v280 = vadd.f32 %v278, %v279
    %v281 = vtanh.pop %v280
    %v282 = vmul.f32 %v277, %v281
    %s283 = scalar_lea.vmem [#allocation4], 32
    %v284 = vld [vmem:[%s283] sm:$0xff]
    %v285 = vld [vmem:[%s283 + $0x8] sm:$0xff]
    %v286 = vld [vmem:[%s283 + $0x10] sm:$0xff]
    %v287 = vld [vmem:[%s283 + $0x18] sm:$0xff]
    %288 = vmatprep.subr.mxu0 %v56
    %289 = vmatpush1.msra.mxu0 %v55
    %290 = vmatprep.subr.mxu0 %v60
    %291 = vmatpush1.msra.mxu0 %v59
    %292 = vmatprep.subr.mxu0 %v64
    %293 = vmatpush1.msra.mxu0 %v63
    %294 = vmatprep.subr.mxu0 %v68
    %295 = vmatpush1.msra.mxu0 %v67
    %296 = vmatprep.subr.mxu0 %v72
    %297 = vmatpush1.msra.mxu0 %v71
    %298 = vmatprep.subr.mxu0 %v76
    %299 = vmatpush1.msra.mxu0 %v75
    %300 = vmatprep.subr.mxu0 %v80
    %301 = vmatpush1.msra.mxu0 %v79
    %302 = vmatprep.subr.mxu0 %v84
    %303 = vmatpush1.msra.mxu0 %v83
    %304 = vmatprep.subr.mxu0 %v88
    %305 = vmatpush1.msra.mxu0 %v87
    %306 = vmatprep.subr.mxu0 %v92
    %307 = vmatpush1.msra.mxu0 %v91
    %308 = vmatprep.subr.mxu0 %v96
    %309 = vmatpush1.msra.mxu0 %v95
    %310 = vmatprep.subr.mxu0 %v100
    %311 = vmatpush1.msra.mxu0 %v99
    %312 = vmatprep.subr.mxu0 %v104
    %313 = vmatpush1.msra.mxu0 %v103
    %314 = vmatprep.subr.mxu0 %v108
    %315 = vmatpush1.msra.mxu0 %v107
    %316 = vmatprep.subr.mxu0 %v112
    %317 = vmatpush1.msra.mxu0 %v111
    %318 = vmatprep.subr.mxu0 %v116
    %319 = vmatpush1.msra.mxu0 %v115
    %320 = vmatprep.subr.mxu0 0.0
    %321 = vmatpush1.msra.mxu0 0.0
    %322 = vmatprep.subr.mxu0 0.0
    %323 = vmatpush1.msra.mxu0 0.0
    %324 = vmatprep.subr.mxu0 0.0
    %325 = vmatpush1.msra.mxu0 0.0
    %326 = vmatprep.subr.mxu0 0.0
    %327 = vmatpush1.msra.mxu0 0.0
    %328 = vmatprep.subr.mxu0 0.0
    %329 = vmatpush1.msra.mxu0 0.0
    %330 = vmatprep.subr.mxu0 0.0
    %331 = vmatpush1.msra.mxu0 0.0
    %332 = vmatprep.subr.mxu0 0.0
    %333 = vmatpush1.msra.mxu0 0.0
    %334 = vmatprep.subr.mxu0 0.0
    %335 = vmatpush1.msra.mxu0 0.0
    %336 = vmatprep.subr.mxu0 0.0
    %337 = vmatpush1.msra.mxu0 0.0
    %338 = vmatprep.subr.mxu0 0.0
    %339 = vmatpush1.msra.mxu0 0.0
    %340 = vmatprep.subr.mxu0 0.0
    %341 = vmatpush1.msra.mxu0 0.0
    %342 = vmatprep.subr.mxu0 0.0
    %343 = vmatpush1.msra.mxu0 0.0
    %344 = vmatprep.subr.mxu0 0.0
    %345 = vmatpush1.msra.mxu0 0.0
    %346 = vmatprep.subr.mxu0 0.0
    %347 = vmatpush1.msra.mxu0 0.0
    %348 = vmatprep.subr.mxu0 0.0
    %349 = vmatpush1.msra.mxu0 0.0
    %350 = vmatprep.subr.mxu0 0.0
    %351 = vmatpush1.msra.mxu0 0.0
    %352 = vmatprep.mubr.f32.mxu0 0.0
    %353 = vmatmul.mubr.f32.gmra.mrb[0].mxu0 %v282
    %v354 = vpop.f32.mrb[0].mxu0
    %v355 = vadd.f32 0.0, %v354
    %v356 = vpop.f32.mrb[0].mxu0
    %v357 = vadd.f32 0.0, %v356
    %358 = vdwg.mxu0
    %359 = vmatprep.subr.mxu0 %v58
    %360 = vmatpush1.msra.mxu0 %v57
    %361 = vmatprep.subr.mxu0 %v62
    %362 = vmatpush1.msra.mxu0 %v61
    %363 = vmatprep.subr.mxu0 %v66
    %364 = vmatpush1.msra.mxu0 %v65
    %365 = vmatprep.subr.mxu0 %v70
    %366 = vmatpush1.msra.mxu0 %v69
    %367 = vmatprep.subr.mxu0 %v74
    %368 = vmatpush1.msra.mxu0 %v73
    %369 = vmatprep.subr.mxu0 %v78
    %370 = vmatpush1.msra.mxu0 %v77
    %371 = vmatprep.subr.mxu0 %v82
    %372 = vmatpush1.msra.mxu0 %v81
    %373 = vmatprep.subr.mxu0 %v86
    %374 = vmatpush1.msra.mxu0 %v85
    %375 = vmatprep.subr.mxu0 %v90
    %376 = vmatpush1.msra.mxu0 %v89
    %377 = vmatprep.subr.mxu0 %v94
    %378 = vmatpush1.msra.mxu0 %v93
    %379 = vmatprep.subr.mxu0 %v98
    %380 = vmatpush1.msra.mxu0 %v97
    %381 = vmatprep.subr.mxu0 %v102
    %382 = vmatpush1.msra.mxu0 %v101
    %383 = vmatprep.subr.mxu0 %v106
    %384 = vmatpush1.msra.mxu0 %v105
    %385 = vmatprep.subr.mxu0 %v110
    %386 = vmatpush1.msra.mxu0 %v109
    %387 = vmatprep.subr.mxu0 %v114
    %388 = vmatpush1.msra.mxu0 %v113
    %389 = vmatprep.subr.mxu0 %v118
    %390 = vmatpush1.msra.mxu0 %v117
    %391 = vmatprep.subr.mxu0 0.0
    %392 = vmatpush1.msra.mxu0 0.0
    %393 = vmatprep.subr.mxu0 0.0
    %394 = vmatpush1.msra.mxu0 0.0
    %395 = vmatprep.subr.mxu0 0.0
    %396 = vmatpush1.msra.mxu0 0.0
    %397 = vmatprep.subr.mxu0 0.0
    %398 = vmatpush1.msra.mxu0 0.0
    %399 = vmatprep.subr.mxu0 0.0
    %400 = vmatpush1.msra.mxu0 0.0
    %401 = vmatprep.subr.mxu0 0.0
    %402 = vmatpush1.msra.mxu0 0.0
    %403 = vmatprep.subr.mxu0 0.0
    %404 = vmatpush1.msra.mxu0 0.0
    %405 = vmatprep.subr.mxu0 0.0
    %406 = vmatpush1.msra.mxu0 0.0
    %407 = vmatprep.subr.mxu0 0.0
    %408 = vmatpush1.msra.mxu0 0.0
    %409 = vmatprep.subr.mxu0 0.0
    %410 = vmatpush1.msra.mxu0 0.0
    %411 = vmatprep.subr.mxu0 0.0
    %412 = vmatpush1.msra.mxu0 0.0
    %413 = vmatprep.subr.mxu0 0.0
    %414 = vmatpush1.msra.mxu0 0.0
    %415 = vmatprep.subr.mxu0 0.0
    %416 = vmatpush1.msra.mxu0 0.0
    %417 = vmatprep.subr.mxu0 0.0
    %418 = vmatpush1.msra.mxu0 0.0
    %419 = vmatprep.subr.mxu0 0.0
    %420 = vmatpush1.msra.mxu0 0.0
    %421 = vmatprep.subr.mxu0 0.0
    %422 = vmatpush1.msra.mxu0 0.0
    %423 = vmatprep.mubr.f32.mxu0 0.0
    %424 = vmatmul.mubr.f32.gmra.mrb[0].mxu0 %v282
    %v425 = vpop.f32.mrb[0].mxu0
    %v426 = vadd.f32 0.0, %v425
    %v427 = vpop.f32.mrb[0].mxu0
    %v428 = vadd.f32 0.0, %v427
    %429 = vdwg.mxu0
    %v430 = vadd.f32 %v284, %v355
    %v431 = vadd.f32 %v285, %v357
    %v432 = vadd.f32 %v286, %v426
    %v433 = vadd.f32 %v287, %v428
    %v434 = vmul.f32 %v430, 0.5
    %v435 = vtanh.pop %v434
    %v436 = vmul.f32 %v435, 0.5
    %v437 = vadd.f32 %v436, 0.5
    %v438 = vmul.f32 %v431, 0.5
    %v439 = vtanh.pop %v438
    %v440 = vmul.f32 %v439, 0.5
    %v441 = vadd.f32 %v440, 0.5
    %v442 = vtanh.pop %v432
    %v443 = vmul.f32 %v433, 0.5
    %v444 = vtanh.pop %v443
    %v445 = vmul.f32 %v444, 0.5
    %v446 = vadd.f32 %v445, 0.5
    %v447 = vmul.f32 %v441, %v280
    %v448 = vmul.f32 %v437, %v442
    %v449 = vadd.f32 %v447, %v448
    %v450 = vtanh.pop %v449
    %v451 = vmul.f32 %v446, %v450
    %s452 = scalar_lea.vmem [#allocation4], 64
    %v453 = vld [vmem:[%s452] sm:$0xff]
    %v454 = vld [vmem:[%s452 + $0x8] sm:$0xff]
    %v455 = vld [vmem:[%s452 + $0x10] sm:$0xff]
    %v456 = vld [vmem:[%s452 + $0x18] sm:$0xff]
    %457 = vmatprep.subr.mxu0 %v56
    %458 = vmatpush1.msra.mxu0 %v55
    %459 = vmatprep.subr.mxu0 %v60
    %460 = vmatpush1.msra.mxu0 %v59
    %461 = vmatprep.subr.mxu0 %v64
    %462 = vmatpush1.msra.mxu0 %v63
    %463 = vmatprep.subr.mxu0 %v68
    %464 = vmatpush1.msra.mxu0 %v67
    %465 = vmatprep.subr.mxu0 %v72
    %466 = vmatpush1.msra.mxu0 %v71
    %467 = vmatprep.subr.mxu0 %v76
    %468 = vmatpush1.msra.mxu0 %v75
    %469 = vmatprep.subr.mxu0 %v80
    %470 = vmatpush1.msra.mxu0 %v79
    %471 = vmatprep.subr.mxu0 %v84
    %472 = vmatpush1.msra.mxu0 %v83
    %473 = vmatprep.subr.mxu0 %v88
    %474 = vmatpush1.msra.mxu0 %v87
    %475 = vmatprep.subr.mxu0 %v92
    %476 = vmatpush1.msra.mxu0 %v91
    %477 = vmatprep.subr.mxu0 %v96
    %478 = vmatpush1.msra.mxu0 %v95
    %479 = vmatprep.subr.mxu0 %v100
    %480 = vmatpush1.msra.mxu0 %v99
    %481 = vmatprep.subr.mxu0 %v104
    %482 = vmatpush1.msra.mxu0 %v103
    %483 = vmatprep.subr.mxu0 %v108
    %484 = vmatpush1.msra.mxu0 %v107
    %485 = vmatprep.subr.mxu0 %v112
    %486 = vmatpush1.msra.mxu0 %v111
    %487 = vmatprep.subr.mxu0 %v116
    %488 = vmatpush1.msra.mxu0 %v115
    %489 = vmatprep.subr.mxu0 0.0
    %490 = vmatpush1.msra.mxu0 0.0
    %491 = vmatprep.subr.mxu0 0.0
    %492 = vmatpush1.msra.mxu0 0.0
    %493 = vmatprep.subr.mxu0 0.0
    %494 = vmatpush1.msra.mxu0 0.0
    %495 = vmatprep.subr.mxu0 0.0
    %496 = vmatpush1.msra.mxu0 0.0
    %497 = vmatprep.subr.mxu0 0.0
    %498 = vmatpush1.msra.mxu0 0.0
    %499 = vmatprep.subr.mxu0 0.0
    %500 = vmatpush1.msra.mxu0 0.0
    %501 = vmatprep.subr.mxu0 0.0
    %502 = vmatpush1.msra.mxu0 0.0
    %503 = vmatprep.subr.mxu0 0.0
    %504 = vmatpush1.msra.mxu0 0.0
    %505 = vmatprep.subr.mxu0 0.0
    %506 = vmatpush1.msra.mxu0 0.0
    %507 = vmatprep.subr.mxu0 0.0
    %508 = vmatpush1.msra.mxu0 0.0
    %509 = vmatprep.subr.mxu0 0.0
    %510 = vmatpush1.msra.mxu0 0.0
    %511 = vmatprep.subr.mxu0 0.0
    %512 = vmatpush1.msra.mxu0 0.0
    %513 = vmatprep.subr.mxu0 0.0
    %514 = vmatpush1.msra.mxu0 0.0
    %515 = vmatprep.subr.mxu0 0.0
    %516 = vmatpush1.msra.mxu0 0.0
    %517 = vmatprep.subr.mxu0 0.0
    %518 = vmatpush1.msra.mxu0 0.0
    %519 = vmatprep.subr.mxu0 0.0
    %520 = vmatpush1.msra.mxu0 0.0
    %521 = vmatprep.mubr.f32.mxu0 0.0
    %522 = vmatmul.mubr.f32.gmra.mrb[0].mxu0 %v451
    %v523 = vpop.f32.mrb[0].mxu0
    %v524 = vadd.f32 0.0, %v523
    %v525 = vpop.f32.mrb[0].mxu0
    %v526 = vadd.f32 0.0, %v525
    %527 = vdwg.mxu0
    %528 = vmatprep.subr.mxu0 %v58
    %529 = vmatpush1.msra.mxu0 %v57
    %530 = vmatprep.subr.mxu0 %v62
    %531 = vmatpush1.msra.mxu0 %v61
    %532 = vmatprep.subr.mxu0 %v66
    %533 = vmatpush1.msra.mxu0 %v65
    %534 = vmatprep.subr.mxu0 %v70
    %535 = vmatpush1.msra.mxu0 %v69
    %536 = vmatprep.subr.mxu0 %v74
    %537 = vmatpush1.msra.mxu0 %v73
    %538 = vmatprep.subr.mxu0 %v78
    %539 = vmatpush1.msra.mxu0 %v77
    %540 = vmatprep.subr.mxu0 %v82
    %541 = vmatpush1.msra.mxu0 %v81
    %542 = vmatprep.subr.mxu0 %v86
    %543 = vmatpush1.msra.mxu0 %v85
    %544 = vmatprep.subr.mxu0 %v90
    %545 = vmatpush1.msra.mxu0 %v89
    %546 = vmatprep.subr.mxu0 %v94
    %547 = vmatpush1.msra.mxu0 %v93
    %548 = vmatprep.subr.mxu0 %v98
    %549 = vmatpush1.msra.mxu0 %v97
    %550 = vmatprep.subr.mxu0 %v102
    %551 = vmatpush1.msra.mxu0 %v101
    %552 = vmatprep.subr.mxu0 %v106
    %553 = vmatpush1.msra.mxu0 %v105
    %554 = vmatprep.subr.mxu0 %v110
    %555 = vmatpush1.msra.mxu0 %v109
    %556 = vmatprep.subr.mxu0 %v114
    %557 = vmatpush1.msra.mxu0 %v113
    %558 = vmatprep.subr.mxu0 %v118
    %559 = vmatpush1.msra.mxu0 %v117
    %560 = vmatprep.subr.mxu0 0.0
    %561 = vmatpush1.msra.mxu0 0.0
    %562 = vmatprep.subr.mxu0 0.0
    %563 = vmatpush1.msra.mxu0 0.0
    %564 = vmatprep.subr.mxu0 0.0
    %565 = vmatpush1.msra.mxu0 0.0
    %566 = vmatprep.subr.mxu0 0.0
    %567 = vmatpush1.msra.mxu0 0.0
    %568 = vmatprep.subr.mxu0 0.0
    %569 = vmatpush1.msra.mxu0 0.0
    %570 = vmatprep.subr.mxu0 0.0
    %571 = vmatpush1.msra.mxu0 0.0
    %572 = vmatprep.subr.mxu0 0.0
    %573 = vmatpush1.msra.mxu0 0.0
    %574 = vmatprep.subr.mxu0 0.0
    %575 = vmatpush1.msra.mxu0 0.0
    %576 = vmatprep.subr.mxu0 0.0
    %577 = vmatpush1.msra.mxu0 0.0
    %578 = vmatprep.subr.mxu0 0.0
    %579 = vmatpush1.msra.mxu0 0.0
    %580 = vmatprep.subr.mxu0 0.0
    %581 = vmatpush1.msra.mxu0 0.0
    %582 = vmatprep.subr.mxu0 0.0
    %583 = vmatpush1.msra.mxu0 0.0
    %584 = vmatprep.subr.mxu0 0.0
    %585 = vmatpush1.msra.mxu0 0.0
    %586 = vmatprep.subr.mxu0 0.0
    %587 = vmatpush1.msra.mxu0 0.0
    %588 = vmatprep.subr.mxu0 0.0
    %589 = vmatpush1.msra.mxu0 0.0
    %590 = vmatprep.subr.mxu0 0.0
    %591 = vmatpush1.msra.mxu0 0.0
    %592 = vmatprep.mubr.f32.mxu0 0.0
    %593 = vmatmul.mubr.f32.gmra.mrb[0].mxu0 %v451
    %v594 = vpop.f32.mrb[0].mxu0
    %v595 = vadd.f32 0.0, %v594
    %v596 = vpop.f32.mrb[0].mxu0
    %v597 = vadd.f32 0.0, %v596
    %598 = vdwg.mxu0
    %v599 = vadd.f32 %v453, %v524
    %v600 = vadd.f32 %v454, %v526
    %v601 = vadd.f32 %v455, %v595
    %v602 = vadd.f32 %v456, %v597
    %v603 = vmul.f32 %v599, 0.5
    %v604 = vtanh.pop %v603
    %v605 = vmul.f32 %v604, 0.5
    %v606 = vadd.f32 %v605, 0.5
    %v607 = vmul.f32 %v600, 0.5
    %v608 = vtanh.pop %v607
    %v609 = vmul.f32 %v608, 0.5
    %v610 = vadd.f32 %v609, 0.5
    %v611 = vtanh.pop %v601
    %v612 = vmul.f32 %v602, 0.5
    %v613 = vtanh.pop %v612
    %v614 = vmul.f32 %v613, 0.5
    %v615 = vadd.f32 %v614, 0.5
    %v616 = vmul.f32 %v610, %v449
    %v617 = vmul.f32 %v606, %v611
    %v618 = vadd.f32 %v616, %v617
    %v619 = vtanh.pop %v618
    %v620 = vmul.f32 %v615, %v619
    %s621 = scalar_lea.vmem [#allocation4], 96
    %v622 = vld [vmem:[%s621] sm:$0xff]
    %v623 = vld [vmem:[%s621 + $0x8] sm:$0xff]
    %v624 = vld [vmem:[%s621 + $0x10] sm:$0xff]
    %v625 = vld [vmem:[%s621 + $0x18] sm:$0xff]
    %626 = vmatprep.subr.mxu0 %v56
    %627 = vmatpush1.msra.mxu0 %v55
    %628 = vmatprep.subr.mxu0 %v60
    %629 = vmatpush1.msra.mxu0 %v59
    %630 = vmatprep.subr.mxu0 %v64
    %631 = vmatpush1.msra.mxu0 %v63
    %632 = vmatprep.subr.mxu0 %v68
    %633 = vmatpush1.msra.mxu0 %v67
    %634 = vmatprep.subr.mxu0 %v72
    %635 = vmatpush1.msra.mxu0 %v71
    %636 = vmatprep.subr.mxu0 %v76
    %637 = vmatpush1.msra.mxu0 %v75
    %638 = vmatprep.subr.mxu0 %v80
    %639 = vmatpush1.msra.mxu0 %v79
    %640 = vmatprep.subr.mxu0 %v84
    %641 = vmatpush1.msra.mxu0 %v83
    %642 = vmatprep.subr.mxu0 %v88
    %643 = vmatpush1.msra.mxu0 %v87
    %644 = vmatprep.subr.mxu0 %v92
    %645 = vmatpush1.msra.mxu0 %v91
    %646 = vmatprep.subr.mxu0 %v96
    %647 = vmatpush1.msra.mxu0 %v95
    %648 = vmatprep.subr.mxu0 %v100
    %649 = vmatpush1.msra.mxu0 %v99
    %650 = vmatprep.subr.mxu0 %v104
    %651 = vmatpush1.msra.mxu0 %v103
    %652 = vmatprep.subr.mxu0 %v108
    %653 = vmatpush1.msra.mxu0 %v107
    %654 = vmatprep.subr.mxu0 %v112
    %655 = vmatpush1.msra.mxu0 %v111
    %656 = vmatprep.subr.mxu0 %v116
    %657 = vmatpush1.msra.mxu0 %v115
    %658 = vmatprep.subr.mxu0 0.0
    %659 = vmatpush1.msra.mxu0 0.0
    %660 = vmatprep.subr.mxu0 0.0
    %661 = vmatpush1.msra.mxu0 0.0
    %662 = vmatprep.subr.mxu0 0.0
    %663 = vmatpush1.msra.mxu0 0.0
    %664 = vmatprep.subr.mxu0 0.0
    %665 = vmatpush1.msra.mxu0 0.0
    %666 = vmatprep.subr.mxu0 0.0
    %667 = vmatpush1.msra.mxu0 0.0
    %668 = vmatprep.subr.mxu0 0.0
    %669 = vmatpush1.msra.mxu0 0.0
    %670 = vmatprep.subr.mxu0 0.0
    %671 = vmatpush1.msra.mxu0 0.0
    %672 = vmatprep.subr.mxu0 0.0
    %673 = vmatpush1.msra.mxu0 0.0
    %674 = vmatprep.subr.mxu0 0.0
    %675 = vmatpush1.msra.mxu0 0.0
    %676 = vmatprep.subr.mxu0 0.0
    %677 = vmatpush1.msra.mxu0 0.0
    %678 = vmatprep.subr.mxu0 0.0
    %679 = vmatpush1.msra.mxu0 0.0
    %680 = vmatprep.subr.mxu0 0.0
    %681 = vmatpush1.msra.mxu0 0.0
    %682 = vmatprep.subr.mxu0 0.0
    %683 = vmatpush1.msra.mxu0 0.0
    %684 = vmatprep.subr.mxu0 0.0
    %685 = vmatpush1.msra.mxu0 0.0
    %686 = vmatprep.subr.mxu0 0.0
    %687 = vmatpush1.msra.mxu0 0.0
    %688 = vmatprep.subr.mxu0 0.0
    %689 = vmatpush1.msra.mxu0 0.0
    %690 = vmatprep.mubr.f32.mxu0 0.0
    %691 = vmatmul.mubr.f32.gmra.mrb[0].mxu0 %v620
    %v692 = vpop.f32.mrb[0].mxu0
    %v693 = vadd.f32 0.0, %v692
    %v694 = vpop.f32.mrb[0].mxu0
    %v695 = vadd.f32 0.0, %v694
    %696 = vdwg.mxu0
    %697 = vmatprep.subr.mxu0 %v58
    %698 = vmatpush1.msra.mxu0 %v57
    %699 = vmatprep.subr.mxu0 %v62
    %700 = vmatpush1.msra.mxu0 %v61
    %701 = vmatprep.subr.mxu0 %v66
    %702 = vmatpush1.msra.mxu0 %v65
    %703 = vmatprep.subr.mxu0 %v70
    %704 = vmatpush1.msra.mxu0 %v69
    %705 = vmatprep.subr.mxu0 %v74
    %706 = vmatpush1.msra.mxu0 %v73
    %707 = vmatprep.subr.mxu0 %v78
    %708 = vmatpush1.msra.mxu0 %v77
    %709 = vmatprep.subr.mxu0 %v82
    %710 = vmatpush1.msra.mxu0 %v81
    %711 = vmatprep.subr.mxu0 %v86
    %712 = vmatpush1.msra.mxu0 %v85
    %713 = vmatprep.subr.mxu0 %v90
    %714 = vmatpush1.msra.mxu0 %v89
    %715 = vmatprep.subr.mxu0 %v94
    %716 = vmatpush1.msra.mxu0 %v93
    %717 = vmatprep.subr.mxu0 %v98
    %718 = vmatpush1.msra.mxu0 %v97
    %719 = vmatprep.subr.mxu0 %v102
    %720 = vmatpush1.msra.mxu0 %v101
    %721 = vmatprep.subr.mxu0 %v106
    %722 = vmatpush1.msra.mxu0 %v105
    %723 = vmatprep.subr.mxu0 %v110
    %724 = vmatpush1.msra.mxu0 %v109
    %725 = vmatprep.subr.mxu0 %v114
    %726 = vmatpush1.msra.mxu0 %v113
    %727 = vmatprep.subr.mxu0 %v118
    %728 = vmatpush1.msra.mxu0 %v117
    %729 = vmatprep.subr.mxu0 0.0
    %730 = vmatpush1.msra.mxu0 0.0
    %731 = vmatprep.subr.mxu0 0.0
    %732 = vmatpush1.msra.mxu0 0.0
    %733 = vmatprep.subr.mxu0 0.0
    %734 = vmatpush1.msra.mxu0 0.0
    %735 = vmatprep.subr.mxu0 0.0
    %736 = vmatpush1.msra.mxu0 0.0
    %737 = vmatprep.subr.mxu0 0.0
    %738 = vmatpush1.msra.mxu0 0.0
    %739 = vmatprep.subr.mxu0 0.0
    %740 = vmatpush1.msra.mxu0 0.0
    %741 = vmatprep.subr.mxu0 0.0
    %742 = vmatpush1.msra.mxu0 0.0
    %743 = vmatprep.subr.mxu0 0.0
    %744 = vmatpush1.msra.mxu0 0.0
    %745 = vmatprep.subr.mxu0 0.0
    %746 = vmatpush1.msra.mxu0 0.0
    %747 = vmatprep.subr.mxu0 0.0
    %748 = vmatpush1.msra.mxu0 0.0
    %749 = vmatprep.subr.mxu0 0.0
    %750 = vmatpush1.msra.mxu0 0.0
    %751 = vmatprep.subr.mxu0 0.0
    %752 = vmatpush1.msra.mxu0 0.0
    %753 = vmatprep.subr.mxu0 0.0
    %754 = vmatpush1.msra.mxu0 0.0
    %755 = vmatprep.subr.mxu0 0.0
    %756 = vmatpush1.msra.mxu0 0.0
    %757 = vmatprep.subr.mxu0 0.0
    %758 = vmatpush1.msra.mxu0 0.0
    %759 = vmatprep.subr.mxu0 0.0
    %760 = vmatpush1.msra.mxu0 0.0
    %761 = vmatprep.mubr.f32.mxu0 0.0
    %762 = vmatmul.mubr.f32.gmra.mrb[0].mxu0 %v620
    %v763 = vpop.f32.mrb[0].mxu0
    %v764 = vadd.f32 0.0, %v763
    %v765 = vpop.f32.mrb[0].mxu0
    %v766 = vadd.f32 0.0, %v765
    %767 = vdwg.mxu0
    %v768 = vadd.f32 %v622, %v693
    %v769 = vadd.f32 %v623, %v695
    %v770 = vadd.f32 %v624, %v764
    %v771 = vadd.f32 %v625, %v766
    %v772 = vmul.f32 %v768, 0.5
    %v773 = vtanh.pop %v772
    %v774 = vmul.f32 %v773, 0.5
    %v775 = vadd.f32 %v774, 0.5
    %v776 = vmul.f32 %v769, 0.5
    %v777 = vtanh.pop %v776
    %v778 = vmul.f32 %v777, 0.5
    %v779 = vadd.f32 %v778, 0.5
    %v780 = vtanh.pop %v770
    %v781 = vmul.f32 %v771, 0.5
    %v782 = vtanh.pop %v781
    %v783 = vmul.f32 %v782, 0.5
    %v784 = vadd.f32 %v783, 0.5
    %v785 = vmul.f32 %v779, %v618
    %v786 = vmul.f32 %v775, %v780
    %v787 = vadd.f32 %v785, %v786
    %v788 = vtanh.pop %v787
    %v789 = vmul.f32 %v784, %v788
    %s790 = scalar_lea.vmem [#allocation4], 128
    %v791 = vld [vmem:[%s790] sm:$0xff]
    %v792 = vld [vmem:[%s790 + $0x8] sm:$0xff]
    %v793 = vld [vmem:[%s790 + $0x10] sm:$0xff]
    %v794 = vld [vmem:[%s790 + $0x18] sm:$0xff]
    %795 = vmatprep.subr.mxu0 %v56
    %796 = vmatpush1.msra.mxu0 %v55
    %797 = vmatprep.subr.mxu0 %v60
    %798 = vmatpush1.msra.mxu0 %v59
    %799 = vmatprep.subr.mxu0 %v64
    %800 = vmatpush1.msra.mxu0 %v63
    %801 = vmatprep.subr.mxu0 %v68
    %802 = vmatpush1.msra.mxu0 %v67
    %803 = vmatprep.subr.mxu0 %v72
    %804 = vmatpush1.msra.mxu0 %v71
    %805 = vmatprep.subr.mxu0 %v76
    %806 = vmatpush1.msra.mxu0 %v75
    %807 = vmatprep.subr.mxu0 %v80
    %808 = vmatpush1.msra.mxu0 %v79
    %809 = vmatprep.subr.mxu0 %v84
    %810 = vmatpush1.msra.mxu0 %v83
    %811 = vmatprep.subr.mxu0 %v88
    %812 = vmatpush1.msra.mxu0 %v87
    %813 = vmatprep.subr.mxu0 %v92
    %814 = vmatpush1.msra.mxu0 %v91
    %815 = vmatprep.subr.mxu0 %v96
    %816 = vmatpush1.msra.mxu0 %v95
    %817 = vmatprep.subr.mxu0 %v100
    %818 = vmatpush1.msra.mxu0 %v99
    %819 = vmatprep.subr.mxu0 %v104
    %820 = vmatpush1.msra.mxu0 %v103
    %821 = vmatprep.subr.mxu0 %v108
    %822 = vmatpush1.msra.mxu0 %v107
    %823 = vmatprep.subr.mxu0 %v112
    %824 = vmatpush1.msra.mxu0 %v111
    %825 = vmatprep.subr.mxu0 %v116
    %826 = vmatpush1.msra.mxu0 %v115
    %827 = vmatprep.subr.mxu0 0.0
    %828 = vmatpush1.msra.mxu0 0.0
    %829 = vmatprep.subr.mxu0 0.0
    %830 = vmatpush1.msra.mxu0 0.0
    %831 = vmatprep.subr.mxu0 0.0
    %832 = vmatpush1.msra.mxu0 0.0
    %833 = vmatprep.subr.mxu0 0.0
    %834 = vmatpush1.msra.mxu0 0.0
    %835 = vmatprep.subr.mxu0 0.0
    %836 = vmatpush1.msra.mxu0 0.0
    %837 = vmatprep.subr.mxu0 0.0
    %838 = vmatpush1.msra.mxu0 0.0
    %839 = vmatprep.subr.mxu0 0.0
    %840 = vmatpush1.msra.mxu0 0.0
    %841 = vmatprep.subr.mxu0 0.0
    %842 = vmatpush1.msra.mxu0 0.0
    %843 = vmatprep.subr.mxu0 0.0
    %844 = vmatpush1.msra.mxu0 0.0
    %845 = vmatprep.subr.mxu0 0.0
    %846 = vmatpush1.msra.mxu0 0.0
    %847 = vmatprep.subr.mxu0 0.0
    %848 = vmatpush1.msra.mxu0 0.0
    %849 = vmatprep.subr.mxu0 0.0
    %850 = vmatpush1.msra.mxu0 0.0
    %851 = vmatprep.subr.mxu0 0.0
    %852 = vmatpush1.msra.mxu0 0.0
    %853 = vmatprep.subr.mxu0 0.0
    %854 = vmatpush1.msra.mxu0 0.0
    %855 = vmatprep.subr.mxu0 0.0
    %856 = vmatpush1.msra.mxu0 0.0
    %857 = vmatprep.subr.mxu0 0.0
    %858 = vmatpush1.msra.mxu0 0.0
    %859 = vmatprep.mubr.f32.mxu0 0.0
    %860 = vmatmul.mubr.f32.gmra.mrb[0].mxu0 %v789
    %v861 = vpop.f32.mrb[0].mxu0
    %v862 = vadd.f32 0.0, %v861
    %v863 = vpop.f32.mrb[0].mxu0
    %v864 = vadd.f32 0.0, %v863
    %865 = vdwg.mxu0
    %866 = vmatprep.subr.mxu0 %v58
    %867 = vmatpush1.msra.mxu0 %v57
    %868 = vmatprep.subr.mxu0 %v62
    %869 = vmatpush1.msra.mxu0 %v61
    %870 = vmatprep.subr.mxu0 %v66
    %871 = vmatpush1.msra.mxu0 %v65
    %872 = vmatprep.subr.mxu0 %v70
    %873 = vmatpush1.msra.mxu0 %v69
    %874 = vmatprep.subr.mxu0 %v74
    %875 = vmatpush1.msra.mxu0 %v73
    %876 = vmatprep.subr.mxu0 %v78
    %877 = vmatpush1.msra.mxu0 %v77
    %878 = vmatprep.subr.mxu0 %v82
    %879 = vmatpush1.msra.mxu0 %v81
    %880 = vmatprep.subr.mxu0 %v86
    %881 = vmatpush1.msra.mxu0 %v85
    %882 = vmatprep.subr.mxu0 %v90
    %883 = vmatpush1.msra.mxu0 %v89
    %884 = vmatprep.subr.mxu0 %v94
    %885 = vmatpush1.msra.mxu0 %v93
    %886 = vmatprep.subr.mxu0 %v98
    %887 = vmatpush1.msra.mxu0 %v97
    %888 = vmatprep.subr.mxu0 %v102
    %889 = vmatpush1.msra.mxu0 %v101
    %890 = vmatprep.subr.mxu0 %v106
    %891 = vmatpush1.msra.mxu0 %v105
    %892 = vmatprep.subr.mxu0 %v110
    %893 = vmatpush1.msra.mxu0 %v109
    %894 = vmatprep.subr.mxu0 %v114
    %895 = vmatpush1.msra.mxu0 %v113
    %896 = vmatprep.subr.mxu0 %v118
    %897 = vmatpush1.msra.mxu0 %v117
    %898 = vmatprep.subr.mxu0 0.0
    %899 = vmatpush1.msra.mxu0 0.0
    %900 = vmatprep.subr.mxu0 0.0
    %901 = vmatpush1.msra.mxu0 0.0
    %902 = vmatprep.subr.mxu0 0.0
    %903 = vmatpush1.msra.mxu0 0.0
    %904 = vmatprep.subr.mxu0 0.0
    %905 = vmatpush1.msra.mxu0 0.0
    %906 = vmatprep.subr.mxu0 0.0
    %907 = vmatpush1.msra.mxu0 0.0
    %908 = vmatprep.subr.mxu0 0.0
    %909 = vmatpush1.msra.mxu0 0.0
    %910 = vmatprep.subr.mxu0 0.0
    %911 = vmatpush1.msra.mxu0 0.0
    %912 = vmatprep.subr.mxu0 0.0
    %913 = vmatpush1.msra.mxu0 0.0
    %914 = vmatprep.subr.mxu0 0.0
    %915 = vmatpush1.msra.mxu0 0.0
    %916 = vmatprep.subr.mxu0 0.0
    %917 = vmatpush1.msra.mxu0 0.0
    %918 = vmatprep.subr.mxu0 0.0
    %919 = vmatpush1.msra.mxu0 0.0
    %920 = vmatprep.subr.mxu0 0.0
    %921 = vmatpush1.msra.mxu0 0.0
    %922 = vmatprep.subr.mxu0 0.0
    %923 = vmatpush1.msra.mxu0 0.0
    %924 = vmatprep.subr.mxu0 0.0
    %925 = vmatpush1.msra.mxu0 0.0
    %926 = vmatprep.subr.mxu0 0.0
    %927 = vmatpush1.msra.mxu0 0.0
    %928 = vmatprep.subr.mxu0 0.0
    %929 = vmatpush1.msra.mxu0 0.0
    %930 = vmatprep.mubr.f32.mxu0 0.0
    %931 = vmatmul.mubr.f32.gmra.mrb[0].mxu0 %v789
    %v932 = vpop.f32.mrb[0].mxu0
    %v933 = vadd.f32 0.0, %v932
    %v934 = vpop.f32.mrb[0].mxu0
    %v935 = vadd.f32 0.0, %v934
    %936 = vdwg.mxu0
    %v937 = vadd.f32 %v791, %v862
    %v938 = vadd.f32 %v792, %v864
    %v939 = vadd.f32 %v793, %v933
    %v940 = vadd.f32 %v794, %v935
    %v941 = vmul.f32 %v937, 0.5
    %v942 = vtanh.pop %v941
    %v943 = vmul.f32 %v942, 0.5
    %v944 = vadd.f32 %v943, 0.5
    %v945 = vmul.f32 %v938, 0.5
    %v946 = vtanh.pop %v945
    %v947 = vmul.f32 %v946, 0.5
    %v948 = vadd.f32 %v947, 0.5
    %v949 = vtanh.pop %v939
    %v950 = vmul.f32 %v940, 0.5
    %v951 = vtanh.pop %v950
    %v952 = vmul.f32 %v951, 0.5
    %v953 = vadd.f32 %v952, 0.5
    %v954 = vmul.f32 %v948, %v787
    %v955 = vmul.f32 %v944, %v949
    %v956 = vadd.f32 %v954, %v955
    %v957 = vtanh.pop %v956
    %v958 = vmul.f32 %v953, %v957
    %s959 = scalar_lea.vmem [#allocation4], 160
    %v960 = vld [vmem:[%s959] sm:$0xff]
    %v961 = vld [vmem:[%s959 + $0x8] sm:$0xff]
    %v962 = vld [vmem:[%s959 + $0x10] sm:$0xff]
    %v963 = vld [vmem:[%s959 + $0x18] sm:$0xff]
    %964 = vmatprep.subr.mxu0 %v56
    %965 = vmatpush1.msra.mxu0 %v55
    %966 = vmatprep.subr.mxu0 %v60
    %967 = vmatpush1.msra.mxu0 %v59
    %968 = vmatprep.subr.mxu0 %v64
    %969 = vmatpush1.msra.mxu0 %v63
    %970 = vmatprep.subr.mxu0 %v68
    %971 = vmatpush1.msra.mxu0 %v67
    %972 = vmatprep.subr.mxu0 %v72
    %973 = vmatpush1.msra.mxu0 %v71
    %974 = vmatprep.subr.mxu0 %v76
    %975 = vmatpush1.msra.mxu0 %v75
    %976 = vmatprep.subr.mxu0 %v80
    %977 = vmatpush1.msra.mxu0 %v79
    %978 = vmatprep.subr.mxu0 %v84
    %979 = vmatpush1.msra.mxu0 %v83
    %980 = vmatprep.subr.mxu0 %v88
    %981 = vmatpush1.msra.mxu0 %v87
    %982 = vmatprep.subr.mxu0 %v92
    %983 = vmatpush1.msra.mxu0 %v91
    %984 = vmatprep.subr.mxu0 %v96
    %985 = vmatpush1.msra.mxu0 %v95
    %986 = vmatprep.subr.mxu0 %v100
    %987 = vmatpush1.msra.mxu0 %v99
    %988 = vmatprep.subr.mxu0 %v104
    %989 = vmatpush1.msra.mxu0 %v103
    %990 = vmatprep.subr.mxu0 %v108
    %991 = vmatpush1.msra.mxu0 %v107
    %992 = vmatprep.subr.mxu0 %v112
    %993 = vmatpush1.msra.mxu0 %v111
    %994 = vmatprep.subr.mxu0 %v116
    %995 = vmatpush1.msra.mxu0 %v115
    %996 = vmatprep.subr.mxu0 0.0
    %997 = vmatpush1.msra.mxu0 0.0
    %998 = vmatprep.subr.mxu0 0.0
    %999 = vmatpush1.msra.mxu0 0.0
    %1000 = vmatprep.subr.mxu0 0.0
    %1001 = vmatpush1.msra.mxu0 0.0
    %1002 = vmatprep.subr.mxu0 0.0
    %1003 = vmatpush1.msra.mxu0 0.0
    %1004 = vmatprep.subr.mxu0 0.0
    %1005 = vmatpush1.msra.mxu0 0.0
    %1006 = vmatprep.subr.mxu0 0.0
    %1007 = vmatpush1.msra.mxu0 0.0
    %1008 = vmatprep.subr.mxu0 0.0
    %1009 = vmatpush1.msra.mxu0 0.0
    %1010 = vmatprep.subr.mxu0 0.0
    %1011 = vmatpush1.msra.mxu0 0.0
    %1012 = vmatprep.subr.mxu0 0.0
    %1013 = vmatpush1.msra.mxu0 0.0
    %1014 = vmatprep.subr.mxu0 0.0
    %1015 = vmatpush1.msra.mxu0 0.0
    %1016 = vmatprep.subr.mxu0 0.0
    %1017 = vmatpush1.msra.mxu0 0.0
    %1018 = vmatprep.subr.mxu0 0.0
    %1019 = vmatpush1.msra.mxu0 0.0
    %1020 = vmatprep.subr.mxu0 0.0
    %1021 = vmatpush1.msra.mxu0 0.0
    %1022 = vmatprep.subr.mxu0 0.0
    %1023 = vmatpush1.msra.mxu0 0.0
    %1024 = vmatprep.subr.mxu0 0.0
    %1025 = vmatpush1.msra.mxu0 0.0
    %1026 = vmatprep.subr.mxu0 0.0
    %1027 = vmatpush1.msra.mxu0 0.0
    %1028 = vmatprep.mubr.f32.mxu0 0.0
    %1029 = vmatmul.mubr.f32.gmra.mrb[0].mxu0 %v958
    %v1030 = vpop.f32.mrb[0].mxu0
    %v1031 = vadd.f32 0.0, %v1030
    %v1032 = vpop.f32.mrb[0].mxu0
    %v1033 = vadd.f32 0.0, %v1032
    %1034 = vdwg.mxu0
    %1035 = vmatprep.subr.mxu0 %v58
    %1036 = vmatpush1.msra.mxu0 %v57
    %1037 = vmatprep.subr.mxu0 %v62
    %1038 = vmatpush1.msra.mxu0 %v61
    %1039 = vmatprep.subr.mxu0 %v66
    %1040 = vmatpush1.msra.mxu0 %v65
    %1041 = vmatprep.subr.mxu0 %v70
    %1042 = vmatpush1.msra.mxu0 %v69
    %1043 = vmatprep.subr.mxu0 %v74
    %1044 = vmatpush1.msra.mxu0 %v73
    %1045 = vmatprep.subr.mxu0 %v78
    %1046 = vmatpush1.msra.mxu0 %v77
    %1047 = vmatprep.subr.mxu0 %v82
    %1048 = vmatpush1.msra.mxu0 %v81
    %1049 = vmatprep.subr.mxu0 %v86
    %1050 = vmatpush1.msra.mxu0 %v85
    %1051 = vmatprep.subr.mxu0 %v90
    %1052 = vmatpush1.msra.mxu0 %v89
    %1053 = vmatprep.subr.mxu0 %v94
    %1054 = vmatpush1.msra.mxu0 %v93
    %1055 = vmatprep.subr.mxu0 %v98
    %1056 = vmatpush1.msra.mxu0 %v97
    %1057 = vmatprep.subr.mxu0 %v102
    %1058 = vmatpush1.msra.mxu0 %v101
    %1059 = vmatprep.subr.mxu0 %v106
    %1060 = vmatpush1.msra.mxu0 %v105
    %1061 = vmatprep.subr.mxu0 %v110
    %1062 = vmatpush1.msra.mxu0 %v109
    %1063 = vmatprep.subr.mxu0 %v114
    %1064 = vmatpush1.msra.mxu0 %v113
    %1065 = vmatprep.subr.mxu0 %v118
    %1066 = vmatpush1.msra.mxu0 %v117
    %1067 = vmatprep.subr.mxu0 0.0
    %1068 = vmatpush1.msra.mxu0 0.0
    %1069 = vmatprep.subr.mxu0 0.0
    %1070 = vmatpush1.msra.mxu0 0.0
    %1071 = vmatprep.subr.mxu0 0.0
    %1072 = vmatpush1.msra.mxu0 0.0
    %1073 = vmatprep.subr.mxu0 0.0
    %1074 = vmatpush1.msra.mxu0 0.0
    %1075 = vmatprep.subr.mxu0 0.0
    %1076 = vmatpush1.msra.mxu0 0.0
    %1077 = vmatprep.subr.mxu0 0.0
    %1078 = vmatpush1.msra.mxu0 0.0
    %1079 = vmatprep.subr.mxu0 0.0
    %1080 = vmatpush1.msra.mxu0 0.0
    %1081 = vmatprep.subr.mxu0 0.0
    %1082 = vmatpush1.msra.mxu0 0.0
    %1083 = vmatprep.subr.mxu0 0.0
    %1084 = vmatpush1.msra.mxu0 0.0
    %1085 = vmatprep.subr.mxu0 0.0
    %1086 = vmatpush1.msra.mxu0 0.0
    %1087 = vmatprep.subr.mxu0 0.0
    %1088 = vmatpush1.msra.mxu0 0.0
    %1089 = vmatprep.subr.mxu0 0.0
    %1090 = vmatpush1.msra.mxu0 0.0
    %1091 = vmatprep.subr.mxu0 0.0
    %1092 = vmatpush1.msra.mxu0 0.0
    %1093 = vmatprep.subr.mxu0 0.0
    %1094 = vmatpush1.msra.mxu0 0.0
    %1095 = vmatprep.subr.mxu0 0.0
    %1096 = vmatpush1.msra.mxu0 0.0
    %1097 = vmatprep.subr.mxu0 0.0
    %1098 = vmatpush1.msra.mxu0 0.0
    %1099 = vmatprep.mubr.f32.mxu0 0.0
    %1100 = vmatmul.mubr.f32.gmra.mrb[0].mxu0 %v958
    %v1101 = vpop.f32.mrb[0].mxu0
    %v1102 = vadd.f32 0.0, %v1101
    %v1103 = vpop.f32.mrb[0].mxu0
    %v1104 = vadd.f32 0.0, %v1103
    %1105 = vdwg.mxu0
    %v1106 = vadd.f32 %v960, %v1031
    %v1107 = vadd.f32 %v961, %v1033
    %v1108 = vadd.f32 %v962, %v1102
    %v1109 = vadd.f32 %v963, %v1104
    %v1110 = vmul.f32 %v1106, 0.5
    %v1111 = vtanh.pop %v1110
    %v1112 = vmul.f32 %v1111, 0.5
    %v1113 = vadd.f32 %v1112, 0.5
    %v1114 = vmul.f32 %v1107, 0.5
    %v1115 = vtanh.pop %v1114
    %v1116 = vmul.f32 %v1115, 0.5
    %v1117 = vadd.f32 %v1116, 0.5
    %v1118 = vtanh.pop %v1108
    %v1119 = vmul.f32 %v1109, 0.5
    %v1120 = vtanh.pop %v1119
    %v1121 = vmul.f32 %v1120, 0.5
    %v1122 = vadd.f32 %v1121, 0.5
    %v1123 = vmul.f32 %v1117, %v956
    %v1124 = vmul.f32 %v1113, %v1118
    %v1125 = vadd.f32 %v1123, %v1124
    %v1126 = vtanh.pop %v1125
    %v1127 = vmul.f32 %v1122, %v1126
    %s1128 = scalar_lea.vmem [#allocation4], 192
    %v1129 = vld [vmem:[%s1128] sm:$0xff]
    %v1130 = vld [vmem:[%s1128 + $0x8] sm:$0xff]
    %v1131 = vld [vmem:[%s1128 + $0x10] sm:$0xff]
    %v1132 = vld [vmem:[%s1128 + $0x18] sm:$0xff]
    %1133 = vmatprep.subr.mxu0 %v56
    %1134 = vmatpush1.msra.mxu0 %v55
    %1135 = vmatprep.subr.mxu0 %v60
    %1136 = vmatpush1.msra.mxu0 %v59
    %1137 = vmatprep.subr.mxu0 %v64
    %1138 = vmatpush1.msra.mxu0 %v63
    %1139 = vmatprep.subr.mxu0 %v68
    %1140 = vmatpush1.msra.mxu0 %v67
    %1141 = vmatprep.subr.mxu0 %v72
    %1142 = vmatpush1.msra.mxu0 %v71
    %1143 = vmatprep.subr.mxu0 %v76
    %1144 = vmatpush1.msra.mxu0 %v75
    %1145 = vmatprep.subr.mxu0 %v80
    %1146 = vmatpush1.msra.mxu0 %v79
    %1147 = vmatprep.subr.mxu0 %v84
    %1148 = vmatpush1.msra.mxu0 %v83
    %1149 = vmatprep.subr.mxu0 %v88
    %1150 = vmatpush1.msra.mxu0 %v87
    %1151 = vmatprep.subr.mxu0 %v92
    %1152 = vmatpush1.msra.mxu0 %v91
    %1153 = vmatprep.subr.mxu0 %v96
    %1154 = vmatpush1.msra.mxu0 %v95
    %1155 = vmatprep.subr.mxu0 %v100
    %1156 = vmatpush1.msra.mxu0 %v99
    %1157 = vmatprep.subr.mxu0 %v104
    %1158 = vmatpush1.msra.mxu0 %v103
    %1159 = vmatprep.subr.mxu0 %v108
    %1160 = vmatpush1.msra.mxu0 %v107
    %1161 = vmatprep.subr.mxu0 %v112
    %1162 = vmatpush1.msra.mxu0 %v111
    %1163 = vmatprep.subr.mxu0 %v116
    %1164 = vmatpush1.msra.mxu0 %v115
    %1165 = vmatprep.subr.mxu0 0.0
    %1166 = vmatpush1.msra.mxu0 0.0
    %1167 = vmatprep.subr.mxu0 0.0
    %1168 = vmatpush1.msra.mxu0 0.0
    %1169 = vmatprep.subr.mxu0 0.0
    %1170 = vmatpush1.msra.mxu0 0.0
    %1171 = vmatprep.subr.mxu0 0.0
    %1172 = vmatpush1.msra.mxu0 0.0
    %1173 = vmatprep.subr.mxu0 0.0
    %1174 = vmatpush1.msra.mxu0 0.0
    %1175 = vmatprep.subr.mxu0 0.0
    %1176 = vmatpush1.msra.mxu0 0.0
    %1177 = vmatprep.subr.mxu0 0.0
    %1178 = vmatpush1.msra.mxu0 0.0
    %1179 = vmatprep.subr.mxu0 0.0
    %1180 = vmatpush1.msra.mxu0 0.0
    %1181 = vmatprep.subr.mxu0 0.0
    %1182 = vmatpush1.msra.mxu0 0.0
    %1183 = vmatprep.subr.mxu0 0.0
    %1184 = vmatpush1.msra.mxu0 0.0
    %1185 = vmatprep.subr.mxu0 0.0
    %1186 = vmatpush1.msra.mxu0 0.0
    %1187 = vmatprep.subr.mxu0 0.0
    %1188 = vmatpush1.msra.mxu0 0.0
    %1189 = vmatprep.subr.mxu0 0.0
    %1190 = vmatpush1.msra.mxu0 0.0
    %1191 = vmatprep.subr.mxu0 0.0
    %1192 = vmatpush1.msra.mxu0 0.0
    %1193 = vmatprep.subr.mxu0 0.0
    %1194 = vmatpush1.msra.mxu0 0.0
    %1195 = vmatprep.subr.mxu0 0.0
    %1196 = vmatpush1.msra.mxu0 0.0
    %1197 = vmatprep.mubr.f32.mxu0 0.0
    %1198 = vmatmul.mubr.f32.gmra.mrb[0].mxu0 %v1127
    %v1199 = vpop.f32.mrb[0].mxu0
    %v1200 = vadd.f32 0.0, %v1199
    %v1201 = vpop.f32.mrb[0].mxu0
    %v1202 = vadd.f32 0.0, %v1201
    %1203 = vdwg.mxu0
    %1204 = vmatprep.subr.mxu0 %v58
    %1205 = vmatpush1.msra.mxu0 %v57
    %1206 = vmatprep.subr.mxu0 %v62
    %1207 = vmatpush1.msra.mxu0 %v61
    %1208 = vmatprep.subr.mxu0 %v66
    %1209 = vmatpush1.msra.mxu0 %v65
    %1210 = vmatprep.subr.mxu0 %v70
    %1211 = vmatpush1.msra.mxu0 %v69
    %1212 = vmatprep.subr.mxu0 %v74
    %1213 = vmatpush1.msra.mxu0 %v73
    %1214 = vmatprep.subr.mxu0 %v78
    %1215 = vmatpush1.msra.mxu0 %v77
    %1216 = vmatprep.subr.mxu0 %v82
    %1217 = vmatpush1.msra.mxu0 %v81
    %1218 = vmatprep.subr.mxu0 %v86
    %1219 = vmatpush1.msra.mxu0 %v85
    %1220 = vmatprep.subr.mxu0 %v90
    %1221 = vmatpush1.msra.mxu0 %v89
    %1222 = vmatprep.subr.mxu0 %v94
    %1223 = vmatpush1.msra.mxu0 %v93
    %1224 = vmatprep.subr.mxu0 %v98
    %1225 = vmatpush1.msra.mxu0 %v97
    %1226 = vmatprep.subr.mxu0 %v102
    %1227 = vmatpush1.msra.mxu0 %v101
    %1228 = vmatprep.subr.mxu0 %v106
    %1229 = vmatpush1.msra.mxu0 %v105
    %1230 = vmatprep.subr.mxu0 %v110
    %1231 = vmatpush1.msra.mxu0 %v109
    %1232 = vmatprep.subr.mxu0 %v114
    %1233 = vmatpush1.msra.mxu0 %v113
    %1234 = vmatprep.subr.mxu0 %v118
    %1235 = vmatpush1.msra.mxu0 %v117
    %1236 = vmatprep.subr.mxu0 0.0
    %1237 = vmatpush1.msra.mxu0 0.0
    %1238 = vmatprep.subr.mxu0 0.0
    %1239 = vmatpush1.msra.mxu0 0.0
    %1240 = vmatprep.subr.mxu0 0.0
    %1241 = vmatpush1.msra.mxu0 0.0
    %1242 = vmatprep.subr.mxu0 0.0
    %1243 = vmatpush1.msra.mxu0 0.0
    %1244 = vmatprep.subr.mxu0 0.0
    %1245 = vmatpush1.msra.mxu0 0.0
    %1246 = vmatprep.subr.mxu0 0.0
    %1247 = vmatpush1.msra.mxu0 0.0
    %1248 = vmatprep.subr.mxu0 0.0
    %1249 = vmatpush1.msra.mxu0 0.0
    %1250 = vmatprep.subr.mxu0 0.0
    %1251 = vmatpush1.msra.mxu0 0.0
    %1252 = vmatprep.subr.mxu0 0.0
    %1253 = vmatpush1.msra.mxu0 0.0
    %1254 = vmatprep.subr.mxu0 0.0
    %1255 = vmatpush1.msra.mxu0 0.0
    %1256 = vmatprep.subr.mxu0 0.0
    %1257 = vmatpush1.msra.mxu0 0.0
    %1258 = vmatprep.subr.mxu0 0.0
    %1259 = vmatpush1.msra.mxu0 0.0
    %1260 = vmatprep.subr.mxu0 0.0
    %1261 = vmatpush1.msra.mxu0 0.0
    %1262 = vmatprep.subr.mxu0 0.0
    %1263 = vmatpush1.msra.mxu0 0.0
    %1264 = vmatprep.subr.mxu0 0.0
    %1265 = vmatpush1.msra.mxu0 0.0
    %1266 = vmatprep.subr.mxu0 0.0
    %1267 = vmatpush1.msra.mxu0 0.0
    %1268 = vmatprep.mubr.f32.mxu0 0.0
    %1269 = vmatmul.mubr.f32.gmra.mrb[0].mxu0 %v1127
    %v1270 = vpop.f32.mrb[0].mxu0
    %v1271 = vadd.f32 0.0, %v1270
    %v1272 = vpop.f32.mrb[0].mxu0
    %v1273 = vadd.f32 0.0, %v1272
    %1274 = vdwg.mxu0
    %v1275 = vadd.f32 %v1129, %v1200
    %v1276 = vadd.f32 %v1130, %v1202
    %v1277 = vadd.f32 %v1131, %v1271
    %v1278 = vadd.f32 %v1132, %v1273
    %v1279 = vmul.f32 %v1275, 0.5
    %v1280 = vtanh.pop %v1279
    %v1281 = vmul.f32 %v1280, 0.5
    %v1282 = vadd.f32 %v1281, 0.5
    %v1283 = vmul.f32 %v1276, 0.5
    %v1284 = vtanh.pop %v1283
    %v1285 = vmul.f32 %v1284, 0.5
    %v1286 = vadd.f32 %v1285, 0.5
    %v1287 = vtanh.pop %v1277
    %v1288 = vmul.f32 %v1278, 0.5
    %v1289 = vtanh.pop %v1288
    %v1290 = vmul.f32 %v1289, 0.5
    %v1291 = vadd.f32 %v1290, 0.5
    %v1292 = vmul.f32 %v1286, %v1125
    %v1293 = vmul.f32 %v1282, %v1287
    %v1294 = vadd.f32 %v1292, %v1293
    %v1295 = vtanh.pop %v1294
    %v1296 = vmul.f32 %v1291, %v1295
    %s1297 = scalar_lea.vmem [#allocation4], 224
    %v1298 = vld [vmem:[%s1297] sm:$0xff]
    %v1299 = vld [vmem:[%s1297 + $0x8] sm:$0xff]
    %v1300 = vld [vmem:[%s1297 + $0x10] sm:$0xff]
    %v1301 = vld [vmem:[%s1297 + $0x18] sm:$0xff]
    %1302 = vmatprep.subr.mxu0 %v56
    %1303 = vmatpush1.msra.mxu0 %v55
    %1304 = vmatprep.subr.mxu0 %v60
    %1305 = vmatpush1.msra.mxu0 %v59
    %1306 = vmatprep.subr.mxu0 %v64
    %1307 = vmatpush1.msra.mxu0 %v63
    %1308 = vmatprep.subr.mxu0 %v68
    %1309 = vmatpush1.msra.mxu0 %v67
    %1310 = vmatprep.subr.mxu0 %v72
    %1311 = vmatpush1.msra.mxu0 %v71
    %1312 = vmatprep.subr.mxu0 %v76
    %1313 = vmatpush1.msra.mxu0 %v75
    %1314 = vmatprep.subr.mxu0 %v80
    %1315 = vmatpush1.msra.mxu0 %v79
    %1316 = vmatprep.subr.mxu0 %v84
    %1317 = vmatpush1.msra.mxu0 %v83
    %1318 = vmatprep.subr.mxu0 %v88
    %1319 = vmatpush1.msra.mxu0 %v87
    %1320 = vmatprep.subr.mxu0 %v92
    %1321 = vmatpush1.msra.mxu0 %v91
    %1322 = vmatprep.subr.mxu0 %v96
    %1323 = vmatpush1.msra.mxu0 %v95
    %1324 = vmatprep.subr.mxu0 %v100
    %1325 = vmatpush1.msra.mxu0 %v99
    %1326 = vmatprep.subr.mxu0 %v104
    %1327 = vmatpush1.msra.mxu0 %v103
    %1328 = vmatprep.subr.mxu0 %v108
    %1329 = vmatpush1.msra.mxu0 %v107
    %1330 = vmatprep.subr.mxu0 %v112
    %1331 = vmatpush1.msra.mxu0 %v111
    %1332 = vmatprep.subr.mxu0 %v116
    %1333 = vmatpush1.msra.mxu0 %v115
    %1334 = vmatprep.subr.mxu0 0.0
    %1335 = vmatpush1.msra.mxu0 0.0
    %1336 = vmatprep.subr.mxu0 0.0
    %1337 = vmatpush1.msra.mxu0 0.0
    %1338 = vmatprep.subr.mxu0 0.0
    %1339 = vmatpush1.msra.mxu0 0.0
    %1340 = vmatprep.subr.mxu0 0.0
    %1341 = vmatpush1.msra.mxu0 0.0
    %1342 = vmatprep.subr.mxu0 0.0
    %1343 = vmatpush1.msra.mxu0 0.0
    %1344 = vmatprep.subr.mxu0 0.0
    %1345 = vmatpush1.msra.mxu0 0.0
    %1346 = vmatprep.subr.mxu0 0.0
    %1347 = vmatpush1.msra.mxu0 0.0
    %1348 = vmatprep.subr.mxu0 0.0
    %1349 = vmatpush1.msra.mxu0 0.0
    %1350 = vmatprep.subr.mxu0 0.0
    %1351 = vmatpush1.msra.mxu0 0.0
    %1352 = vmatprep.subr.mxu0 0.0
    %1353 = vmatpush1.msra.mxu0 0.0
    %1354 = vmatprep.subr.mxu0 0.0
    %1355 = vmatpush1.msra.mxu0 0.0
    %1356 = vmatprep.subr.mxu0 0.0
    %1357 = vmatpush1.msra.mxu0 0.0
    %1358 = vmatprep.subr.mxu0 0.0
    %1359 = vmatpush1.msra.mxu0 0.0
    %1360 = vmatprep.subr.mxu0 0.0
    %1361 = vmatpush1.msra.mxu0 0.0
    %1362 = vmatprep.subr.mxu0 0.0
    %1363 = vmatpush1.msra.mxu0 0.0
    %1364 = vmatprep.subr.mxu0 0.0
    %1365 = vmatpush1.msra.mxu0 0.0
    %1366 = vmatprep.mubr.f32.mxu0 0.0
    %1367 = vmatmul.mubr.f32.gmra.mrb[0].mxu0 %v1296
    %v1368 = vpop.f32.mrb[0].mxu0
    %v1369 = vadd.f32 0.0, %v1368
    %v1370 = vpop.f32.mrb[0].mxu0
    %v1371 = vadd.f32 0.0, %v1370
    %1372 = vdwg.mxu0
    %1373 = vmatprep.subr.mxu0 %v58
    %1374 = vmatpush1.msra.mxu0 %v57
    %1375 = vmatprep.subr.mxu0 %v62
    %1376 = vmatpush1.msra.mxu0 %v61
    %1377 = vmatprep.subr.mxu0 %v66
    %1378 = vmatpush1.msra.mxu0 %v65
    %1379 = vmatprep.subr.mxu0 %v70
    %1380 = vmatpush1.msra.mxu0 %v69
    %1381 = vmatprep.subr.mxu0 %v74
    %1382 = vmatpush1.msra.mxu0 %v73
    %1383 = vmatprep.subr.mxu0 %v78
    %1384 = vmatpush1.msra.mxu0 %v77
    %1385 = vmatprep.subr.mxu0 %v82
    %1386 = vmatpush1.msra.mxu0 %v81
    %1387 = vmatprep.subr.mxu0 %v86
    %1388 = vmatpush1.msra.mxu0 %v85
    %1389 = vmatprep.subr.mxu0 %v90
    %1390 = vmatpush1.msra.mxu0 %v89
    %1391 = vmatprep.subr.mxu0 %v94
    %1392 = vmatpush1.msra.mxu0 %v93
    %1393 = vmatprep.subr.mxu0 %v98
    %1394 = vmatpush1.msra.mxu0 %v97
    %1395 = vmatprep.subr.mxu0 %v102
    %1396 = vmatpush1.msra.mxu0 %v101
    %1397 = vmatprep.subr.mxu0 %v106
    %1398 = vmatpush1.msra.mxu0 %v105
    %1399 = vmatprep.subr.mxu0 %v110
    %1400 = vmatpush1.msra.mxu0 %v109
    %1401 = vmatprep.subr.mxu0 %v114
    %1402 = vmatpush1.msra.mxu0 %v113
    %1403 = vmatprep.subr.mxu0 %v118
    %1404 = vmatpush1.msra.mxu0 %v117
    %1405 = vmatprep.subr.mxu0 0.0
    %1406 = vmatpush1.msra.mxu0 0.0
    %1407 = vmatprep.subr.mxu0 0.0
    %1408 = vmatpush1.msra.mxu0 0.0
    %1409 = vmatprep.subr.mxu0 0.0
    %1410 = vmatpush1.msra.mxu0 0.0
    %1411 = vmatprep.subr.mxu0 0.0
    %1412 = vmatpush1.msra.mxu0 0.0
    %1413 = vmatprep.subr.mxu0 0.0
    %1414 = vmatpush1.msra.mxu0 0.0
    %1415 = vmatprep.subr.mxu0 0.0
    %1416 = vmatpush1.msra.mxu0 0.0
    %1417 = vmatprep.subr.mxu0 0.0
    %1418 = vmatpush1.msra.mxu0 0.0
    %1419 = vmatprep.subr.mxu0 0.0
    %1420 = vmatpush1.msra.mxu0 0.0
    %1421 = vmatprep.subr.mxu0 0.0
    %1422 = vmatpush1.msra.mxu0 0.0
    %1423 = vmatprep.subr.mxu0 0.0
    %1424 = vmatpush1.msra.mxu0 0.0
    %1425 = vmatprep.subr.mxu0 0.0
    %1426 = vmatpush1.msra.mxu0 0.0
    %1427 = vmatprep.subr.mxu0 0.0
    %1428 = vmatpush1.msra.mxu0 0.0
    %1429 = vmatprep.subr.mxu0 0.0
    %1430 = vmatpush1.msra.mxu0 0.0
    %1431 = vmatprep.subr.mxu0 0.0
    %1432 = vmatpush1.msra.mxu0 0.0
    %1433 = vmatprep.subr.mxu0 0.0
    %1434 = vmatpush1.msra.mxu0 0.0
    %1435 = vmatprep.subr.mxu0 0.0
    %1436 = vmatpush1.msra.mxu0 0.0
    %1437 = vmatprep.mubr.f32.mxu0 0.0
    %1438 = vmatmul.mubr.f32.gmra.mrb[0].mxu0 %v1296
    %v1439 = vpop.f32.mrb[0].mxu0
    %v1440 = vadd.f32 0.0, %v1439
    %v1441 = vpop.f32.mrb[0].mxu0
    %v1442 = vadd.f32 0.0, %v1441
    %1443 = vdwg.mxu0
    %v1444 = vadd.f32 %v1298, %v1369
    %v1445 = vadd.f32 %v1299, %v1371
    %v1446 = vadd.f32 %v1300, %v1440
    %v1447 = vadd.f32 %v1301, %v1442
    %v1448 = vmul.f32 %v1444, 0.5
    %v1449 = vtanh.pop %v1448
    %v1450 = vmul.f32 %v1449, 0.5
    %v1451 = vadd.f32 %v1450, 0.5
    %v1452 = vmul.f32 %v1445, 0.5
    %v1453 = vtanh.pop %v1452
    %v1454 = vmul.f32 %v1453, 0.5
    %v1455 = vadd.f32 %v1454, 0.5
    %v1456 = vtanh.pop %v1446
    %v1457 = vmul.f32 %v1447, 0.5
    %v1458 = vtanh.pop %v1457
    %v1459 = vmul.f32 %v1458, 0.5
    %v1460 = vadd.f32 %v1459, 0.5
    %v1461 = vmul.f32 %v1455, %v1294
    %v1462 = vmul.f32 %v1451, %v1456
    %v1463 = vadd.f32 %v1461, %v1462
    %v1464 = vtanh.pop %v1463
    %v1465 = vmul.f32 %v1460, %v1464
    %1466 = vst [vmem:[#allocation2] sm:$0xff] %v1465
    %1467 = vst [vmem:[#allocation3] sm:$0xff] %v1463
    // Predicated region
    $region22: #{tpu_custom_call.1} parent=1 // pred_check
      %p1468 = pneg %p43
    $region23: #{tpu_custom_call.1} parent=1 // pred_check_branch
      %1470 = sbr.rel (%p1468) target = $region25
    $region24: #{tpu_custom_call.1} parent=1 // pred_region
      %1471 = vst [vmem:[#allocation9] sm:$0xff] %v1465
      %1472 = vst [vmem:[#allocation10] sm:$0xff] %v1463
    $region25: #{tpu_custom_call.1} parent=1 // pred_fallthru
      _
    // Predicated region
    $region26: #{tpu_custom_call.1} parent=1 // pred_check
      _
    $region27: #{tpu_custom_call.1} parent=1 // pred_check_branch
      %1474 = sbr.rel (0) target = $region29
    $region28: #{tpu_custom_call.1} parent=1 // pred_region
      %s1476 = ssub.s32 128, 128
      %1477 = vsyncadd [#allocation6], %s1476
      %s1479 = sshll.u32 [#allocation9], 4
      %s1480 = int_to_ptr.vmem [resolvable:$true] %s1479
      %1482 = dma.vmem_to_hbm [thread:$0]  %s1480, 128, %s2, [#allocation6]
    $region29: #{tpu_custom_call.1} parent=1 // pred_fallthru
      _
    // Predicated region
    $region30: #{tpu_custom_call.1} parent=1 // pred_check
      _
    $region31: #{tpu_custom_call.1} parent=1 // pred_check_branch
      %1484 = sbr.rel (0) target = $region33
    $region32: #{tpu_custom_call.1} parent=1 // pred_region
      %s1486 = ssub.s32 128, 128
      %1487 = vsyncadd [#allocation11], %s1486
      %s1489 = sshll.u32 [#allocation10], 4
      %s1490 = int_to_ptr.vmem [resolvable:$true] %s1489
      %1492 = dma.vmem_to_hbm [thread:$0]  %s1490, 128, %s3, [#allocation11]
    $region33: #{tpu_custom_call.1} parent=1 // pred_fallthru
      _
    // Predicated region
    $region34: #{tpu_custom_call.1} parent=1 // pred_check
      _
    $region35: #{tpu_custom_call.1} parent=1 // pred_check_branch
      %1494 = sbr.rel (0) target = $region37
    $region36: #{tpu_custom_call.1} parent=1 // pred_region
      %1495 = dma.done [#allocation6], 128
    $region37: #{tpu_custom_call.1} parent=1 // pred_fallthru
      _
    // Predicated region
    $region38: #{tpu_custom_call.1} parent=1 // pred_check
      _
    $region39: #{tpu_custom_call.1} parent=1 // pred_check_branch
      %1497 = sbr.rel (0) target = $region41
    $region40: #{tpu_custom_call.1} parent=1 // pred_region
      %1498 = dma.done [#allocation11], 128
    $region41: #{tpu_custom_call.1} parent=1 // pred_fallthru
      _
    %1499 = vsyncpa [#allocation5], 1
    %1500 = vsyncpa [#allocation8], 1
    %1501 = vsyncpa [#allocation6], 1
    %1502 = vsyncpa [#allocation11], 1

// kernel: tpu_custom_call.1
$region0: #{tpu_custom_call.1}
  #allocation0 [shape = 'u32[]', space=smem, size = 0x4, offset = 0x4, fixed_abs, tag = 'smem constant byte address 0x4 - core index']
  #allocation1 [shape = 'u32[144,128]{1,0:T(1,128)}', space=vmem, size = 0x12000, scoped, tag = 'internal scratch']
  #allocation2 [shape = 'f32[8,128]{1,0:T(8,128)}', space=vmem, size = 0x1000, scoped, tag = 'scratch operand']
  #allocation3 [shape = 'f32[8,128]{1,0:T(8,128)}', space=vmem, size = 0x1000, scoped, tag = 'scratch operand']
  %s0 = inlined_call_operand.hbm [shape: f32[8,8,512], index: 0, kind: input, shape index: {}]
  %s1 = inlined_call_operand.hbm [shape: f32[128,512], index: 1, kind: input, shape index: {}]
  %s2 = inlined_call_operand.hbm [shape: f32[8,128], index: 2, kind: output, shape index: {0}]
  %s3 = inlined_call_operand.hbm [shape: f32[8,128], index: 3, kind: output, shape index: {1}]
  %4 = xla_tuple %s2, %s3
  %s5 = sld [smem:[#allocation0]]
  $region42: #{tpu_custom_call.1} parent=0
    _
  %s7 = ssub.s32 1, %s5
  %s8 = scalar_select 0, %s7, %s5
  $region1: #{tpu_custom_call.1} parent=0
    #allocation4 [shape = 'u8[131072]{0}', space=vmem, size = 0x20000, scoped, tag = 'input window, operand 0, single buffered']
    #allocation5 [shape = 's32[1]{0}', space=sflag, size = 0x4, scoped, tag = 'scoped memory for tpu_custom_call.1']
    #allocation6 [shape = 's32[1]{0}', space=sflag, size = 0x4, scoped, tag = 'scoped memory for tpu_custom_call.1']
    #allocation7 [shape = 'u8[262144]{0}', space=vmem, size = 0x40000, scoped, tag = 'input window, operand 1, single buffered']
    #allocation8 [shape = 's32[1]{0}', space=sflag, size = 0x4, scoped, tag = 'scoped memory for tpu_custom_call.1']
    #allocation9 [shape = 'u8[4096]{0}', space=vmem, size = 0x1000, scoped, tag = 'output window, operand 0, single buffered']
    #allocation10 [shape = 'u8[4096]{0}', space=vmem, size = 0x1000, scoped, tag = 'output window, operand 1, single buffered']
    #allocation11 [shape = 's32[1]{0}', space=sflag, size = 0x4, scoped, tag = 'scoped memory for tpu_custom_call.1']
    %9 = vsyncpa [#allocation5], 0
    %10 = vsyncpa [#allocation8], 0
    %11 = vsyncpa [#allocation6], 0
    %12 = vsyncpa [#allocation11], 0
    // Predicated region
    $region2: #{tpu_custom_call.1} parent=1 // pred_check
      _
    $region3: #{tpu_custom_call.1} parent=1 // pred_check_branch
      %14 = sbr.rel (0) target = $region5
    $region4: #{tpu_custom_call.1} parent=1 // pred_region
      %s16 = ssub.s32 4096, 4096
      %17 = vsyncadd [#allocation5], %s16
      %s18 = sshll.u32 [#allocation4], 4
      %s19 = int_to_ptr.vmem [resolvable:$true] %s18
      %24 = dma.hbm_to_vmem [thread:$0]  %s0, 4096, %s19, [#allocation5], 512, 512, 32
    $region5: #{tpu_custom_call.1} parent=1 // pred_fallthru
      _
    // Predicated region
    $region6: #{tpu_custom_call.1} parent=1 // pred_check
      _
    $region7: #{tpu_custom_call.1} parent=1 // pred_check_branch
      %26 = sbr.rel (0) target = $region9
    $region8: #{tpu_custom_call.1} parent=1 // pred_region
      %s28 = ssub.s32 8192, 8192
      %29 = vsyncadd [#allocation8], %s28
      %s30 = sshll.u32 [#allocation7], 4
      %s31 = int_to_ptr.vmem [resolvable:$true] %s30
      %36 = dma.hbm_to_vmem [thread:$0]  %s1, 8192, %s31, [#allocation8], 512, 512, 32
    $region9: #{tpu_custom_call.1} parent=1 // pred_fallthru
      _
    // Predicated region
    $region10: #{tpu_custom_call.1} parent=1 // pred_check
      _
    $region11: #{tpu_custom_call.1} parent=1 // pred_check_branch
      %38 = sbr.rel (0) target = $region13
    $region12: #{tpu_custom_call.1} parent=1 // pred_region
      %39 = dma.done [#allocation5], 4096
    $region13: #{tpu_custom_call.1} parent=1 // pred_fallthru
      _
    // Predicated region
    $region14: #{tpu_custom_call.1} parent=1 // pred_check
      _
    $region15: #{tpu_custom_call.1} parent=1 // pred_check_branch
      %41 = sbr.rel (0) target = $region17
    $region16: #{tpu_custom_call.1} parent=1 // pred_region
      %42 = dma.done [#allocation8], 8192
    $region17: #{tpu_custom_call.1} parent=1 // pred_fallthru
      _
    %p43 = scmp.eq.s32.totalorder 0, 0
    // Predicated region
    $region18: #{tpu_custom_call.1} parent=1 // pred_check
      %p44 = pneg %p43
    $region19: #{tpu_custom_call.1} parent=1 // pred_check_branch
      %46 = sbr.rel (%p44) target = $region21
    $region20: #{tpu_custom_call.1} parent=1 // pred_region
      %47 = vst [vmem:[#allocation2] sm:$0xff] 0.0
      %48 = vst [vmem:[#allocation3] sm:$0xff] 0.0
    $region21: #{tpu_custom_call.1} parent=1 // pred_fallthru
      _
    %v49 = vld [vmem:[#allocation2] sm:$0xff]
    %v50 = vld [vmem:[#allocation3] sm:$0xff]
    %v51 = vld [vmem:[#allocation4] sm:$0xff]
    %v52 = vld [vmem:[#allocation4 + $0x8] sm:$0xff]
    %v53 = vld [vmem:[#allocation4 + $0x10] sm:$0xff]
    %v54 = vld [vmem:[#allocation4 + $0x18] sm:$0xff]
    %v55 = vld [vmem:[#allocation7] sm:$0xff]
    %v56 = vld [vmem:[#allocation7 + $0x8] sm:$0xff]
    %v57 = vld [vmem:[#allocation7 + $0x10] sm:$0xff]
    %v58 = vld [vmem:[#allocation7 + $0x18] sm:$0xff]
    %v59 = vld [vmem:[#allocation7 + $0x20] sm:$0xff]
    %v60 = vld [vmem:[#allocation7 + $0x28] sm:$0xff]
    %v61 = vld [vmem:[#allocation7 + $0x30] sm:$0xff]
    %v62 = vld [vmem:[#allocation7 + $0x38] sm:$0xff]
    %v63 = vld [vmem:[#allocation7 + $0x40] sm:$0xff]
    %v64 = vld [vmem:[#allocation7 + $0x48] sm:$0xff]
    %v65 = vld [vmem:[#allocation7 + $0x50] sm:$0xff]
    %v66 = vld [vmem:[#allocation7 + $0x58] sm:$0xff]
    %v67 = vld [vmem:[#allocation7 + $0x60] sm:$0xff]
    %v68 = vld [vmem:[#allocation7 + $0x68] sm:$0xff]
    %v69 = vld [vmem:[#allocation7 + $0x70] sm:$0xff]
    %v70 = vld [vmem:[#allocation7 + $0x78] sm:$0xff]
    %v71 = vld [vmem:[#allocation7 + $0x80] sm:$0xff]
    %v72 = vld [vmem:[#allocation7 + $0x88] sm:$0xff]
    %v73 = vld [vmem:[#allocation7 + $0x90] sm:$0xff]
    %v74 = vld [vmem:[#allocation7 + $0x98] sm:$0xff]
    %v75 = vld [vmem:[#allocation7 + $0xa0] sm:$0xff]
    %v76 = vld [vmem:[#allocation7 + $0xa8] sm:$0xff]
    %v77 = vld [vmem:[#allocation7 + $0xb0] sm:$0xff]
    %v78 = vld [vmem:[#allocation7 + $0xb8] sm:$0xff]
    %v79 = vld [vmem:[#allocation7 + $0xc0] sm:$0xff]
    %v80 = vld [vmem:[#allocation7 + $0xc8] sm:$0xff]
    %v81 = vld [vmem:[#allocation7 + $0xd0] sm:$0xff]
    %v82 = vld [vmem:[#allocation7 + $0xd8] sm:$0xff]
    %v83 = vld [vmem:[#allocation7 + $0xe0] sm:$0xff]
    %v84 = vld [vmem:[#allocation7 + $0xe8] sm:$0xff]
    %v85 = vld [vmem:[#allocation7 + $0xf0] sm:$0xff]
    %v86 = vld [vmem:[#allocation7 + $0xf8] sm:$0xff]
    %v87 = vld [vmem:[#allocation7 + $0x100] sm:$0xff]
    %v88 = vld [vmem:[#allocation7 + $0x108] sm:$0xff]
    %v89 = vld [vmem:[#allocation7 + $0x110] sm:$0xff]
    %v90 = vld [vmem:[#allocation7 + $0x118] sm:$0xff]
    %v91 = vld [vmem:[#allocation7 + $0x120] sm:$0xff]
    %v92 = vld [vmem:[#allocation7 + $0x128] sm:$0xff]
    %v93 = vld [vmem:[#allocation7 + $0x130] sm:$0xff]
    %v94 = vld [vmem:[#allocation7 + $0x138] sm:$0xff]
    %v95 = vld [vmem:[#allocation7 + $0x140] sm:$0xff]
    %v96 = vld [vmem:[#allocation7 + $0x148] sm:$0xff]
    %v97 = vld [vmem:[#allocation7 + $0x150] sm:$0xff]
    %v98 = vld [vmem:[#allocation7 + $0x158] sm:$0xff]
    %v99 = vld [vmem:[#allocation7 + $0x160] sm:$0xff]
    %v100 = vld [vmem:[#allocation7 + $0x168] sm:$0xff]
    %v101 = vld [vmem:[#allocation7 + $0x170] sm:$0xff]
    %v102 = vld [vmem:[#allocation7 + $0x178] sm:$0xff]
    %v103 = vld [vmem:[#allocation7 + $0x180] sm:$0xff]
    %v104 = vld [vmem:[#allocation7 + $0x188] sm:$0xff]
    %v105 = vld [vmem:[#allocation7 + $0x190] sm:$0xff]
    %v106 = vld [vmem:[#allocation7 + $0x198] sm:$0xff]
    %v107 = vld [vmem:[#allocation7 + $0x1a0] sm:$0xff]
    %v108 = vld [vmem:[#allocation7 + $0x1a8] sm:$0xff]
    %v109 = vld [vmem:[#allocation7 + $0x1b0] sm:$0xff]
    %v110 = vld [vmem:[#allocation7 + $0x1b8] sm:$0xff]
    %v111 = vld [vmem:[#allocation7 + $0x1c0] sm:$0xff]
    %v112 = vld [vmem:[#allocation7 + $0x1c8] sm:$0xff]
    %v113 = vld [vmem:[#allocation7 + $0x1d0] sm:$0xff]
    %v114 = vld [vmem:[#allocation7 + $0x1d8] sm:$0xff]
    %v115 = vld [vmem:[#allocation7 + $0x1e0] sm:$0xff]
    %v116 = vld [vmem:[#allocation7 + $0x1e8] sm:$0xff]
    %v117 = vld [vmem:[#allocation7 + $0x1f0] sm:$0xff]
    %v118 = vld [vmem:[#allocation7 + $0x1f8] sm:$0xff]
    %119 = vmatprep.subr.mxu0 %v56
    %120 = vmatpush1.msra.mxu0 %v55
    %121 = vmatprep.subr.mxu0 %v60
    %122 = vmatpush1.msra.mxu0 %v59
    %123 = vmatprep.subr.mxu0 %v64
    %124 = vmatpush1.msra.mxu0 %v63
    %125 = vmatprep.subr.mxu0 %v68
    %126 = vmatpush1.msra.mxu0 %v67
    %127 = vmatprep.subr.mxu0 %v72
    %128 = vmatpush1.msra.mxu0 %v71
    %129 = vmatprep.subr.mxu0 %v76
    %130 = vmatpush1.msra.mxu0 %v75
    %131 = vmatprep.subr.mxu0 %v80
    %132 = vmatpush1.msra.mxu0 %v79
    %133 = vmatprep.subr.mxu0 %v84
    %134 = vmatpush1.msra.mxu0 %v83
    %135 = vmatprep.subr.mxu0 %v88
    %136 = vmatpush1.msra.mxu0 %v87
    %137 = vmatprep.subr.mxu0 %v92
    %138 = vmatpush1.msra.mxu0 %v91
    %139 = vmatprep.subr.mxu0 %v96
    %140 = vmatpush1.msra.mxu0 %v95
    %141 = vmatprep.subr.mxu0 %v100
    %142 = vmatpush1.msra.mxu0 %v99
    %143 = vmatprep.subr.mxu0 %v104
    %144 = vmatpush1.msra.mxu0 %v103
    %145 = vmatprep.subr.mxu0 %v108
    %146 = vmatpush1.msra.mxu0 %v107
    %147 = vmatprep.subr.mxu0 %v112
    %148 = vmatpush1.msra.mxu0 %v111
    %149 = vmatprep.subr.mxu0 %v116
    %150 = vmatpush1.msra.mxu0 %v115
    %151 = vmatprep.subr.mxu0 0.0
    %152 = vmatpush1.msra.mxu0 0.0
    %153 = vmatprep.subr.mxu0 0.0
    %154 = vmatpush1.msra.mxu0 0.0
    %155 = vmatprep.subr.mxu0 0.0
    %156 = vmatpush1.msra.mxu0 0.0
    %157 = vmatprep.subr.mxu0 0.0
    %158 = vmatpush1.msra.mxu0 0.0
    %159 = vmatprep.subr.mxu0 0.0
    %160 = vmatpush1.msra.mxu0 0.0
    %161 = vmatprep.subr.mxu0 0.0
    %162 = vmatpush1.msra.mxu0 0.0
    %163 = vmatprep.subr.mxu0 0.0
    %164 = vmatpush1.msra.mxu0 0.0
    %165 = vmatprep.subr.mxu0 0.0
    %166 = vmatpush1.msra.mxu0 0.0
    %167 = vmatprep.subr.mxu0 0.0
    %168 = vmatpush1.msra.mxu0 0.0
    %169 = vmatprep.subr.mxu0 0.0
    %170 = vmatpush1.msra.mxu0 0.0
    %171 = vmatprep.subr.mxu0 0.0
    %172 = vmatpush1.msra.mxu0 0.0
    %173 = vmatprep.subr.mxu0 0.0
    %174 = vmatpush1.msra.mxu0 0.0
    %175 = vmatprep.subr.mxu0 0.0
    %176 = vmatpush1.msra.mxu0 0.0
    %177 = vmatprep.subr.mxu0 0.0
    %178 = vmatpush1.msra.mxu0 0.0
    %179 = vmatprep.subr.mxu0 0.0
    %180 = vmatpush1.msra.mxu0 0.0
    %181 = vmatprep.subr.mxu0 0.0
    %182 = vmatpush1.msra.mxu0 0.0
    %183 = vmatprep.mubr.f32.mxu0 0.0
    %184 = vmatmul.mubr.f32.gmra.mrb[0].mxu0 %v49
    %v185 = vpop.f32.mrb[0].mxu0
    %v186 = vadd.f32 0.0, %v185
    %v187 = vpop.f32.mrb[0].mxu0
    %v188 = vadd.f32 0.0, %v187
    %189 = vdwg.mxu0
    %190 = vmatprep.subr.mxu0 %v58
    %191 = vmatpush1.msra.mxu0 %v57
    %192 = vmatprep.subr.mxu0 %v62
    %193 = vmatpush1.msra.mxu0 %v61
    %194 = vmatprep.subr.mxu0 %v66
    %195 = vmatpush1.msra.mxu0 %v65
    %196 = vmatprep.subr.mxu0 %v70
    %197 = vmatpush1.msra.mxu0 %v69
    %198 = vmatprep.subr.mxu0 %v74
    %199 = vmatpush1.msra.mxu0 %v73
    %200 = vmatprep.subr.mxu0 %v78
    %201 = vmatpush1.msra.mxu0 %v77
    %202 = vmatprep.subr.mxu0 %v82
    %203 = vmatpush1.msra.mxu0 %v81
    %204 = vmatprep.subr.mxu0 %v86
    %205 = vmatpush1.msra.mxu0 %v85
    %206 = vmatprep.subr.mxu0 %v90
    %207 = vmatpush1.msra.mxu0 %v89
    %208 = vmatprep.subr.mxu0 %v94
    %209 = vmatpush1.msra.mxu0 %v93
    %210 = vmatprep.subr.mxu0 %v98
    %211 = vmatpush1.msra.mxu0 %v97
    %212 = vmatprep.subr.mxu0 %v102
    %213 = vmatpush1.msra.mxu0 %v101
    %214 = vmatprep.subr.mxu0 %v106
    %215 = vmatpush1.msra.mxu0 %v105
    %216 = vmatprep.subr.mxu0 %v110
    %217 = vmatpush1.msra.mxu0 %v109
    %218 = vmatprep.subr.mxu0 %v114
    %219 = vmatpush1.msra.mxu0 %v113
    %220 = vmatprep.subr.mxu0 %v118
    %221 = vmatpush1.msra.mxu0 %v117
    %222 = vmatprep.subr.mxu0 0.0
    %223 = vmatpush1.msra.mxu0 0.0
    %224 = vmatprep.subr.mxu0 0.0
    %225 = vmatpush1.msra.mxu0 0.0
    %226 = vmatprep.subr.mxu0 0.0
    %227 = vmatpush1.msra.mxu0 0.0
    %228 = vmatprep.subr.mxu0 0.0
    %229 = vmatpush1.msra.mxu0 0.0
    %230 = vmatprep.subr.mxu0 0.0
    %231 = vmatpush1.msra.mxu0 0.0
    %232 = vmatprep.subr.mxu0 0.0
    %233 = vmatpush1.msra.mxu0 0.0
    %234 = vmatprep.subr.mxu0 0.0
    %235 = vmatpush1.msra.mxu0 0.0
    %236 = vmatprep.subr.mxu0 0.0
    %237 = vmatpush1.msra.mxu0 0.0
    %238 = vmatprep.subr.mxu0 0.0
    %239 = vmatpush1.msra.mxu0 0.0
    %240 = vmatprep.subr.mxu0 0.0
    %241 = vmatpush1.msra.mxu0 0.0
    %242 = vmatprep.subr.mxu0 0.0
    %243 = vmatpush1.msra.mxu0 0.0
    %244 = vmatprep.subr.mxu0 0.0
    %245 = vmatpush1.msra.mxu0 0.0
    %246 = vmatprep.subr.mxu0 0.0
    %247 = vmatpush1.msra.mxu0 0.0
    %248 = vmatprep.subr.mxu0 0.0
    %249 = vmatpush1.msra.mxu0 0.0
    %250 = vmatprep.subr.mxu0 0.0
    %251 = vmatpush1.msra.mxu0 0.0
    %252 = vmatprep.subr.mxu0 0.0
    %253 = vmatpush1.msra.mxu0 0.0
    %254 = vmatprep.mubr.f32.mxu0 0.0
    %255 = vmatmul.mubr.f32.gmra.mrb[0].mxu0 %v49
    %v256 = vpop.f32.mrb[0].mxu0
    %v257 = vadd.f32 0.0, %v256
    %v258 = vpop.f32.mrb[0].mxu0
    %v259 = vadd.f32 0.0, %v258
    %260 = vdwg.mxu0
    %v261 = vadd.f32 %v51, %v186
    %v262 = vadd.f32 %v52, %v188
    %v263 = vadd.f32 %v53, %v257
    %v264 = vadd.f32 %v54, %v259
    %v265 = vmul.f32 %v261, 0.5
    %v266 = vtanh.pop %v265
    %v267 = vmul.f32 %v266, 0.5
    %v268 = vadd.f32 %v267, 0.5
    %v269 = vmul.f32 %v262, 0.5
    %v270 = vtanh.pop %v269
    %v271 = vmul.f32 %v270, 0.5
    %v272 = vadd.f32 %v271, 0.5
    %v273 = vtanh.pop %v263
    %v274 = vmul.f32 %v264, 0.5
    %v275 = vtanh.pop %v274
    %v276 = vmul.f32 %v275, 0.5
    %v277 = vadd.f32 %v276, 0.5
    %v278 = vmul.f32 %v272, %v50
    %v279 = vmul.f32 %v268, %v273
    %v280 = vadd.f32 %v278, %v279
    %v281 = vtanh.pop %v280
    %v282 = vmul.f32 %v277, %v281
    %s283 = scalar_lea.vmem [#allocation4], 32
    %v284 = vld [vmem:[%s283] sm:$0xff]
    %v285 = vld [vmem:[%s283 + $0x8] sm:$0xff]
    %v286 = vld [vmem:[%s283 + $0x10] sm:$0xff]
    %v287 = vld [vmem:[%s283 + $0x18] sm:$0xff]
    %288 = vmatprep.subr.mxu0 %v56
    %289 = vmatpush1.msra.mxu0 %v55
    %290 = vmatprep.subr.mxu0 %v60
    %291 = vmatpush1.msra.mxu0 %v59
    %292 = vmatprep.subr.mxu0 %v64
    %293 = vmatpush1.msra.mxu0 %v63
    %294 = vmatprep.subr.mxu0 %v68
    %295 = vmatpush1.msra.mxu0 %v67
    %296 = vmatprep.subr.mxu0 %v72
    %297 = vmatpush1.msra.mxu0 %v71
    %298 = vmatprep.subr.mxu0 %v76
    %299 = vmatpush1.msra.mxu0 %v75
    %300 = vmatprep.subr.mxu0 %v80
    %301 = vmatpush1.msra.mxu0 %v79
    %302 = vmatprep.subr.mxu0 %v84
    %303 = vmatpush1.msra.mxu0 %v83
    %304 = vmatprep.subr.mxu0 %v88
    %305 = vmatpush1.msra.mxu0 %v87
    %306 = vmatprep.subr.mxu0 %v92
    %307 = vmatpush1.msra.mxu0 %v91
    %308 = vmatprep.subr.mxu0 %v96
    %309 = vmatpush1.msra.mxu0 %v95
    %310 = vmatprep.subr.mxu0 %v100
    %311 = vmatpush1.msra.mxu0 %v99
    %312 = vmatprep.subr.mxu0 %v104
    %313 = vmatpush1.msra.mxu0 %v103
    %314 = vmatprep.subr.mxu0 %v108
    %315 = vmatpush1.msra.mxu0 %v107
    %316 = vmatprep.subr.mxu0 %v112
    %317 = vmatpush1.msra.mxu0 %v111
    %318 = vmatprep.subr.mxu0 %v116
    %319 = vmatpush1.msra.mxu0 %v115
    %320 = vmatprep.subr.mxu0 0.0
    %321 = vmatpush1.msra.mxu0 0.0
    %322 = vmatprep.subr.mxu0 0.0
    %323 = vmatpush1.msra.mxu0 0.0
    %324 = vmatprep.subr.mxu0 0.0
    %325 = vmatpush1.msra.mxu0 0.0
    %326 = vmatprep.subr.mxu0 0.0
    %327 = vmatpush1.msra.mxu0 0.0
    %328 = vmatprep.subr.mxu0 0.0
    %329 = vmatpush1.msra.mxu0 0.0
    %330 = vmatprep.subr.mxu0 0.0
    %331 = vmatpush1.msra.mxu0 0.0
    %332 = vmatprep.subr.mxu0 0.0
    %333 = vmatpush1.msra.mxu0 0.0
    %334 = vmatprep.subr.mxu0 0.0
    %335 = vmatpush1.msra.mxu0 0.0
    %336 = vmatprep.subr.mxu0 0.0
    %337 = vmatpush1.msra.mxu0 0.0
    %338 = vmatprep.subr.mxu0 0.0
    %339 = vmatpush1.msra.mxu0 0.0
    %340 = vmatprep.subr.mxu0 0.0
    %341 = vmatpush1.msra.mxu0 0.0
    %342 = vmatprep.subr.mxu0 0.0
    %343 = vmatpush1.msra.mxu0 0.0
    %344 = vmatprep.subr.mxu0 0.0
    %345 = vmatpush1.msra.mxu0 0.0
    %346 = vmatprep.subr.mxu0 0.0
    %347 = vmatpush1.msra.mxu0 0.0
    %348 = vmatprep.subr.mxu0 0.0
    %349 = vmatpush1.msra.mxu0 0.0
    %350 = vmatprep.subr.mxu0 0.0
    %351 = vmatpush1.msra.mxu0 0.0
    %352 = vmatprep.mubr.f32.mxu0 0.0
    %353 = vmatmul.mubr.f32.gmra.mrb[0].mxu0 %v282
    %v354 = vpop.f32.mrb[0].mxu0
    %v355 = vadd.f32 0.0, %v354
    %v356 = vpop.f32.mrb[0].mxu0
    %v357 = vadd.f32 0.0, %v356
    %358 = vdwg.mxu0
    %359 = vmatprep.subr.mxu0 %v58
    %360 = vmatpush1.msra.mxu0 %v57
    %361 = vmatprep.subr.mxu0 %v62
    %362 = vmatpush1.msra.mxu0 %v61
    %363 = vmatprep.subr.mxu0 %v66
    %364 = vmatpush1.msra.mxu0 %v65
    %365 = vmatprep.subr.mxu0 %v70
    %366 = vmatpush1.msra.mxu0 %v69
    %367 = vmatprep.subr.mxu0 %v74
    %368 = vmatpush1.msra.mxu0 %v73
    %369 = vmatprep.subr.mxu0 %v78
    %370 = vmatpush1.msra.mxu0 %v77
    %371 = vmatprep.subr.mxu0 %v82
    %372 = vmatpush1.msra.mxu0 %v81
    %373 = vmatprep.subr.mxu0 %v86
    %374 = vmatpush1.msra.mxu0 %v85
    %375 = vmatprep.subr.mxu0 %v90
    %376 = vmatpush1.msra.mxu0 %v89
    %377 = vmatprep.subr.mxu0 %v94
    %378 = vmatpush1.msra.mxu0 %v93
    %379 = vmatprep.subr.mxu0 %v98
    %380 = vmatpush1.msra.mxu0 %v97
    %381 = vmatprep.subr.mxu0 %v102
    %382 = vmatpush1.msra.mxu0 %v101
    %383 = vmatprep.subr.mxu0 %v106
    %384 = vmatpush1.msra.mxu0 %v105
    %385 = vmatprep.subr.mxu0 %v110
    %386 = vmatpush1.msra.mxu0 %v109
    %387 = vmatprep.subr.mxu0 %v114
    %388 = vmatpush1.msra.mxu0 %v113
    %389 = vmatprep.subr.mxu0 %v118
    %390 = vmatpush1.msra.mxu0 %v117
    %391 = vmatprep.subr.mxu0 0.0
    %392 = vmatpush1.msra.mxu0 0.0
    %393 = vmatprep.subr.mxu0 0.0
    %394 = vmatpush1.msra.mxu0 0.0
    %395 = vmatprep.subr.mxu0 0.0
    %396 = vmatpush1.msra.mxu0 0.0
    %397 = vmatprep.subr.mxu0 0.0
    %398 = vmatpush1.msra.mxu0 0.0
    %399 = vmatprep.subr.mxu0 0.0
    %400 = vmatpush1.msra.mxu0 0.0
    %401 = vmatprep.subr.mxu0 0.0
    %402 = vmatpush1.msra.mxu0 0.0
    %403 = vmatprep.subr.mxu0 0.0
    %404 = vmatpush1.msra.mxu0 0.0
    %405 = vmatprep.subr.mxu0 0.0
    %406 = vmatpush1.msra.mxu0 0.0
    %407 = vmatprep.subr.mxu0 0.0
    %408 = vmatpush1.msra.mxu0 0.0
    %409 = vmatprep.subr.mxu0 0.0
    %410 = vmatpush1.msra.mxu0 0.0
    %411 = vmatprep.subr.mxu0 0.0
    %412 = vmatpush1.msra.mxu0 0.0
    %413 = vmatprep.subr.mxu0 0.0
    %414 = vmatpush1.msra.mxu0 0.0
    %415 = vmatprep.subr.mxu0 0.0
    %416 = vmatpush1.msra.mxu0 0.0
    %417 = vmatprep.subr.mxu0 0.0
    %418 = vmatpush1.msra.mxu0 0.0
    %419 = vmatprep.subr.mxu0 0.0
    %420 = vmatpush1.msra.mxu0 0.0
    %421 = vmatprep.subr.mxu0 0.0
    %422 = vmatpush1.msra.mxu0 0.0
    %423 = vmatprep.mubr.f32.mxu0 0.0
    %424 = vmatmul.mubr.f32.gmra.mrb[0].mxu0 %v282
    %v425 = vpop.f32.mrb[0].mxu0
    %v426 = vadd.f32 0.0, %v425
    %v427 = vpop.f32.mrb[0].mxu0
    %v428 = vadd.f32 0.0, %v427
    %429 = vdwg.mxu0
    %v430 = vadd.f32 %v284, %v355
    %v431 = vadd.f32 %v285, %v357
    %v432 = vadd.f32 %v286, %v426
    %v433 = vadd.f32 %v287, %v428
    %v434 = vmul.f32 %v430, 0.5
    %v435 = vtanh.pop %v434
    %v436 = vmul.f32 %v435, 0.5
    %v437 = vadd.f32 %v436, 0.5
    %v438 = vmul.f32 %v431, 0.5
    %v439 = vtanh.pop %v438
    %v440 = vmul.f32 %v439, 0.5
    %v441 = vadd.f32 %v440, 0.5
    %v442 = vtanh.pop %v432
    %v443 = vmul.f32 %v433, 0.5
    %v444 = vtanh.pop %v443
    %v445 = vmul.f32 %v444, 0.5
    %v446 = vadd.f32 %v445, 0.5
    %v447 = vmul.f32 %v441, %v280
    %v448 = vmul.f32 %v437, %v442
    %v449 = vadd.f32 %v447, %v448
    %v450 = vtanh.pop %v449
    %v451 = vmul.f32 %v446, %v450
    %s452 = scalar_lea.vmem [#allocation4], 64
    %v453 = vld [vmem:[%s452] sm:$0xff]
    %v454 = vld [vmem:[%s452 + $0x8] sm:$0xff]
    %v455 = vld [vmem:[%s452 + $0x10] sm:$0xff]
    %v456 = vld [vmem:[%s452 + $0x18] sm:$0xff]
    %457 = vmatprep.subr.mxu0 %v56
    %458 = vmatpush1.msra.mxu0 %v55
    %459 = vmatprep.subr.mxu0 %v60
    %460 = vmatpush1.msra.mxu0 %v59
    %461 = vmatprep.subr.mxu0 %v64
    %462 = vmatpush1.msra.mxu0 %v63
    %463 = vmatprep.subr.mxu0 %v68
    %464 = vmatpush1.msra.mxu0 %v67
    %465 = vmatprep.subr.mxu0 %v72
    %466 = vmatpush1.msra.mxu0 %v71
    %467 = vmatprep.subr.mxu0 %v76
    %468 = vmatpush1.msra.mxu0 %v75
    %469 = vmatprep.subr.mxu0 %v80
    %470 = vmatpush1.msra.mxu0 %v79
    %471 = vmatprep.subr.mxu0 %v84
    %472 = vmatpush1.msra.mxu0 %v83
    %473 = vmatprep.subr.mxu0 %v88
    %474 = vmatpush1.msra.mxu0 %v87
    %475 = vmatprep.subr.mxu0 %v92
    %476 = vmatpush1.msra.mxu0 %v91
    %477 = vmatprep.subr.mxu0 %v96
    %478 = vmatpush1.msra.mxu0 %v95
    %479 = vmatprep.subr.mxu0 %v100
    %480 = vmatpush1.msra.mxu0 %v99
    %481 = vmatprep.subr.mxu0 %v104
    %482 = vmatpush1.msra.mxu0 %v103
    %483 = vmatprep.subr.mxu0 %v108
    %484 = vmatpush1.msra.mxu0 %v107
    %485 = vmatprep.subr.mxu0 %v112
    %486 = vmatpush1.msra.mxu0 %v111
    %487 = vmatprep.subr.mxu0 %v116
    %488 = vmatpush1.msra.mxu0 %v115
    %489 = vmatprep.subr.mxu0 0.0
    %490 = vmatpush1.msra.mxu0 0.0
    %491 = vmatprep.subr.mxu0 0.0
    %492 = vmatpush1.msra.mxu0 0.0
    %493 = vmatprep.subr.mxu0 0.0
    %494 = vmatpush1.msra.mxu0 0.0
    %495 = vmatprep.subr.mxu0 0.0
    %496 = vmatpush1.msra.mxu0 0.0
    %497 = vmatprep.subr.mxu0 0.0
    %498 = vmatpush1.msra.mxu0 0.0
    %499 = vmatprep.subr.mxu0 0.0
    %500 = vmatpush1.msra.mxu0 0.0
    %501 = vmatprep.subr.mxu0 0.0
    %502 = vmatpush1.msra.mxu0 0.0
    %503 = vmatprep.subr.mxu0 0.0
    %504 = vmatpush1.msra.mxu0 0.0
    %505 = vmatprep.subr.mxu0 0.0
    %506 = vmatpush1.msra.mxu0 0.0
    %507 = vmatprep.subr.mxu0 0.0
    %508 = vmatpush1.msra.mxu0 0.0
    %509 = vmatprep.subr.mxu0 0.0
    %510 = vmatpush1.msra.mxu0 0.0
    %511 = vmatprep.subr.mxu0 0.0
    %512 = vmatpush1.msra.mxu0 0.0
    %513 = vmatprep.subr.mxu0 0.0
    %514 = vmatpush1.msra.mxu0 0.0
    %515 = vmatprep.subr.mxu0 0.0
    %516 = vmatpush1.msra.mxu0 0.0
    %517 = vmatprep.subr.mxu0 0.0
    %518 = vmatpush1.msra.mxu0 0.0
    %519 = vmatprep.subr.mxu0 0.0
    %520 = vmatpush1.msra.mxu0 0.0
    %521 = vmatprep.mubr.f32.mxu0 0.0
    %522 = vmatmul.mubr.f32.gmra.mrb[0].mxu0 %v451
    %v523 = vpop.f32.mrb[0].mxu0
    %v524 = vadd.f32 0.0, %v523
    %v525 = vpop.f32.mrb[0].mxu0
    %v526 = vadd.f32 0.0, %v525
    %527 = vdwg.mxu0
    %528 = vmatprep.subr.mxu0 %v58
    %529 = vmatpush1.msra.mxu0 %v57
    %530 = vmatprep.subr.mxu0 %v62
    %531 = vmatpush1.msra.mxu0 %v61
    %532 = vmatprep.subr.mxu0 %v66
    %533 = vmatpush1.msra.mxu0 %v65
    %534 = vmatprep.subr.mxu0 %v70
    %535 = vmatpush1.msra.mxu0 %v69
    %536 = vmatprep.subr.mxu0 %v74
    %537 = vmatpush1.msra.mxu0 %v73
    %538 = vmatprep.subr.mxu0 %v78
    %539 = vmatpush1.msra.mxu0 %v77
    %540 = vmatprep.subr.mxu0 %v82
    %541 = vmatpush1.msra.mxu0 %v81
    %542 = vmatprep.subr.mxu0 %v86
    %543 = vmatpush1.msra.mxu0 %v85
    %544 = vmatprep.subr.mxu0 %v90
    %545 = vmatpush1.msra.mxu0 %v89
    %546 = vmatprep.subr.mxu0 %v94
    %547 = vmatpush1.msra.mxu0 %v93
    %548 = vmatprep.subr.mxu0 %v98
    %549 = vmatpush1.msra.mxu0 %v97
    %550 = vmatprep.subr.mxu0 %v102
    %551 = vmatpush1.msra.mxu0 %v101
    %552 = vmatprep.subr.mxu0 %v106
    %553 = vmatpush1.msra.mxu0 %v105
    %554 = vmatprep.subr.mxu0 %v110
    %555 = vmatpush1.msra.mxu0 %v109
    %556 = vmatprep.subr.mxu0 %v114
    %557 = vmatpush1.msra.mxu0 %v113
    %558 = vmatprep.subr.mxu0 %v118
    %559 = vmatpush1.msra.mxu0 %v117
    %560 = vmatprep.subr.mxu0 0.0
    %561 = vmatpush1.msra.mxu0 0.0
    %562 = vmatprep.subr.mxu0 0.0
    %563 = vmatpush1.msra.mxu0 0.0
    %564 = vmatprep.subr.mxu0 0.0
    %565 = vmatpush1.msra.mxu0 0.0
    %566 = vmatprep.subr.mxu0 0.0
    %567 = vmatpush1.msra.mxu0 0.0
    %568 = vmatprep.subr.mxu0 0.0
    %569 = vmatpush1.msra.mxu0 0.0
    %570 = vmatprep.subr.mxu0 0.0
    %571 = vmatpush1.msra.mxu0 0.0
    %572 = vmatprep.subr.mxu0 0.0
    %573 = vmatpush1.msra.mxu0 0.0
    %574 = vmatprep.subr.mxu0 0.0
    %575 = vmatpush1.msra.mxu0 0.0
    %576 = vmatprep.subr.mxu0 0.0
    %577 = vmatpush1.msra.mxu0 0.0
    %578 = vmatprep.subr.mxu0 0.0
    %579 = vmatpush1.msra.mxu0 0.0
    %580 = vmatprep.subr.mxu0 0.0
    %581 = vmatpush1.msra.mxu0 0.0
    %582 = vmatprep.subr.mxu0 0.0
    %583 = vmatpush1.msra.mxu0 0.0
    %584 = vmatprep.subr.mxu0 0.0
    %585 = vmatpush1.msra.mxu0 0.0
    %586 = vmatprep.subr.mxu0 0.0
    %587 = vmatpush1.msra.mxu0 0.0
    %588 = vmatprep.subr.mxu0 0.0
    %589 = vmatpush1.msra.mxu0 0.0
    %590 = vmatprep.subr.mxu0 0.0
    %591 = vmatpush1.msra.mxu0 0.0
    %592 = vmatprep.mubr.f32.mxu0 0.0
    %593 = vmatmul.mubr.f32.gmra.mrb[0].mxu0 %v451
    %v594 = vpop.f32.mrb[0].mxu0
    %v595 = vadd.f32 0.0, %v594
    %v596 = vpop.f32.mrb[0].mxu0
    %v597 = vadd.f32 0.0, %v596
    %598 = vdwg.mxu0
    %v599 = vadd.f32 %v453, %v524
    %v600 = vadd.f32 %v454, %v526
    %v601 = vadd.f32 %v455, %v595
    %v602 = vadd.f32 %v456, %v597
    %v603 = vmul.f32 %v599, 0.5
    %v604 = vtanh.pop %v603
    %v605 = vmul.f32 %v604, 0.5
    %v606 = vadd.f32 %v605, 0.5
    %v607 = vmul.f32 %v600, 0.5
    %v608 = vtanh.pop %v607
    %v609 = vmul.f32 %v608, 0.5
    %v610 = vadd.f32 %v609, 0.5
    %v611 = vtanh.pop %v601
    %v612 = vmul.f32 %v602, 0.5
    %v613 = vtanh.pop %v612
    %v614 = vmul.f32 %v613, 0.5
    %v615 = vadd.f32 %v614, 0.5
    %v616 = vmul.f32 %v610, %v449
    %v617 = vmul.f32 %v606, %v611
    %v618 = vadd.f32 %v616, %v617
    %v619 = vtanh.pop %v618
    %v620 = vmul.f32 %v615, %v619
    %s621 = scalar_lea.vmem [#allocation4], 96
    %v622 = vld [vmem:[%s621] sm:$0xff]
    %v623 = vld [vmem:[%s621 + $0x8] sm:$0xff]
    %v624 = vld [vmem:[%s621 + $0x10] sm:$0xff]
    %v625 = vld [vmem:[%s621 + $0x18] sm:$0xff]
    %626 = vmatprep.subr.mxu0 %v56
    %627 = vmatpush1.msra.mxu0 %v55
    %628 = vmatprep.subr.mxu0 %v60
    %629 = vmatpush1.msra.mxu0 %v59
    %630 = vmatprep.subr.mxu0 %v64
    %631 = vmatpush1.msra.mxu0 %v63
    %632 = vmatprep.subr.mxu0 %v68
    %633 = vmatpush1.msra.mxu0 %v67
    %634 = vmatprep.subr.mxu0 %v72
    %635 = vmatpush1.msra.mxu0 %v71
    %636 = vmatprep.subr.mxu0 %v76
    %637 = vmatpush1.msra.mxu0 %v75
    %638 = vmatprep.subr.mxu0 %v80
    %639 = vmatpush1.msra.mxu0 %v79
    %640 = vmatprep.subr.mxu0 %v84
    %641 = vmatpush1.msra.mxu0 %v83
    %642 = vmatprep.subr.mxu0 %v88
    %643 = vmatpush1.msra.mxu0 %v87
    %644 = vmatprep.subr.mxu0 %v92
    %645 = vmatpush1.msra.mxu0 %v91
    %646 = vmatprep.subr.mxu0 %v96
    %647 = vmatpush1.msra.mxu0 %v95
    %648 = vmatprep.subr.mxu0 %v100
    %649 = vmatpush1.msra.mxu0 %v99
    %650 = vmatprep.subr.mxu0 %v104
    %651 = vmatpush1.msra.mxu0 %v103
    %652 = vmatprep.subr.mxu0 %v108
    %653 = vmatpush1.msra.mxu0 %v107
    %654 = vmatprep.subr.mxu0 %v112
    %655 = vmatpush1.msra.mxu0 %v111
    %656 = vmatprep.subr.mxu0 %v116
    %657 = vmatpush1.msra.mxu0 %v115
    %658 = vmatprep.subr.mxu0 0.0
    %659 = vmatpush1.msra.mxu0 0.0
    %660 = vmatprep.subr.mxu0 0.0
    %661 = vmatpush1.msra.mxu0 0.0
    %662 = vmatprep.subr.mxu0 0.0
    %663 = vmatpush1.msra.mxu0 0.0
    %664 = vmatprep.subr.mxu0 0.0
    %665 = vmatpush1.msra.mxu0 0.0
    %666 = vmatprep.subr.mxu0 0.0
    %667 = vmatpush1.msra.mxu0 0.0
    %668 = vmatprep.subr.mxu0 0.0
    %669 = vmatpush1.msra.mxu0 0.0
    %670 = vmatprep.subr.mxu0 0.0
    %671 = vmatpush1.msra.mxu0 0.0
    %672 = vmatprep.subr.mxu0 0.0
    %673 = vmatpush1.msra.mxu0 0.0
    %674 = vmatprep.subr.mxu0 0.0
    %675 = vmatpush1.msra.mxu0 0.0
    %676 = vmatprep.subr.mxu0 0.0
    %677 = vmatpush1.msra.mxu0 0.0
    %678 = vmatprep.subr.mxu0 0.0
    %679 = vmatpush1.msra.mxu0 0.0
    %680 = vmatprep.subr.mxu0 0.0
    %681 = vmatpush1.msra.mxu0 0.0
    %682 = vmatprep.subr.mxu0 0.0
    %683 = vmatpush1.msra.mxu0 0.0
    %684 = vmatprep.subr.mxu0 0.0
    %685 = vmatpush1.msra.mxu0 0.0
    %686 = vmatprep.subr.mxu0 0.0
    %687 = vmatpush1.msra.mxu0 0.0
    %688 = vmatprep.subr.mxu0 0.0
    %689 = vmatpush1.msra.mxu0 0.0
    %690 = vmatprep.mubr.f32.mxu0 0.0
    %691 = vmatmul.mubr.f32.gmra.mrb[0].mxu0 %v620
    %v692 = vpop.f32.mrb[0].mxu0
    %v693 = vadd.f32 0.0, %v692
    %v694 = vpop.f32.mrb[0].mxu0
    %v695 = vadd.f32 0.0, %v694
    %696 = vdwg.mxu0
    %697 = vmatprep.subr.mxu0 %v58
    %698 = vmatpush1.msra.mxu0 %v57
    %699 = vmatprep.subr.mxu0 %v62
    %700 = vmatpush1.msra.mxu0 %v61
    %701 = vmatprep.subr.mxu0 %v66
    %702 = vmatpush1.msra.mxu0 %v65
    %703 = vmatprep.subr.mxu0 %v70
    %704 = vmatpush1.msra.mxu0 %v69
    %705 = vmatprep.subr.mxu0 %v74
    %706 = vmatpush1.msra.mxu0 %v73
    %707 = vmatprep.subr.mxu0 %v78
    %708 = vmatpush1.msra.mxu0 %v77
    %709 = vmatprep.subr.mxu0 %v82
    %710 = vmatpush1.msra.mxu0 %v81
    %711 = vmatprep.subr.mxu0 %v86
    %712 = vmatpush1.msra.mxu0 %v85
    %713 = vmatprep.subr.mxu0 %v90
    %714 = vmatpush1.msra.mxu0 %v89
    %715 = vmatprep.subr.mxu0 %v94
    %716 = vmatpush1.msra.mxu0 %v93
    %717 = vmatprep.subr.mxu0 %v98
    %718 = vmatpush1.msra.mxu0 %v97
    %719 = vmatprep.subr.mxu0 %v102
    %720 = vmatpush1.msra.mxu0 %v101
    %721 = vmatprep.subr.mxu0 %v106
    %722 = vmatpush1.msra.mxu0 %v105
    %723 = vmatprep.subr.mxu0 %v110
    %724 = vmatpush1.msra.mxu0 %v109
    %725 = vmatprep.subr.mxu0 %v114
    %726 = vmatpush1.msra.mxu0 %v113
    %727 = vmatprep.subr.mxu0 %v118
    %728 = vmatpush1.msra.mxu0 %v117
    %729 = vmatprep.subr.mxu0 0.0
    %730 = vmatpush1.msra.mxu0 0.0
    %731 = vmatprep.subr.mxu0 0.0
    %732 = vmatpush1.msra.mxu0 0.0
    %733 = vmatprep.subr.mxu0 0.0
    %734 = vmatpush1.msra.mxu0 0.0
    %735 = vmatprep.subr.mxu0 0.0
    %736 = vmatpush1.msra.mxu0 0.0
    %737 = vmatprep.subr.mxu0 0.0
    %738 = vmatpush1.msra.mxu0 0.0
    %739 = vmatprep.subr.mxu0 0.0
    %740 = vmatpush1.msra.mxu0 0.0
    %741 = vmatprep.subr.mxu0 0.0
    %742 = vmatpush1.msra.mxu0 0.0
    %743 = vmatprep.subr.mxu0 0.0
    %744 = vmatpush1.msra.mxu0 0.0
    %745 = vmatprep.subr.mxu0 0.0
    %746 = vmatpush1.msra.mxu0 0.0
    %747 = vmatprep.subr.mxu0 0.0
    %748 = vmatpush1.msra.mxu0 0.0
    %749 = vmatprep.subr.mxu0 0.0
    %750 = vmatpush1.msra.mxu0 0.0
    %751 = vmatprep.subr.mxu0 0.0
    %752 = vmatpush1.msra.mxu0 0.0
    %753 = vmatprep.subr.mxu0 0.0
    %754 = vmatpush1.msra.mxu0 0.0
    %755 = vmatprep.subr.mxu0 0.0
    %756 = vmatpush1.msra.mxu0 0.0
    %757 = vmatprep.subr.mxu0 0.0
    %758 = vmatpush1.msra.mxu0 0.0
    %759 = vmatprep.subr.mxu0 0.0
    %760 = vmatpush1.msra.mxu0 0.0
    %761 = vmatprep.mubr.f32.mxu0 0.0
    %762 = vmatmul.mubr.f32.gmra.mrb[0].mxu0 %v620
    %v763 = vpop.f32.mrb[0].mxu0
    %v764 = vadd.f32 0.0, %v763
    %v765 = vpop.f32.mrb[0].mxu0
    %v766 = vadd.f32 0.0, %v765
    %767 = vdwg.mxu0
    %v768 = vadd.f32 %v622, %v693
    %v769 = vadd.f32 %v623, %v695
    %v770 = vadd.f32 %v624, %v764
    %v771 = vadd.f32 %v625, %v766
    %v772 = vmul.f32 %v768, 0.5
    %v773 = vtanh.pop %v772
    %v774 = vmul.f32 %v773, 0.5
    %v775 = vadd.f32 %v774, 0.5
    %v776 = vmul.f32 %v769, 0.5
    %v777 = vtanh.pop %v776
    %v778 = vmul.f32 %v777, 0.5
    %v779 = vadd.f32 %v778, 0.5
    %v780 = vtanh.pop %v770
    %v781 = vmul.f32 %v771, 0.5
    %v782 = vtanh.pop %v781
    %v783 = vmul.f32 %v782, 0.5
    %v784 = vadd.f32 %v783, 0.5
    %v785 = vmul.f32 %v779, %v618
    %v786 = vmul.f32 %v775, %v780
    %v787 = vadd.f32 %v785, %v786
    %v788 = vtanh.pop %v787
    %v789 = vmul.f32 %v784, %v788
    %s790 = scalar_lea.vmem [#allocation4], 128
    %v791 = vld [vmem:[%s790] sm:$0xff]
    %v792 = vld [vmem:[%s790 + $0x8] sm:$0xff]
    %v793 = vld [vmem:[%s790 + $0x10] sm:$0xff]
    %v794 = vld [vmem:[%s790 + $0x18] sm:$0xff]
    %795 = vmatprep.subr.mxu0 %v56
    %796 = vmatpush1.msra.mxu0 %v55
    %797 = vmatprep.subr.mxu0 %v60
    %798 = vmatpush1.msra.mxu0 %v59
    %799 = vmatprep.subr.mxu0 %v64
    %800 = vmatpush1.msra.mxu0 %v63
    %801 = vmatprep.subr.mxu0 %v68
    %802 = vmatpush1.msra.mxu0 %v67
    %803 = vmatprep.subr.mxu0 %v72
    %804 = vmatpush1.msra.mxu0 %v71
    %805 = vmatprep.subr.mxu0 %v76
    %806 = vmatpush1.msra.mxu0 %v75
    %807 = vmatprep.subr.mxu0 %v80
    %808 = vmatpush1.msra.mxu0 %v79
    %809 = vmatprep.subr.mxu0 %v84
    %810 = vmatpush1.msra.mxu0 %v83
    %811 = vmatprep.subr.mxu0 %v88
    %812 = vmatpush1.msra.mxu0 %v87
    %813 = vmatprep.subr.mxu0 %v92
    %814 = vmatpush1.msra.mxu0 %v91
    %815 = vmatprep.subr.mxu0 %v96
    %816 = vmatpush1.msra.mxu0 %v95
    %817 = vmatprep.subr.mxu0 %v100
    %818 = vmatpush1.msra.mxu0 %v99
    %819 = vmatprep.subr.mxu0 %v104
    %820 = vmatpush1.msra.mxu0 %v103
    %821 = vmatprep.subr.mxu0 %v108
    %822 = vmatpush1.msra.mxu0 %v107
    %823 = vmatprep.subr.mxu0 %v112
    %824 = vmatpush1.msra.mxu0 %v111
    %825 = vmatprep.subr.mxu0 %v116
    %826 = vmatpush1.msra.mxu0 %v115
    %827 = vmatprep.subr.mxu0 0.0
    %828 = vmatpush1.msra.mxu0 0.0
    %829 = vmatprep.subr.mxu0 0.0
    %830 = vmatpush1.msra.mxu0 0.0
    %831 = vmatprep.subr.mxu0 0.0
    %832 = vmatpush1.msra.mxu0 0.0
    %833 = vmatprep.subr.mxu0 0.0
    %834 = vmatpush1.msra.mxu0 0.0
    %835 = vmatprep.subr.mxu0 0.0
    %836 = vmatpush1.msra.mxu0 0.0
    %837 = vmatprep.subr.mxu0 0.0
    %838 = vmatpush1.msra.mxu0 0.0
    %839 = vmatprep.subr.mxu0 0.0
    %840 = vmatpush1.msra.mxu0 0.0
    %841 = vmatprep.subr.mxu0 0.0
    %842 = vmatpush1.msra.mxu0 0.0
    %843 = vmatprep.subr.mxu0 0.0
    %844 = vmatpush1.msra.mxu0 0.0
    %845 = vmatprep.subr.mxu0 0.0
    %846 = vmatpush1.msra.mxu0 0.0
    %847 = vmatprep.subr.mxu0 0.0
    %848 = vmatpush1.msra.mxu0 0.0
    %849 = vmatprep.subr.mxu0 0.0
    %850 = vmatpush1.msra.mxu0 0.0
    %851 = vmatprep.subr.mxu0 0.0
    %852 = vmatpush1.msra.mxu0 0.0
    %853 = vmatprep.subr.mxu0 0.0
    %854 = vmatpush1.msra.mxu0 0.0
    %855 = vmatprep.subr.mxu0 0.0
    %856 = vmatpush1.msra.mxu0 0.0
    %857 = vmatprep.subr.mxu0 0.0
    %858 = vmatpush1.msra.mxu0 0.0
    %859 = vmatprep.mubr.f32.mxu0 0.0
    %860 = vmatmul.mubr.f32.gmra.mrb[0].mxu0 %v789
    %v861 = vpop.f32.mrb[0].mxu0
    %v862 = vadd.f32 0.0, %v861
    %v863 = vpop.f32.mrb[0].mxu0
    %v864 = vadd.f32 0.0, %v863
    %865 = vdwg.mxu0
    %866 = vmatprep.subr.mxu0 %v58
    %867 = vmatpush1.msra.mxu0 %v57
    %868 = vmatprep.subr.mxu0 %v62
    %869 = vmatpush1.msra.mxu0 %v61
    %870 = vmatprep.subr.mxu0 %v66
    %871 = vmatpush1.msra.mxu0 %v65
    %872 = vmatprep.subr.mxu0 %v70
    %873 = vmatpush1.msra.mxu0 %v69
    %874 = vmatprep.subr.mxu0 %v74
    %875 = vmatpush1.msra.mxu0 %v73
    %876 = vmatprep.subr.mxu0 %v78
    %877 = vmatpush1.msra.mxu0 %v77
    %878 = vmatprep.subr.mxu0 %v82
    %879 = vmatpush1.msra.mxu0 %v81
    %880 = vmatprep.subr.mxu0 %v86
    %881 = vmatpush1.msra.mxu0 %v85
    %882 = vmatprep.subr.mxu0 %v90
    %883 = vmatpush1.msra.mxu0 %v89
    %884 = vmatprep.subr.mxu0 %v94
    %885 = vmatpush1.msra.mxu0 %v93
    %886 = vmatprep.subr.mxu0 %v98
    %887 = vmatpush1.msra.mxu0 %v97
    %888 = vmatprep.subr.mxu0 %v102
    %889 = vmatpush1.msra.mxu0 %v101
    %890 = vmatprep.subr.mxu0 %v106
    %891 = vmatpush1.msra.mxu0 %v105
    %892 = vmatprep.subr.mxu0 %v110
    %893 = vmatpush1.msra.mxu0 %v109
    %894 = vmatprep.subr.mxu0 %v114
    %895 = vmatpush1.msra.mxu0 %v113
    %896 = vmatprep.subr.mxu0 %v118
    %897 = vmatpush1.msra.mxu0 %v117
    %898 = vmatprep.subr.mxu0 0.0
    %899 = vmatpush1.msra.mxu0 0.0
    %900 = vmatprep.subr.mxu0 0.0
    %901 = vmatpush1.msra.mxu0 0.0
    %902 = vmatprep.subr.mxu0 0.0
    %903 = vmatpush1.msra.mxu0 0.0
    %904 = vmatprep.subr.mxu0 0.0
    %905 = vmatpush1.msra.mxu0 0.0
    %906 = vmatprep.subr.mxu0 0.0
    %907 = vmatpush1.msra.mxu0 0.0
    %908 = vmatprep.subr.mxu0 0.0
    %909 = vmatpush1.msra.mxu0 0.0
    %910 = vmatprep.subr.mxu0 0.0
    %911 = vmatpush1.msra.mxu0 0.0
    %912 = vmatprep.subr.mxu0 0.0
    %913 = vmatpush1.msra.mxu0 0.0
    %914 = vmatprep.subr.mxu0 0.0
    %915 = vmatpush1.msra.mxu0 0.0
    %916 = vmatprep.subr.mxu0 0.0
    %917 = vmatpush1.msra.mxu0 0.0
    %918 = vmatprep.subr.mxu0 0.0
    %919 = vmatpush1.msra.mxu0 0.0
    %920 = vmatprep.subr.mxu0 0.0
    %921 = vmatpush1.msra.mxu0 0.0
    %922 = vmatprep.subr.mxu0 0.0
    %923 = vmatpush1.msra.mxu0 0.0
    %924 = vmatprep.subr.mxu0 0.0
    %925 = vmatpush1.msra.mxu0 0.0
    %926 = vmatprep.subr.mxu0 0.0
    %927 = vmatpush1.msra.mxu0 0.0
    %928 = vmatprep.subr.mxu0 0.0
    %929 = vmatpush1.msra.mxu0 0.0
    %930 = vmatprep.mubr.f32.mxu0 0.0
    %931 = vmatmul.mubr.f32.gmra.mrb[0].mxu0 %v789
    %v932 = vpop.f32.mrb[0].mxu0
    %v933 = vadd.f32 0.0, %v932
    %v934 = vpop.f32.mrb[0].mxu0
    %v935 = vadd.f32 0.0, %v934
    %936 = vdwg.mxu0
    %v937 = vadd.f32 %v791, %v862
    %v938 = vadd.f32 %v792, %v864
    %v939 = vadd.f32 %v793, %v933
    %v940 = vadd.f32 %v794, %v935
    %v941 = vmul.f32 %v937, 0.5
    %v942 = vtanh.pop %v941
    %v943 = vmul.f32 %v942, 0.5
    %v944 = vadd.f32 %v943, 0.5
    %v945 = vmul.f32 %v938, 0.5
    %v946 = vtanh.pop %v945
    %v947 = vmul.f32 %v946, 0.5
    %v948 = vadd.f32 %v947, 0.5
    %v949 = vtanh.pop %v939
    %v950 = vmul.f32 %v940, 0.5
    %v951 = vtanh.pop %v950
    %v952 = vmul.f32 %v951, 0.5
    %v953 = vadd.f32 %v952, 0.5
    %v954 = vmul.f32 %v948, %v787
    %v955 = vmul.f32 %v944, %v949
    %v956 = vadd.f32 %v954, %v955
    %v957 = vtanh.pop %v956
    %v958 = vmul.f32 %v953, %v957
    %s959 = scalar_lea.vmem [#allocation4], 160
    %v960 = vld [vmem:[%s959] sm:$0xff]
    %v961 = vld [vmem:[%s959 + $0x8] sm:$0xff]
    %v962 = vld [vmem:[%s959 + $0x10] sm:$0xff]
    %v963 = vld [vmem:[%s959 + $0x18] sm:$0xff]
    %964 = vmatprep.subr.mxu0 %v56
    %965 = vmatpush1.msra.mxu0 %v55
    %966 = vmatprep.subr.mxu0 %v60
    %967 = vmatpush1.msra.mxu0 %v59
    %968 = vmatprep.subr.mxu0 %v64
    %969 = vmatpush1.msra.mxu0 %v63
    %970 = vmatprep.subr.mxu0 %v68
    %971 = vmatpush1.msra.mxu0 %v67
    %972 = vmatprep.subr.mxu0 %v72
    %973 = vmatpush1.msra.mxu0 %v71
    %974 = vmatprep.subr.mxu0 %v76
    %975 = vmatpush1.msra.mxu0 %v75
    %976 = vmatprep.subr.mxu0 %v80
    %977 = vmatpush1.msra.mxu0 %v79
    %978 = vmatprep.subr.mxu0 %v84
    %979 = vmatpush1.msra.mxu0 %v83
    %980 = vmatprep.subr.mxu0 %v88
    %981 = vmatpush1.msra.mxu0 %v87
    %982 = vmatprep.subr.mxu0 %v92
    %983 = vmatpush1.msra.mxu0 %v91
    %984 = vmatprep.subr.mxu0 %v96
    %985 = vmatpush1.msra.mxu0 %v95
    %986 = vmatprep.subr.mxu0 %v100
    %987 = vmatpush1.msra.mxu0 %v99
    %988 = vmatprep.subr.mxu0 %v104
    %989 = vmatpush1.msra.mxu0 %v103
    %990 = vmatprep.subr.mxu0 %v108
    %991 = vmatpush1.msra.mxu0 %v107
    %992 = vmatprep.subr.mxu0 %v112
    %993 = vmatpush1.msra.mxu0 %v111
    %994 = vmatprep.subr.mxu0 %v116
    %995 = vmatpush1.msra.mxu0 %v115
    %996 = vmatprep.subr.mxu0 0.0
    %997 = vmatpush1.msra.mxu0 0.0
    %998 = vmatprep.subr.mxu0 0.0
    %999 = vmatpush1.msra.mxu0 0.0
    %1000 = vmatprep.subr.mxu0 0.0
    %1001 = vmatpush1.msra.mxu0 0.0
    %1002 = vmatprep.subr.mxu0 0.0
    %1003 = vmatpush1.msra.mxu0 0.0
    %1004 = vmatprep.subr.mxu0 0.0
    %1005 = vmatpush1.msra.mxu0 0.0
    %1006 = vmatprep.subr.mxu0 0.0
    %1007 = vmatpush1.msra.mxu0 0.0
    %1008 = vmatprep.subr.mxu0 0.0
    %1009 = vmatpush1.msra.mxu0 0.0
    %1010 = vmatprep.subr.mxu0 0.0
    %1011 = vmatpush1.msra.mxu0 0.0
    %1012 = vmatprep.subr.mxu0 0.0
    %1013 = vmatpush1.msra.mxu0 0.0
    %1014 = vmatprep.subr.mxu0 0.0
    %1015 = vmatpush1.msra.mxu0 0.0
    %1016 = vmatprep.subr.mxu0 0.0
    %1017 = vmatpush1.msra.mxu0 0.0
    %1018 = vmatprep.subr.mxu0 0.0
    %1019 = vmatpush1.msra.mxu0 0.0
    %1020 = vmatprep.subr.mxu0 0.0
    %1021 = vmatpush1.msra.mxu0 0.0
    %1022 = vmatprep.subr.mxu0 0.0
    %1023 = vmatpush1.msra.mxu0 0.0
    %1024 = vmatprep.subr.mxu0 0.0
    %1025 = vmatpush1.msra.mxu0 0.0
    %1026 = vmatprep.subr.mxu0 0.0
    %1027 = vmatpush1.msra.mxu0 0.0
    %1028 = vmatprep.mubr.f32.mxu0 0.0
    %1029 = vmatmul.mubr.f32.gmra.mrb[0].mxu0 %v958
    %v1030 = vpop.f32.mrb[0].mxu0
    %v1031 = vadd.f32 0.0, %v1030
    %v1032 = vpop.f32.mrb[0].mxu0
    %v1033 = vadd.f32 0.0, %v1032
    %1034 = vdwg.mxu0
    %1035 = vmatprep.subr.mxu0 %v58
    %1036 = vmatpush1.msra.mxu0 %v57
    %1037 = vmatprep.subr.mxu0 %v62
    %1038 = vmatpush1.msra.mxu0 %v61
    %1039 = vmatprep.subr.mxu0 %v66
    %1040 = vmatpush1.msra.mxu0 %v65
    %1041 = vmatprep.subr.mxu0 %v70
    %1042 = vmatpush1.msra.mxu0 %v69
    %1043 = vmatprep.subr.mxu0 %v74
    %1044 = vmatpush1.msra.mxu0 %v73
    %1045 = vmatprep.subr.mxu0 %v78
    %1046 = vmatpush1.msra.mxu0 %v77
    %1047 = vmatprep.subr.mxu0 %v82
    %1048 = vmatpush1.msra.mxu0 %v81
    %1049 = vmatprep.subr.mxu0 %v86
    %1050 = vmatpush1.msra.mxu0 %v85
    %1051 = vmatprep.subr.mxu0 %v90
    %1052 = vmatpush1.msra.mxu0 %v89
    %1053 = vmatprep.subr.mxu0 %v94
    %1054 = vmatpush1.msra.mxu0 %v93
    %1055 = vmatprep.subr.mxu0 %v98
    %1056 = vmatpush1.msra.mxu0 %v97
    %1057 = vmatprep.subr.mxu0 %v102
    %1058 = vmatpush1.msra.mxu0 %v101
    %1059 = vmatprep.subr.mxu0 %v106
    %1060 = vmatpush1.msra.mxu0 %v105
    %1061 = vmatprep.subr.mxu0 %v110
    %1062 = vmatpush1.msra.mxu0 %v109
    %1063 = vmatprep.subr.mxu0 %v114
    %1064 = vmatpush1.msra.mxu0 %v113
    %1065 = vmatprep.subr.mxu0 %v118
    %1066 = vmatpush1.msra.mxu0 %v117
    %1067 = vmatprep.subr.mxu0 0.0
    %1068 = vmatpush1.msra.mxu0 0.0
    %1069 = vmatprep.subr.mxu0 0.0
    %1070 = vmatpush1.msra.mxu0 0.0
    %1071 = vmatprep.subr.mxu0 0.0
    %1072 = vmatpush1.msra.mxu0 0.0
    %1073 = vmatprep.subr.mxu0 0.0
    %1074 = vmatpush1.msra.mxu0 0.0
    %1075 = vmatprep.subr.mxu0 0.0
    %1076 = vmatpush1.msra.mxu0 0.0
    %1077 = vmatprep.subr.mxu0 0.0
    %1078 = vmatpush1.msra.mxu0 0.0
    %1079 = vmatprep.subr.mxu0 0.0
    %1080 = vmatpush1.msra.mxu0 0.0
    %1081 = vmatprep.subr.mxu0 0.0
    %1082 = vmatpush1.msra.mxu0 0.0
    %1083 = vmatprep.subr.mxu0 0.0
    %1084 = vmatpush1.msra.mxu0 0.0
    %1085 = vmatprep.subr.mxu0 0.0
    %1086 = vmatpush1.msra.mxu0 0.0
    %1087 = vmatprep.subr.mxu0 0.0
    %1088 = vmatpush1.msra.mxu0 0.0
    %1089 = vmatprep.subr.mxu0 0.0
    %1090 = vmatpush1.msra.mxu0 0.0
    %1091 = vmatprep.subr.mxu0 0.0
    %1092 = vmatpush1.msra.mxu0 0.0
    %1093 = vmatprep.subr.mxu0 0.0
    %1094 = vmatpush1.msra.mxu0 0.0
    %1095 = vmatprep.subr.mxu0 0.0
    %1096 = vmatpush1.msra.mxu0 0.0
    %1097 = vmatprep.subr.mxu0 0.0
    %1098 = vmatpush1.msra.mxu0 0.0
    %1099 = vmatprep.mubr.f32.mxu0 0.0
    %1100 = vmatmul.mubr.f32.gmra.mrb[0].mxu0 %v958
    %v1101 = vpop.f32.mrb[0].mxu0
    %v1102 = vadd.f32 0.0, %v1101
    %v1103 = vpop.f32.mrb[0].mxu0
    %v1104 = vadd.f32 0.0, %v1103
    %1105 = vdwg.mxu0
    %v1106 = vadd.f32 %v960, %v1031
    %v1107 = vadd.f32 %v961, %v1033
    %v1108 = vadd.f32 %v962, %v1102
    %v1109 = vadd.f32 %v963, %v1104
    %v1110 = vmul.f32 %v1106, 0.5
    %v1111 = vtanh.pop %v1110
    %v1112 = vmul.f32 %v1111, 0.5
    %v1113 = vadd.f32 %v1112, 0.5
    %v1114 = vmul.f32 %v1107, 0.5
    %v1115 = vtanh.pop %v1114
    %v1116 = vmul.f32 %v1115, 0.5
    %v1117 = vadd.f32 %v1116, 0.5
    %v1118 = vtanh.pop %v1108
    %v1119 = vmul.f32 %v1109, 0.5
    %v1120 = vtanh.pop %v1119
    %v1121 = vmul.f32 %v1120, 0.5
    %v1122 = vadd.f32 %v1121, 0.5
    %v1123 = vmul.f32 %v1117, %v956
    %v1124 = vmul.f32 %v1113, %v1118
    %v1125 = vadd.f32 %v1123, %v1124
    %v1126 = vtanh.pop %v1125
    %v1127 = vmul.f32 %v1122, %v1126
    %s1128 = scalar_lea.vmem [#allocation4], 192
    %v1129 = vld [vmem:[%s1128] sm:$0xff]
    %v1130 = vld [vmem:[%s1128 + $0x8] sm:$0xff]
    %v1131 = vld [vmem:[%s1128 + $0x10] sm:$0xff]
    %v1132 = vld [vmem:[%s1128 + $0x18] sm:$0xff]
    %1133 = vmatprep.subr.mxu0 %v56
    %1134 = vmatpush1.msra.mxu0 %v55
    %1135 = vmatprep.subr.mxu0 %v60
    %1136 = vmatpush1.msra.mxu0 %v59
    %1137 = vmatprep.subr.mxu0 %v64
    %1138 = vmatpush1.msra.mxu0 %v63
    %1139 = vmatprep.subr.mxu0 %v68
    %1140 = vmatpush1.msra.mxu0 %v67
    %1141 = vmatprep.subr.mxu0 %v72
    %1142 = vmatpush1.msra.mxu0 %v71
    %1143 = vmatprep.subr.mxu0 %v76
    %1144 = vmatpush1.msra.mxu0 %v75
    %1145 = vmatprep.subr.mxu0 %v80
    %1146 = vmatpush1.msra.mxu0 %v79
    %1147 = vmatprep.subr.mxu0 %v84
    %1148 = vmatpush1.msra.mxu0 %v83
    %1149 = vmatprep.subr.mxu0 %v88
    %1150 = vmatpush1.msra.mxu0 %v87
    %1151 = vmatprep.subr.mxu0 %v92
    %1152 = vmatpush1.msra.mxu0 %v91
    %1153 = vmatprep.subr.mxu0 %v96
    %1154 = vmatpush1.msra.mxu0 %v95
    %1155 = vmatprep.subr.mxu0 %v100
    %1156 = vmatpush1.msra.mxu0 %v99
    %1157 = vmatprep.subr.mxu0 %v104
    %1158 = vmatpush1.msra.mxu0 %v103
    %1159 = vmatprep.subr.mxu0 %v108
    %1160 = vmatpush1.msra.mxu0 %v107
    %1161 = vmatprep.subr.mxu0 %v112
    %1162 = vmatpush1.msra.mxu0 %v111
    %1163 = vmatprep.subr.mxu0 %v116
    %1164 = vmatpush1.msra.mxu0 %v115
    %1165 = vmatprep.subr.mxu0 0.0
    %1166 = vmatpush1.msra.mxu0 0.0
    %1167 = vmatprep.subr.mxu0 0.0
    %1168 = vmatpush1.msra.mxu0 0.0
    %1169 = vmatprep.subr.mxu0 0.0
    %1170 = vmatpush1.msra.mxu0 0.0
    %1171 = vmatprep.subr.mxu0 0.0
    %1172 = vmatpush1.msra.mxu0 0.0
    %1173 = vmatprep.subr.mxu0 0.0
    %1174 = vmatpush1.msra.mxu0 0.0
    %1175 = vmatprep.subr.mxu0 0.0
    %1176 = vmatpush1.msra.mxu0 0.0
    %1177 = vmatprep.subr.mxu0 0.0
    %1178 = vmatpush1.msra.mxu0 0.0
    %1179 = vmatprep.subr.mxu0 0.0
    %1180 = vmatpush1.msra.mxu0 0.0
    %1181 = vmatprep.subr.mxu0 0.0
    %1182 = vmatpush1.msra.mxu0 0.0
    %1183 = vmatprep.subr.mxu0 0.0
    %1184 = vmatpush1.msra.mxu0 0.0
    %1185 = vmatprep.subr.mxu0 0.0
    %1186 = vmatpush1.msra.mxu0 0.0
    %1187 = vmatprep.subr.mxu0 0.0
    %1188 = vmatpush1.msra.mxu0 0.0
    %1189 = vmatprep.subr.mxu0 0.0
    %1190 = vmatpush1.msra.mxu0 0.0
    %1191 = vmatprep.subr.mxu0 0.0
    %1192 = vmatpush1.msra.mxu0 0.0
    %1193 = vmatprep.subr.mxu0 0.0
    %1194 = vmatpush1.msra.mxu0 0.0
    %1195 = vmatprep.subr.mxu0 0.0
    %1196 = vmatpush1.msra.mxu0 0.0
    %1197 = vmatprep.mubr.f32.mxu0 0.0
    %1198 = vmatmul.mubr.f32.gmra.mrb[0].mxu0 %v1127
    %v1199 = vpop.f32.mrb[0].mxu0
    %v1200 = vadd.f32 0.0, %v1199
    %v1201 = vpop.f32.mrb[0].mxu0
    %v1202 = vadd.f32 0.0, %v1201
    %1203 = vdwg.mxu0
    %1204 = vmatprep.subr.mxu0 %v58
    %1205 = vmatpush1.msra.mxu0 %v57
    %1206 = vmatprep.subr.mxu0 %v62
    %1207 = vmatpush1.msra.mxu0 %v61
    %1208 = vmatprep.subr.mxu0 %v66
    %1209 = vmatpush1.msra.mxu0 %v65
    %1210 = vmatprep.subr.mxu0 %v70
    %1211 = vmatpush1.msra.mxu0 %v69
    %1212 = vmatprep.subr.mxu0 %v74
    %1213 = vmatpush1.msra.mxu0 %v73
    %1214 = vmatprep.subr.mxu0 %v78
    %1215 = vmatpush1.msra.mxu0 %v77
    %1216 = vmatprep.subr.mxu0 %v82
    %1217 = vmatpush1.msra.mxu0 %v81
    %1218 = vmatprep.subr.mxu0 %v86
    %1219 = vmatpush1.msra.mxu0 %v85
    %1220 = vmatprep.subr.mxu0 %v90
    %1221 = vmatpush1.msra.mxu0 %v89
    %1222 = vmatprep.subr.mxu0 %v94
    %1223 = vmatpush1.msra.mxu0 %v93
    %1224 = vmatprep.subr.mxu0 %v98
    %1225 = vmatpush1.msra.mxu0 %v97
    %1226 = vmatprep.subr.mxu0 %v102
    %1227 = vmatpush1.msra.mxu0 %v101
    %1228 = vmatprep.subr.mxu0 %v106
    %1229 = vmatpush1.msra.mxu0 %v105
    %1230 = vmatprep.subr.mxu0 %v110
    %1231 = vmatpush1.msra.mxu0 %v109
    %1232 = vmatprep.subr.mxu0 %v114
    %1233 = vmatpush1.msra.mxu0 %v113
    %1234 = vmatprep.subr.mxu0 %v118
    %1235 = vmatpush1.msra.mxu0 %v117
    %1236 = vmatprep.subr.mxu0 0.0
    %1237 = vmatpush1.msra.mxu0 0.0
    %1238 = vmatprep.subr.mxu0 0.0
    %1239 = vmatpush1.msra.mxu0 0.0
    %1240 = vmatprep.subr.mxu0 0.0
    %1241 = vmatpush1.msra.mxu0 0.0
    %1242 = vmatprep.subr.mxu0 0.0
    %1243 = vmatpush1.msra.mxu0 0.0
    %1244 = vmatprep.subr.mxu0 0.0
    %1245 = vmatpush1.msra.mxu0 0.0
    %1246 = vmatprep.subr.mxu0 0.0
    %1247 = vmatpush1.msra.mxu0 0.0
    %1248 = vmatprep.subr.mxu0 0.0
    %1249 = vmatpush1.msra.mxu0 0.0
    %1250 = vmatprep.subr.mxu0 0.0
    %1251 = vmatpush1.msra.mxu0 0.0
    %1252 = vmatprep.subr.mxu0 0.0
    %1253 = vmatpush1.msra.mxu0 0.0
    %1254 = vmatprep.subr.mxu0 0.0
    %1255 = vmatpush1.msra.mxu0 0.0
    %1256 = vmatprep.subr.mxu0 0.0
    %1257 = vmatpush1.msra.mxu0 0.0
    %1258 = vmatprep.subr.mxu0 0.0
    %1259 = vmatpush1.msra.mxu0 0.0
    %1260 = vmatprep.subr.mxu0 0.0
    %1261 = vmatpush1.msra.mxu0 0.0
    %1262 = vmatprep.subr.mxu0 0.0
    %1263 = vmatpush1.msra.mxu0 0.0
    %1264 = vmatprep.subr.mxu0 0.0
    %1265 = vmatpush1.msra.mxu0 0.0
    %1266 = vmatprep.subr.mxu0 0.0
    %1267 = vmatpush1.msra.mxu0 0.0
    %1268 = vmatprep.mubr.f32.mxu0 0.0
    %1269 = vmatmul.mubr.f32.gmra.mrb[0].mxu0 %v1127
    %v1270 = vpop.f32.mrb[0].mxu0
    %v1271 = vadd.f32 0.0, %v1270
    %v1272 = vpop.f32.mrb[0].mxu0
    %v1273 = vadd.f32 0.0, %v1272
    %1274 = vdwg.mxu0
    %v1275 = vadd.f32 %v1129, %v1200
    %v1276 = vadd.f32 %v1130, %v1202
    %v1277 = vadd.f32 %v1131, %v1271
    %v1278 = vadd.f32 %v1132, %v1273
    %v1279 = vmul.f32 %v1275, 0.5
    %v1280 = vtanh.pop %v1279
    %v1281 = vmul.f32 %v1280, 0.5
    %v1282 = vadd.f32 %v1281, 0.5
    %v1283 = vmul.f32 %v1276, 0.5
    %v1284 = vtanh.pop %v1283
    %v1285 = vmul.f32 %v1284, 0.5
    %v1286 = vadd.f32 %v1285, 0.5
    %v1287 = vtanh.pop %v1277
    %v1288 = vmul.f32 %v1278, 0.5
    %v1289 = vtanh.pop %v1288
    %v1290 = vmul.f32 %v1289, 0.5
    %v1291 = vadd.f32 %v1290, 0.5
    %v1292 = vmul.f32 %v1286, %v1125
    %v1293 = vmul.f32 %v1282, %v1287
    %v1294 = vadd.f32 %v1292, %v1293
    %v1295 = vtanh.pop %v1294
    %v1296 = vmul.f32 %v1291, %v1295
    %s1297 = scalar_lea.vmem [#allocation4], 224
    %v1298 = vld [vmem:[%s1297] sm:$0xff]
    %v1299 = vld [vmem:[%s1297 + $0x8] sm:$0xff]
    %v1300 = vld [vmem:[%s1297 + $0x10] sm:$0xff]
    %v1301 = vld [vmem:[%s1297 + $0x18] sm:$0xff]
    %1302 = vmatprep.subr.mxu0 %v56
    %1303 = vmatpush1.msra.mxu0 %v55
    %1304 = vmatprep.subr.mxu0 %v60
    %1305 = vmatpush1.msra.mxu0 %v59
    %1306 = vmatprep.subr.mxu0 %v64
    %1307 = vmatpush1.msra.mxu0 %v63
    %1308 = vmatprep.subr.mxu0 %v68
    %1309 = vmatpush1.msra.mxu0 %v67
    %1310 = vmatprep.subr.mxu0 %v72
    %1311 = vmatpush1.msra.mxu0 %v71
    %1312 = vmatprep.subr.mxu0 %v76
    %1313 = vmatpush1.msra.mxu0 %v75
    %1314 = vmatprep.subr.mxu0 %v80
    %1315 = vmatpush1.msra.mxu0 %v79
    %1316 = vmatprep.subr.mxu0 %v84
    %1317 = vmatpush1.msra.mxu0 %v83
    %1318 = vmatprep.subr.mxu0 %v88
    %1319 = vmatpush1.msra.mxu0 %v87
    %1320 = vmatprep.subr.mxu0 %v92
    %1321 = vmatpush1.msra.mxu0 %v91
    %1322 = vmatprep.subr.mxu0 %v96
    %1323 = vmatpush1.msra.mxu0 %v95
    %1324 = vmatprep.subr.mxu0 %v100
    %1325 = vmatpush1.msra.mxu0 %v99
    %1326 = vmatprep.subr.mxu0 %v104
    %1327 = vmatpush1.msra.mxu0 %v103
    %1328 = vmatprep.subr.mxu0 %v108
    %1329 = vmatpush1.msra.mxu0 %v107
    %1330 = vmatprep.subr.mxu0 %v112
    %1331 = vmatpush1.msra.mxu0 %v111
    %1332 = vmatprep.subr.mxu0 %v116
    %1333 = vmatpush1.msra.mxu0 %v115
    %1334 = vmatprep.subr.mxu0 0.0
    %1335 = vmatpush1.msra.mxu0 0.0
    %1336 = vmatprep.subr.mxu0 0.0
    %1337 = vmatpush1.msra.mxu0 0.0
    %1338 = vmatprep.subr.mxu0 0.0
    %1339 = vmatpush1.msra.mxu0 0.0
    %1340 = vmatprep.subr.mxu0 0.0
    %1341 = vmatpush1.msra.mxu0 0.0
    %1342 = vmatprep.subr.mxu0 0.0
    %1343 = vmatpush1.msra.mxu0 0.0
    %1344 = vmatprep.subr.mxu0 0.0
    %1345 = vmatpush1.msra.mxu0 0.0
    %1346 = vmatprep.subr.mxu0 0.0
    %1347 = vmatpush1.msra.mxu0 0.0
    %1348 = vmatprep.subr.mxu0 0.0
    %1349 = vmatpush1.msra.mxu0 0.0
    %1350 = vmatprep.subr.mxu0 0.0
    %1351 = vmatpush1.msra.mxu0 0.0
    %1352 = vmatprep.subr.mxu0 0.0
    %1353 = vmatpush1.msra.mxu0 0.0
    %1354 = vmatprep.subr.mxu0 0.0
    %1355 = vmatpush1.msra.mxu0 0.0
    %1356 = vmatprep.subr.mxu0 0.0
    %1357 = vmatpush1.msra.mxu0 0.0
    %1358 = vmatprep.subr.mxu0 0.0
    %1359 = vmatpush1.msra.mxu0 0.0
    %1360 = vmatprep.subr.mxu0 0.0
    %1361 = vmatpush1.msra.mxu0 0.0
    %1362 = vmatprep.subr.mxu0 0.0
    %1363 = vmatpush1.msra.mxu0 0.0
    %1364 = vmatprep.subr.mxu0 0.0
    %1365 = vmatpush1.msra.mxu0 0.0
    %1366 = vmatprep.mubr.f32.mxu0 0.0
    %1367 = vmatmul.mubr.f32.gmra.mrb[0].mxu0 %v1296
    %v1368 = vpop.f32.mrb[0].mxu0
    %v1369 = vadd.f32 0.0, %v1368
    %v1370 = vpop.f32.mrb[0].mxu0
    %v1371 = vadd.f32 0.0, %v1370
    %1372 = vdwg.mxu0
    %1373 = vmatprep.subr.mxu0 %v58
    %1374 = vmatpush1.msra.mxu0 %v57
    %1375 = vmatprep.subr.mxu0 %v62
    %1376 = vmatpush1.msra.mxu0 %v61
    %1377 = vmatprep.subr.mxu0 %v66
    %1378 = vmatpush1.msra.mxu0 %v65
    %1379 = vmatprep.subr.mxu0 %v70
    %1380 = vmatpush1.msra.mxu0 %v69
    %1381 = vmatprep.subr.mxu0 %v74
    %1382 = vmatpush1.msra.mxu0 %v73
    %1383 = vmatprep.subr.mxu0 %v78
    %1384 = vmatpush1.msra.mxu0 %v77
    %1385 = vmatprep.subr.mxu0 %v82
    %1386 = vmatpush1.msra.mxu0 %v81
    %1387 = vmatprep.subr.mxu0 %v86
    %1388 = vmatpush1.msra.mxu0 %v85
    %1389 = vmatprep.subr.mxu0 %v90
    %1390 = vmatpush1.msra.mxu0 %v89
    %1391 = vmatprep.subr.mxu0 %v94
    %1392 = vmatpush1.msra.mxu0 %v93
    %1393 = vmatprep.subr.mxu0 %v98
    %1394 = vmatpush1.msra.mxu0 %v97
    %1395 = vmatprep.subr.mxu0 %v102
    %1396 = vmatpush1.msra.mxu0 %v101
    %1397 = vmatprep.subr.mxu0 %v106
    %1398 = vmatpush1.msra.mxu0 %v105
    %1399 = vmatprep.subr.mxu0 %v110
    %1400 = vmatpush1.msra.mxu0 %v109
    %1401 = vmatprep.subr.mxu0 %v114
    %1402 = vmatpush1.msra.mxu0 %v113
    %1403 = vmatprep.subr.mxu0 %v118
    %1404 = vmatpush1.msra.mxu0 %v117
    %1405 = vmatprep.subr.mxu0 0.0
    %1406 = vmatpush1.msra.mxu0 0.0
    %1407 = vmatprep.subr.mxu0 0.0
    %1408 = vmatpush1.msra.mxu0 0.0
    %1409 = vmatprep.subr.mxu0 0.0
    %1410 = vmatpush1.msra.mxu0 0.0
    %1411 = vmatprep.subr.mxu0 0.0
    %1412 = vmatpush1.msra.mxu0 0.0
    %1413 = vmatprep.subr.mxu0 0.0
    %1414 = vmatpush1.msra.mxu0 0.0
    %1415 = vmatprep.subr.mxu0 0.0
    %1416 = vmatpush1.msra.mxu0 0.0
    %1417 = vmatprep.subr.mxu0 0.0
    %1418 = vmatpush1.msra.mxu0 0.0
    %1419 = vmatprep.subr.mxu0 0.0
    %1420 = vmatpush1.msra.mxu0 0.0
    %1421 = vmatprep.subr.mxu0 0.0
    %1422 = vmatpush1.msra.mxu0 0.0
    %1423 = vmatprep.subr.mxu0 0.0
    %1424 = vmatpush1.msra.mxu0 0.0
    %1425 = vmatprep.subr.mxu0 0.0
    %1426 = vmatpush1.msra.mxu0 0.0
    %1427 = vmatprep.subr.mxu0 0.0
    %1428 = vmatpush1.msra.mxu0 0.0
    %1429 = vmatprep.subr.mxu0 0.0
    %1430 = vmatpush1.msra.mxu0 0.0
    %1431 = vmatprep.subr.mxu0 0.0
    %1432 = vmatpush1.msra.mxu0 0.0
    %1433 = vmatprep.subr.mxu0 0.0
    %1434 = vmatpush1.msra.mxu0 0.0
    %1435 = vmatprep.subr.mxu0 0.0
    %1436 = vmatpush1.msra.mxu0 0.0
    %1437 = vmatprep.mubr.f32.mxu0 0.0
    %1438 = vmatmul.mubr.f32.gmra.mrb[0].mxu0 %v1296
    %v1439 = vpop.f32.mrb[0].mxu0
    %v1440 = vadd.f32 0.0, %v1439
    %v1441 = vpop.f32.mrb[0].mxu0
    %v1442 = vadd.f32 0.0, %v1441
    %1443 = vdwg.mxu0
    %v1444 = vadd.f32 %v1298, %v1369
    %v1445 = vadd.f32 %v1299, %v1371
    %v1446 = vadd.f32 %v1300, %v1440
    %v1447 = vadd.f32 %v1301, %v1442
    %v1448 = vmul.f32 %v1444, 0.5
    %v1449 = vtanh.pop %v1448
    %v1450 = vmul.f32 %v1449, 0.5
    %v1451 = vadd.f32 %v1450, 0.5
    %v1452 = vmul.f32 %v1445, 0.5
    %v1453 = vtanh.pop %v1452
    %v1454 = vmul.f32 %v1453, 0.5
    %v1455 = vadd.f32 %v1454, 0.5
    %v1456 = vtanh.pop %v1446
    %v1457 = vmul.f32 %v1447, 0.5
    %v1458 = vtanh.pop %v1457
    %v1459 = vmul.f32 %v1458, 0.5
    %v1460 = vadd.f32 %v1459, 0.5
    %v1461 = vmul.f32 %v1455, %v1294
    %v1462 = vmul.f32 %v1451, %v1456
    %v1463 = vadd.f32 %v1461, %v1462
    %v1464 = vtanh.pop %v1463
    %v1465 = vmul.f32 %v1460, %v1464
    %1466 = vst [vmem:[#allocation2] sm:$0xff] %v1465
    %1467 = vst [vmem:[#allocation3] sm:$0xff] %v1463
    // Predicated region
    $region22: #{tpu_custom_call.1} parent=1 // pred_check
      %p1468 = pneg %p43
    $region23: #{tpu_custom_call.1} parent=1 // pred_check_branch
      %1470 = sbr.rel (%p1468) target = $region25
    $region24: #{tpu_custom_call.1} parent=1 // pred_region
      %1471 = vst [vmem:[#allocation9] sm:$0xff] %v1465
      %1472 = vst [vmem:[#allocation10] sm:$0xff] %v1463
    $region25: #{tpu_custom_call.1} parent=1 // pred_fallthru
      _
    // Predicated region
    $region26: #{tpu_custom_call.1} parent=1 // pred_check
      _
    $region27: #{tpu_custom_call.1} parent=1 // pred_check_branch
      %1474 = sbr.rel (0) target = $region29
    $region28: #{tpu_custom_call.1} parent=1 // pred_region
      %s1476 = ssub.s32 128, 128
      %1477 = vsyncadd [#allocation6], %s1476
      %s1479 = sshll.u32 [#allocation9], 4
      %s1480 = int_to_ptr.vmem [resolvable:$true] %s1479
      %1482 = dma.vmem_to_hbm [thread:$0]  %s1480, 128, %s2, [#allocation6]
    $region29: #{tpu_custom_call.1} parent=1 // pred_fallthru
      _
    // Predicated region
    $region30: #{tpu_custom_call.1} parent=1 // pred_check
      _
    $region31: #{tpu_custom_call.1} parent=1 // pred_check_branch
      %1484 = sbr.rel (0) target = $region33
    $region32: #{tpu_custom_call.1} parent=1 // pred_region
      %s1486 = ssub.s32 128, 128
      %1487 = vsyncadd [#allocation11], %s1486
      %s1489 = sshll.u32 [#allocation10], 4
      %s1490 = int_to_ptr.vmem [resolvable:$true] %s1489
      %1492 = dma.vmem_to_hbm [thread:$0]  %s1490, 128, %s3, [#allocation11]
    $region33: #{tpu_custom_call.1} parent=1 // pred_fallthru
      _
    // Predicated region
    $region34: #{tpu_custom_call.1} parent=1 // pred_check
      _
    $region35: #{tpu_custom_call.1} parent=1 // pred_check_branch
      %1494 = sbr.rel (0) target = $region37
    $region36: #{tpu_custom_call.1} parent=1 // pred_region
      %1495 = dma.done [#allocation6], 128
    $region37: #{tpu_custom_call.1} parent=1 // pred_fallthru
      _
    // Predicated region
    $region38: #{tpu_custom_call.1} parent=1 // pred_check
      _
    $region39: #{tpu_custom_call.1} parent=1 // pred_check_branch
      %1497 = sbr.rel (0) target = $region41
    $region40: #{tpu_custom_call.1} parent=1 // pred_region
      %1498 = dma.done [#allocation11], 128
    $region41: #{tpu_custom_call.1} parent=1 // pred_fallthru
      _
    %1499 = vsyncpa [#allocation5], 1
    %1500 = vsyncpa [#allocation8], 1
    %1501 = vsyncpa [#allocation6], 1
    %1502 = vsyncpa [#allocation11], 1

</llo_original>
